<compile_context>
chip_gen: v5e
topology: v5e:2x2
jax: 0.10.0
libtpu: 0.0.40
codegen_flags: <defaults>
</compile_context>

<pallas_src>
import math
from functools import partial

import jax
import jax.numpy as jnp
from jax.experimental import pallas as pl
from jax.experimental.pallas import tpu as pltpu

HEAD_N = 128        # padded lane width of the merged actor+value head
BATCH_TILE = 128    # max batch tile per grid step (tunable; multiple of 32)


# ------------------------------ fused kernel ------------------------------- #

def _make_kernel(bt, kc):
    """Whole CnnPolicy forward for one batch tile of `bt` samples.

    kc = 144*C is the flattened 12x12xC super-patch width.  Conv1 output
    channels are packed as (a, b, c1) with (a, b) the position inside the 2x2
    block, i.e. the map is already space-to-depth-by-2 (4x4 spatial, 128 ch).
    """
    taps = ((0, 0), (0, 1), (1, 0), (1, 1))

    def kernel(xc_ref, w1_ref, b1_ref, w2_ref, b2_ref, w3_ref, b3_ref,
               wf_ref, bf_ref, wh_ref, bh_ref, out_ref, h1_scr):
        f32, bf16 = jnp.float32, jnp.bfloat16

        # ---- conv1: single (16*bt, kc) x (kc, 128) matmul -------------------
        xc = xc_ref[...].reshape(16 * bt, kc)                       # bf16
        h1 = jnp.dot(xc, w1_ref[...], preferred_element_type=f32)
        h1 = jnp.maximum(h1 + b1_ref[...], 0.0)                     # (16*bt,128) f32
        h1_scr[...] = h1.reshape(4, 4, bt, 128).astype(bf16)        # (Y, X, b, ch)

        # ---- conv2 (4x4/s2) == 2x2/s1 over the S2D map: 4 tap matmuls -------
        acc2 = jnp.zeros((9 * bt, 64), f32)
        for t, (da, db) in enumerate(taps):
            tap = h1_scr[da:da + 3, db:db + 3, :, :]                # (3,3,bt,128) bf16
            acc2 = acc2 + jnp.dot(tap.reshape(9 * bt, 128), w2_ref[t],
                                  preferred_element_type=f32)
        h2 = jnp.maximum(acc2 + b2_ref[...], 0.0).astype(bf16)      # (9*bt, 64)

        # ---- conv3 (3x3 -> 1x1): 9 accumulated (bt,64)x(64,64) matmuls ------
        acc3 = jnp.zeros((bt, 64), f32)
        for p in range(9):
            acc3 = acc3 + jnp.dot(h2[p * bt:(p + 1) * bt, :], w3_ref[p],
                                  preferred_element_type=f32)
        h3 = jnp.maximum(acc3 + b3_ref[...], 0.0).astype(bf16)      # flatten (bt,64)

        # ---- fc1 + merged (actor | value | zero-pad) head -------------------
        hf = jnp.dot(h3, wf_ref[...], preferred_element_type=f32)
        hf = jnp.maximum(hf + bf_ref[...], 0.0).astype(bf16)        # (bt, 512)
        out_ref[...] = (jnp.dot(hf, wh_ref[...], preferred_element_type=f32)
                        + bh_ref[...])                               # (bt, 128) f32

    return kernel


# ------------------------------ forward wrapper ----------------------------- #

def _conv1_super_patches(x):
    """(N, C, 36, 36) -> (16, N, 144*C).

    Row p = Y*4 + X holds the 12x12xC input patch (flattened (row, col, cin))
    that feeds the 2x2 block of conv1 output positions {(2Y+a, 2X+b)}."""
    n, c, _, _ = x.shape
    pats = []
    for py in range(4):
        for px in range(4):
            p = x[:, :, 8 * py:8 * py + 12, 8 * px:8 * px + 12]     # (N, C, 12, 12)
            pats.append(p.transpose(0, 2, 3, 1).reshape(n, 144 * c))
    return jnp.stack(pats, axis=0)                                   # (16, N, 144*C)


def _pick_batch_tile(n):
    if n <= 32:
        return 32
    bt = ((n + 1) // 2 + 31) // 32 * 32     # aim for >= 2 grid steps (v7x: 2 TCs)
    return max(32, min(BATCH_TILE, bt))


def cnn_policy_forward(kparams, x, *, n_act):
    """x: (N, C, 36, 36) float32 in [0, 255].  Returns (logits (N, n_act), value (N,))."""
    n, c, h, w = x.shape
    oh1, ow1 = (h - 8) // 4 + 1, (w - 8) // 4 + 1
    oh2, ow2 = (oh1 - 4) // 2 + 1, (ow1 - 4) // 2 + 1
    assert (h, w) == (36, 36) and (oh1, ow1) == (8, 8) and (oh2, ow2) == (3, 3), \
        "fused kernel is specialised to 36x36 observations (conv3 output 1x1)"
    # TODO(synk): generalise the super-patch extraction / conv3 fusion for larger
    # observations (e.g. 84x84) where the conv3 output map is bigger than 1x1.

    kc = 144 * c
    bt = _pick_batch_tile(n)
    n_pad = ((n + bt - 1) // bt) * bt

    xcol = _conv1_super_patches(x * (1.0 / 255.0)).astype(jnp.bfloat16)
    if n_pad != n:
        xcol = jnp.pad(xcol, ((0, 0), (0, n_pad - n), (0, 0)))

    names = ("w1", "b1", "w2", "b2", "w3", "b3", "wf", "bf", "wh", "bh")
    weights = [kparams[k] for k in names]

    def const_map(nd):
        return lambda b: (0,) * nd

    in_specs = [pl.BlockSpec((16, bt, kc), lambda b: (0, b, 0))]
    in_specs += [pl.BlockSpec(a.shape, const_map(a.ndim)) for a in weights]

    flops = 2 * n_pad * (16 * kc * 128 + 4 * 9 * 128 * 64 + 9 * 64 * 64
                         + 64 * 512 + 512 * HEAD_N)
    bytes_accessed = (int(xcol.size) * 2
                      + sum(int(a.size) * a.dtype.itemsize for a in weights)
                      + n_pad * HEAD_N * 4)

    out = pl.pallas_call(
        _make_kernel(bt, kc),
        out_shape=jax.ShapeDtypeStruct((n_pad, HEAD_N), jnp.float32),
        grid=(n_pad // bt,),
        in_specs=in_specs,
        out_specs=pl.BlockSpec((bt, HEAD_N), lambda b: (b, 0)),
        scratch_shapes=[pltpu.VMEM((4, 4, bt, 128), jnp.bfloat16)],
        compiler_params=pltpu.CompilerParams(
            dimension_semantics=("parallel",),
            vmem_limit_bytes=48 * 1024 * 1024),
        cost_estimate=pl.CostEstimate(flops=flops, transcendentals=0,
                                      bytes_accessed=bytes_accessed),
    )(xcol, *weights)

    out = out[:n]
    return out[:, :n_act], out[:, n_act]


# ------------------------------ parameters ---------------------------------- #

def init_params(key, n_channel, flat_size, n_act):
    ks = jax.random.split(key, 12)

    def conv_w(k, o, c, kh, kw):
        std = math.sqrt(2.0 / (kh * kw * o))          # init_weights_conv
        return std * jax.random.normal(k, (o, c, kh, kw), jnp.float32)

    def fc_w(k, o, i, std=1.0):
        s = std * math.sqrt(2.0 / (i + o))            # init_weights_fc
        return s * jax.random.normal(k, (o, i), jnp.float32)

    def bias(k, fan_in, nout):
        bound = 1.0 / math.sqrt(fan_in)               # PyTorch default bias init
        return jax.random.uniform(k, (nout,), jnp.float32, -bound, bound)

    return {
        "conv1_w": conv_w(ks[0], 32, n_channel, 8, 8),
        "conv1_b": bias(ks[1], n_channel * 8 * 8, 32),
        "conv2_w": conv_w(ks[2], 64, 32, 4, 4),
        "conv2_b": bias(ks[3], 32 * 4 * 4, 64),
        "conv3_w": conv_w(ks[4], 64, 64, 3, 3),
        "conv3_b": bias(ks[5], 64 * 3 * 3, 64),
        "fc1_w": fc_w(ks[6], 512, flat_size, 1.0),
        "fc1_b": bias(ks[7], flat_size, 512),
        "fca_w": fc_w(ks[8], n_act, 512, 0.01),
        "fca_b": bias(ks[9], 512, n_act),
        "fcv_w": fc_w(ks[10], 1, 512, 1.0),
        "fcv_b": bias(ks[11], 512, 1),
    }


def prepare_kernel_params(params, n_act):
    """One-time re-layout of PyTorch-style params into kernel-ready tensors."""
    assert n_act + 1 <= HEAD_N, "merged actor+value head must fit in HEAD_N lanes"
    assert params["fc1_w"].shape[1] == 64, "kernel assumes conv3 output flattens to 64"
    bf16, f32 = jnp.bfloat16, jnp.float32
    c = params["conv1_w"].shape[1]

    # conv1: compute the 2x2 block of output positions (a, b) jointly from their
    # shared 12x12xC super-patch -> (144*C, 128) block-structured weight; output
    # channel index = a*64 + b*32 + o.
    w1c = params["conv1_w"].transpose(2, 3, 1, 0)               # (ky, kx, cin, o)
    wj = jnp.zeros((12, 12, c, 2, 2, 32), f32)
    for a in range(2):
        for b in range(2):
            wj = wj.at[4 * a:4 * a + 8, 4 * b:4 * b + 8, :, a, b, :].set(w1c)
    w1 = wj.reshape(144 * c, 128)
    b1 = jnp.tile(params["conv1_b"], 4).reshape(1, 128)

    # conv2 (64,32,4,4) -> 2x2 space-to-depth taps (4, 128, 64); tap = dy*2+dx,
    # K order = (a, b, cin) matching the conv1 output channel packing.
    w2c = params["conv2_w"].transpose(2, 3, 1, 0).reshape(2, 2, 2, 2, 32, 64)
    w2 = w2c.transpose(0, 2, 1, 3, 4, 5).reshape(4, 128, 64)
    b2 = params["conv2_b"].reshape(1, 64)

    # conv3 (64,64,3,3) -> per-position weights (9, 64, 64), p = ky*3 + kx.
    w3 = params["conv3_w"].transpose(2, 3, 1, 0).reshape(9, 64, 64)
    b3 = params["conv3_b"].reshape(1, 64)

    wf = params["fc1_w"].T                                       # (64, 512)

    wh = jnp.zeros((512, HEAD_N), f32)
    wh = wh.at[:, :n_act].set(params["fca_w"].T)
    wh = wh.at[:, n_act].set(params["fcv_w"][0])
    bh = jnp.zeros((HEAD_N,), f32)
    bh = bh.at[:n_act].set(params["fca_b"])
    bh = bh.at[n_act].set(params["fcv_b"][0])

    return {
        "w1": w1.astype(bf16), "b1": b1.astype(f32),
        "w2": w2.astype(bf16), "b2": b2.astype(f32),
        "w3": w3.astype(bf16), "b3": b3.astype(f32),
        "wf": wf.astype(bf16), "bf": params["fc1_b"].reshape(1, 512).astype(f32),
        "wh": wh.astype(bf16), "bh": bh.reshape(1, HEAD_N).astype(f32),
    }


# ------------------------------ pure-JAX reference --------------------------- #

def _ref_forward(params, x):
    x = x / 255.0

    def conv(x, w, b, s):
        y = jax.lax.conv_general_dilated(
            x, w, (s, s), "VALID", dimension_numbers=("NCHW", "OIHW", "NCHW"))
        return jax.nn.relu(y + b.reshape(1, -1, 1, 1))

    h = conv(x, params["conv1_w"], params["conv1_b"], 4)
    h = conv(h, params["conv2_w"], params["conv2_b"], 2)
    h = conv(h, params["conv3_w"], params["conv3_b"], 1)
    h = h.reshape(h.shape[0], -1)
    h = jax.nn.relu(h @ params["fc1_w"].T + params["fc1_b"])
    act_logits = h @ params["fca_w"].T + params["fca_b"]
    value = (h @ params["fcv_w"].T + params["fcv_b"]).reshape(-1)
    return act_logits, value


# --------------------------------- main -------------------------------------- #

if __name__ == "__main__":
    # ob_space H = W = 36, C = 4  (get_size_out: 36/8 - 3.5 = 1 -> 1*1*64 = 64)
    batch, n_channel, H, W, n_act = 2, 4, 36, 36, 6
    flat_size = 1 * 1 * 64

    key = jax.random.PRNGKey(0)
    pkey, xkey = jax.random.split(key)
    params = init_params(pkey, n_channel, flat_size, n_act)
    x = jax.random.uniform(xkey, (batch, n_channel, H, W), jnp.float32, 0.0, 255.0)

    kparams = prepare_kernel_params(params, n_act)   # one-time weight re-layout
    fwd = jax.jit(partial(cnn_policy_forward, n_act=n_act))
    act_logits, value = fwd(kparams, x)
    jax.block_until_ready((act_logits, value))

    # sanity check against pure-JAX f32 reference (kernel uses bf16 MXU operands)
    ref_logits, ref_value = jax.jit(_ref_forward)(params, x)
    assert act_logits.shape == (batch, n_act) and value.shape == (batch,)
    assert jnp.allclose(act_logits, ref_logits, atol=2e-2, rtol=2e-2)
    assert jnp.allclose(value, ref_value, atol=2e-2, rtol=2e-2)

    print("KERNEL_OK")
</pallas_src>

<mosaic_0001>
module attributes {stable_mosaic.version = 11 : i64} {
  func.func @kernel(%arg0: i32, %arg1: memref<16x32x576xbf16, #tpu.memory_space<vmem>>, %arg2: memref<576x128xbf16, #tpu.memory_space<vmem>>, %arg3: memref<1x128xf32, #tpu.memory_space<vmem>>, %arg4: memref<4x128x64xbf16, #tpu.memory_space<vmem>>, %arg5: memref<1x64xf32, #tpu.memory_space<vmem>>, %arg6: memref<9x64x64xbf16, #tpu.memory_space<vmem>>, %arg7: memref<1x64xf32, #tpu.memory_space<vmem>>, %arg8: memref<64x512xbf16, #tpu.memory_space<vmem>>, %arg9: memref<1x512xf32, #tpu.memory_space<vmem>>, %arg10: memref<512x128xbf16, #tpu.memory_space<vmem>>, %arg11: memref<1x128xf32, #tpu.memory_space<vmem>>, %arg12: memref<32x128xf32, #tpu.memory_space<vmem>>, %arg13: memref<4x4x32x128xbf16, #tpu.memory_space<vmem>>) attributes {dimension_semantics = [#tpu.dimension_semantics<parallel>], iteration_bounds = array<i64: 1>, scalar_prefetch = 0 : i64, scratch_operands = 1 : i64, tpu.core_type = #tpu.core_type<tc>, window_params = [{transform_indices = @transform_0, window_bounds = array<i64: 16, 32, 576>}, {pipeline_mode = #tpu.pipeline_mode<synchronous>, transform_indices = @transform_1, window_bounds = array<i64: 576, 128>}, {pipeline_mode = #tpu.pipeline_mode<synchronous>, transform_indices = @transform_2, window_bounds = array<i64: 1, 128>}, {pipeline_mode = #tpu.pipeline_mode<synchronous>, transform_indices = @transform_3, window_bounds = array<i64: 4, 128, 64>}, {pipeline_mode = #tpu.pipeline_mode<synchronous>, transform_indices = @transform_4, window_bounds = array<i64: 1, 64>}, {pipeline_mode = #tpu.pipeline_mode<synchronous>, transform_indices = @transform_5, window_bounds = array<i64: 9, 64, 64>}, {pipeline_mode = #tpu.pipeline_mode<synchronous>, transform_indices = @transform_6, window_bounds = array<i64: 1, 64>}, {pipeline_mode = #tpu.pipeline_mode<synchronous>, transform_indices = @transform_7, window_bounds = array<i64: 64, 512>}, {pipeline_mode = #tpu.pipeline_mode<synchronous>, transform_indices = @transform_8, window_bounds = array<i64: 1, 512>}, {pipeline_mode = #tpu.pipeline_mode<synchronous>, transform_indices = @transform_9, window_bounds = array<i64: 512, 128>}, {pipeline_mode = #tpu.pipeline_mode<synchronous>, transform_indices = @transform_10, window_bounds = array<i64: 1, 128>}, {transform_indices = @transform_11, window_bounds = array<i64: 32, 128>}]} {
    %c0 = arith.constant 0 : index
    %c0_0 = arith.constant 0 : index
    %c0_1 = arith.constant 0 : index
    %0 = vector.load %arg1[%c0, %c0_0, %c0_1] : memref<16x32x576xbf16, #tpu.memory_space<vmem>>, vector<16x32x576xbf16>
    %1 = vector.shape_cast %0 : vector<16x32x576xbf16> to vector<512x576xbf16>
    %c0_2 = arith.constant 0 : index
    %c0_3 = arith.constant 0 : index
    %2 = vector.load %arg2[%c0_2, %c0_3] : memref<576x128xbf16, #tpu.memory_space<vmem>>, vector<576x128xbf16>
    %cst = arith.constant dense<0.000000e+00> : vector<512x128xf32>
    %3 = tpu.matmul %1, %2, %cst {dimension_numbers = #tpu.dot_dimension_numbers<[1], [0], [0], [1], [0, 0, 1, 1], [], []>} : vector<512x576xbf16>, vector<576x128xbf16>, vector<512x128xf32> -> vector<512x128xf32>
    %c0_4 = arith.constant 0 : index
    %c0_5 = arith.constant 0 : index
    %4 = vector.load %arg3[%c0_4, %c0_5] : memref<1x128xf32, #tpu.memory_space<vmem>>, vector<1x128xf32>
    %5 = vector.broadcast %4 : vector<1x128xf32> to vector<512x128xf32>
    %6 = arith.addf %3, %5 : vector<512x128xf32>
    %cst_6 = arith.constant 0.000000e+00 : f32
    %7 = vector.broadcast %cst_6 : f32 to vector<512x128xf32>
    %8 = arith.maximumf %6, %7 : vector<512x128xf32>
    %9 = vector.shape_cast %8 : vector<512x128xf32> to vector<4x4x32x128xf32>
    %10 = arith.truncf %9 : vector<4x4x32x128xf32> to vector<4x4x32x128xbf16>
    %c0_7 = arith.constant 0 : index
    %c0_8 = arith.constant 0 : index
    %c0_9 = arith.constant 0 : index
    %c0_10 = arith.constant 0 : index
    %11 = vector.load %arg13[%c0_7, %c0_8, %c0_9, %c0_10] : memref<4x4x32x128xbf16, #tpu.memory_space<vmem>>, vector<4x4x32x128xbf16>
    tpu.vector_store %arg13[%c0_7, %c0_8, %c0_9, %c0_10], %10 {strides = array<i32>} : memref<4x4x32x128xbf16, #tpu.memory_space<vmem>>, vector<4x4x32x128xbf16>,
    %cst_11 = arith.constant 0.000000e+00 : f32
    %12 = vector.broadcast %cst_11 : f32 to vector<288x64xf32>
    %c0_12 = arith.constant 0 : index
    %c0_13 = arith.constant 0 : index
    %c0_14 = arith.constant 0 : index
    %c0_15 = arith.constant 0 : index
    %13 = vector.load %arg13[%c0_12, %c0_13, %c0_14, %c0_15] : memref<4x4x32x128xbf16, #tpu.memory_space<vmem>>, vector<3x3x32x128xbf16>
    %14 = vector.shape_cast %13 : vector<3x3x32x128xbf16> to vector<288x128xbf16>
    %c0_16 = arith.constant 0 : index
    %c0_17 = arith.constant 0 : index
    %c0_18 = arith.constant 0 : index
    %15 = vector.load %arg4[%c0_16, %c0_17, %c0_18] : memref<4x128x64xbf16, #tpu.memory_space<vmem>>, vector<1x128x64xbf16>
    %16 = vector.shape_cast %15 : vector<1x128x64xbf16> to vector<128x64xbf16>
    %cst_19 = arith.constant dense<0.000000e+00> : vector<288x64xf32>
    %17 = tpu.matmul %14, %16, %cst_19 {dimension_numbers = #tpu.dot_dimension_numbers<[1], [0], [0], [1], [0, 0, 1, 1], [], []>} : vector<288x128xbf16>, vector<128x64xbf16>, vector<288x64xf32> -> vector<288x64xf32>
    %18 = arith.addf %12, %17 : vector<288x64xf32>
    %c0_20 = arith.constant 0 : index
    %c1 = arith.constant 1 : index
    %c0_21 = arith.constant 0 : index
    %c0_22 = arith.constant 0 : index
    %19 = vector.load %arg13[%c0_20, %c1, %c0_21, %c0_22] : memref<4x4x32x128xbf16, #tpu.memory_space<vmem>>, vector<3x3x32x128xbf16>
    %20 = vector.shape_cast %19 : vector<3x3x32x128xbf16> to vector<288x128xbf16>
    %c1_23 = arith.constant 1 : index
    %c0_24 = arith.constant 0 : index
    %c0_25 = arith.constant 0 : index
    %21 = vector.load %arg4[%c1_23, %c0_24, %c0_25] : memref<4x128x64xbf16, #tpu.memory_space<vmem>>, vector<1x128x64xbf16>
    %22 = vector.shape_cast %21 : vector<1x128x64xbf16> to vector<128x64xbf16>
    %cst_26 = arith.constant dense<0.000000e+00> : vector<288x64xf32>
    %23 = tpu.matmul %20, %22, %cst_26 {dimension_numbers = #tpu.dot_dimension_numbers<[1], [0], [0], [1], [0, 0, 1, 1], [], []>} : vector<288x128xbf16>, vector<128x64xbf16>, vector<288x64xf32> -> vector<288x64xf32>
    %24 = arith.addf %18, %23 : vector<288x64xf32>
    %c1_27 = arith.constant 1 : index
    %c0_28 = arith.constant 0 : index
    %c0_29 = arith.constant 0 : index
    %c0_30 = arith.constant 0 : index
    %25 = vector.load %arg13[%c1_27, %c0_28, %c0_29, %c0_30] : memref<4x4x32x128xbf16, #tpu.memory_space<vmem>>, vector<3x3x32x128xbf16>
    %26 = vector.shape_cast %25 : vector<3x3x32x128xbf16> to vector<288x128xbf16>
    %c2 = arith.constant 2 : index
    %c0_31 = arith.constant 0 : index
    %c0_32 = arith.constant 0 : index
    %27 = vector.load %arg4[%c2, %c0_31, %c0_32] : memref<4x128x64xbf16, #tpu.memory_space<vmem>>, vector<1x128x64xbf16>
    %28 = vector.shape_cast %27 : vector<1x128x64xbf16> to vector<128x64xbf16>
    %cst_33 = arith.constant dense<0.000000e+00> : vector<288x64xf32>
    %29 = tpu.matmul %26, %28, %cst_33 {dimension_numbers = #tpu.dot_dimension_numbers<[1], [0], [0], [1], [0, 0, 1, 1], [], []>} : vector<288x128xbf16>, vector<128x64xbf16>, vector<288x64xf32> -> vector<288x64xf32>
    %30 = arith.addf %24, %29 : vector<288x64xf32>
    %c1_34 = arith.constant 1 : index
    %c1_35 = arith.constant 1 : index
    %c0_36 = arith.constant 0 : index
    %c0_37 = arith.constant 0 : index
    %31 = vector.load %arg13[%c1_34, %c1_35, %c0_36, %c0_37] : memref<4x4x32x128xbf16, #tpu.memory_space<vmem>>, vector<3x3x32x128xbf16>
    %32 = vector.shape_cast %31 : vector<3x3x32x128xbf16> to vector<288x128xbf16>
    %c3 = arith.constant 3 : index
    %c0_38 = arith.constant 0 : index
    %c0_39 = arith.constant 0 : index
    %33 = vector.load %arg4[%c3, %c0_38, %c0_39] : memref<4x128x64xbf16, #tpu.memory_space<vmem>>, vector<1x128x64xbf16>
    %34 = vector.shape_cast %33 : vector<1x128x64xbf16> to vector<128x64xbf16>
    %cst_40 = arith.constant dense<0.000000e+00> : vector<288x64xf32>
    %35 = tpu.matmul %32, %34, %cst_40 {dimension_numbers = #tpu.dot_dimension_numbers<[1], [0], [0], [1], [0, 0, 1, 1], [], []>} : vector<288x128xbf16>, vector<128x64xbf16>, vector<288x64xf32> -> vector<288x64xf32>
    %36 = arith.addf %30, %35 : vector<288x64xf32>
    %c0_41 = arith.constant 0 : index
    %c0_42 = arith.constant 0 : index
    %37 = vector.load %arg5[%c0_41, %c0_42] : memref<1x64xf32, #tpu.memory_space<vmem>>, vector<1x64xf32>
    %38 = vector.broadcast %37 : vector<1x64xf32> to vector<288x64xf32>
    %39 = arith.addf %36, %38 : vector<288x64xf32>
    %cst_43 = arith.constant 0.000000e+00 : f32
    %40 = vector.broadcast %cst_43 : f32 to vector<288x64xf32>
    %41 = arith.maximumf %39, %40 : vector<288x64xf32>
    %42 = arith.truncf %41 : vector<288x64xf32> to vector<288x64xbf16>
    %cst_44 = arith.constant 0.000000e+00 : f32
    %43 = vector.broadcast %cst_44 : f32 to vector<32x64xf32>
    %44 = vector.extract_strided_slice %42 {offsets = [0, 0], sizes = [32, 64], strides = [1, 1]} : vector<288x64xbf16> to vector<32x64xbf16>
    %c0_45 = arith.constant 0 : index
    %c0_46 = arith.constant 0 : index
    %c0_47 = arith.constant 0 : index
    %45 = vector.load %arg6[%c0_45, %c0_46, %c0_47] : memref<9x64x64xbf16, #tpu.memory_space<vmem>>, vector<1x64x64xbf16>
    %46 = vector.shape_cast %45 : vector<1x64x64xbf16> to vector<64x64xbf16>
    %cst_48 = arith.constant dense<0.000000e+00> : vector<32x64xf32>
    %47 = tpu.matmul %44, %46, %cst_48 {dimension_numbers = #tpu.dot_dimension_numbers<[1], [0], [0], [1], [0, 0, 1, 1], [], []>} : vector<32x64xbf16>, vector<64x64xbf16>, vector<32x64xf32> -> vector<32x64xf32>
    %48 = arith.addf %43, %47 : vector<32x64xf32>
    %49 = vector.extract_strided_slice %42 {offsets = [32, 0], sizes = [32, 64], strides = [1, 1]} : vector<288x64xbf16> to vector<32x64xbf16>
    %c1_49 = arith.constant 1 : index
    %c0_50 = arith.constant 0 : index
    %c0_51 = arith.constant 0 : index
    %50 = vector.load %arg6[%c1_49, %c0_50, %c0_51] : memref<9x64x64xbf16, #tpu.memory_space<vmem>>, vector<1x64x64xbf16>
    %51 = vector.shape_cast %50 : vector<1x64x64xbf16> to vector<64x64xbf16>
    %cst_52 = arith.constant dense<0.000000e+00> : vector<32x64xf32>
    %52 = tpu.matmul %49, %51, %cst_52 {dimension_numbers = #tpu.dot_dimension_numbers<[1], [0], [0], [1], [0, 0, 1, 1], [], []>} : vector<32x64xbf16>, vector<64x64xbf16>, vector<32x64xf32> -> vector<32x64xf32>
    %53 = arith.addf %48, %52 : vector<32x64xf32>
    %54 = vector.extract_strided_slice %42 {offsets = [64, 0], sizes = [32, 64], strides = [1, 1]} : vector<288x64xbf16> to vector<32x64xbf16>
    %c2_53 = arith.constant 2 : index
    %c0_54 = arith.constant 0 : index
    %c0_55 = arith.constant 0 : index
    %55 = vector.load %arg6[%c2_53, %c0_54, %c0_55] : memref<9x64x64xbf16, #tpu.memory_space<vmem>>, vector<1x64x64xbf16>
    %56 = vector.shape_cast %55 : vector<1x64x64xbf16> to vector<64x64xbf16>
    %cst_56 = arith.constant dense<0.000000e+00> : vector<32x64xf32>
    %57 = tpu.matmul %54, %56, %cst_56 {dimension_numbers = #tpu.dot_dimension_numbers<[1], [0], [0], [1], [0, 0, 1, 1], [], []>} : vector<32x64xbf16>, vector<64x64xbf16>, vector<32x64xf32> -> vector<32x64xf32>
    %58 = arith.addf %53, %57 : vector<32x64xf32>
    %59 = vector.extract_strided_slice %42 {offsets = [96, 0], sizes = [32, 64], strides = [1, 1]} : vector<288x64xbf16> to vector<32x64xbf16>
    %c3_57 = arith.constant 3 : index
    %c0_58 = arith.constant 0 : index
    %c0_59 = arith.constant 0 : index
    %60 = vector.load %arg6[%c3_57, %c0_58, %c0_59] : memref<9x64x64xbf16, #tpu.memory_space<vmem>>, vector<1x64x64xbf16>
    %61 = vector.shape_cast %60 : vector<1x64x64xbf16> to vector<64x64xbf16>
    %cst_60 = arith.constant dense<0.000000e+00> : vector<32x64xf32>
    %62 = tpu.matmul %59, %61, %cst_60 {dimension_numbers = #tpu.dot_dimension_numbers<[1], [0], [0], [1], [0, 0, 1, 1], [], []>} : vector<32x64xbf16>, vector<64x64xbf16>, vector<32x64xf32> -> vector<32x64xf32>
    %63 = arith.addf %58, %62 : vector<32x64xf32>
    %64 = vector.extract_strided_slice %42 {offsets = [128, 0], sizes = [32, 64], strides = [1, 1]} : vector<288x64xbf16> to vector<32x64xbf16>
    %c4 = arith.constant 4 : index
    %c0_61 = arith.constant 0 : index
    %c0_62 = arith.constant 0 : index
    %65 = vector.load %arg6[%c4, %c0_61, %c0_62] : memref<9x64x64xbf16, #tpu.memory_space<vmem>>, vector<1x64x64xbf16>
    %66 = vector.shape_cast %65 : vector<1x64x64xbf16> to vector<64x64xbf16>
    %cst_63 = arith.constant dense<0.000000e+00> : vector<32x64xf32>
    %67 = tpu.matmul %64, %66, %cst_63 {dimension_numbers = #tpu.dot_dimension_numbers<[1], [0], [0], [1], [0, 0, 1, 1], [], []>} : vector<32x64xbf16>, vector<64x64xbf16>, vector<32x64xf32> -> vector<32x64xf32>
    %68 = arith.addf %63, %67 : vector<32x64xf32>
    %69 = vector.extract_strided_slice %42 {offsets = [160, 0], sizes = [32, 64], strides = [1, 1]} : vector<288x64xbf16> to vector<32x64xbf16>
    %c5 = arith.constant 5 : index
    %c0_64 = arith.constant 0 : index
    %c0_65 = arith.constant 0 : index
    %70 = vector.load %arg6[%c5, %c0_64, %c0_65] : memref<9x64x64xbf16, #tpu.memory_space<vmem>>, vector<1x64x64xbf16>
    %71 = vector.shape_cast %70 : vector<1x64x64xbf16> to vector<64x64xbf16>
    %cst_66 = arith.constant dense<0.000000e+00> : vector<32x64xf32>
    %72 = tpu.matmul %69, %71, %cst_66 {dimension_numbers = #tpu.dot_dimension_numbers<[1], [0], [0], [1], [0, 0, 1, 1], [], []>} : vector<32x64xbf16>, vector<64x64xbf16>, vector<32x64xf32> -> vector<32x64xf32>
    %73 = arith.addf %68, %72 : vector<32x64xf32>
    %74 = vector.extract_strided_slice %42 {offsets = [192, 0], sizes = [32, 64], strides = [1, 1]} : vector<288x64xbf16> to vector<32x64xbf16>
    %c6 = arith.constant 6 : index
    %c0_67 = arith.constant 0 : index
    %c0_68 = arith.constant 0 : index
    %75 = vector.load %arg6[%c6, %c0_67, %c0_68] : memref<9x64x64xbf16, #tpu.memory_space<vmem>>, vector<1x64x64xbf16>
    %76 = vector.shape_cast %75 : vector<1x64x64xbf16> to vector<64x64xbf16>
    %cst_69 = arith.constant dense<0.000000e+00> : vector<32x64xf32>
    %77 = tpu.matmul %74, %76, %cst_69 {dimension_numbers = #tpu.dot_dimension_numbers<[1], [0], [0], [1], [0, 0, 1, 1], [], []>} : vector<32x64xbf16>, vector<64x64xbf16>, vector<32x64xf32> -> vector<32x64xf32>
    %78 = arith.addf %73, %77 : vector<32x64xf32>
    %79 = vector.extract_strided_slice %42 {offsets = [224, 0], sizes = [32, 64], strides = [1, 1]} : vector<288x64xbf16> to vector<32x64xbf16>
    %c7 = arith.constant 7 : index
    %c0_70 = arith.constant 0 : index
    %c0_71 = arith.constant 0 : index
    %80 = vector.load %arg6[%c7, %c0_70, %c0_71] : memref<9x64x64xbf16, #tpu.memory_space<vmem>>, vector<1x64x64xbf16>
    %81 = vector.shape_cast %80 : vector<1x64x64xbf16> to vector<64x64xbf16>
    %cst_72 = arith.constant dense<0.000000e+00> : vector<32x64xf32>
    %82 = tpu.matmul %79, %81, %cst_72 {dimension_numbers = #tpu.dot_dimension_numbers<[1], [0], [0], [1], [0, 0, 1, 1], [], []>} : vector<32x64xbf16>, vector<64x64xbf16>, vector<32x64xf32> -> vector<32x64xf32>
    %83 = arith.addf %78, %82 : vector<32x64xf32>
    %84 = vector.extract_strided_slice %42 {offsets = [256, 0], sizes = [32, 64], strides = [1, 1]} : vector<288x64xbf16> to vector<32x64xbf16>
    %c8 = arith.constant 8 : index
    %c0_73 = arith.constant 0 : index
    %c0_74 = arith.constant 0 : index
    %85 = vector.load %arg6[%c8, %c0_73, %c0_74] : memref<9x64x64xbf16, #tpu.memory_space<vmem>>, vector<1x64x64xbf16>
    %86 = vector.shape_cast %85 : vector<1x64x64xbf16> to vector<64x64xbf16>
    %cst_75 = arith.constant dense<0.000000e+00> : vector<32x64xf32>
    %87 = tpu.matmul %84, %86, %cst_75 {dimension_numbers = #tpu.dot_dimension_numbers<[1], [0], [0], [1], [0, 0, 1, 1], [], []>} : vector<32x64xbf16>, vector<64x64xbf16>, vector<32x64xf32> -> vector<32x64xf32>
    %88 = arith.addf %83, %87 : vector<32x64xf32>
    %c0_76 = arith.constant 0 : index
    %c0_77 = arith.constant 0 : index
    %89 = vector.load %arg7[%c0_76, %c0_77] : memref<1x64xf32, #tpu.memory_space<vmem>>, vector<1x64xf32>
    %90 = vector.broadcast %89 : vector<1x64xf32> to vector<32x64xf32>
    %91 = arith.addf %88, %90 : vector<32x64xf32>
    %cst_78 = arith.constant 0.000000e+00 : f32
    %92 = vector.broadcast %cst_78 : f32 to vector<32x64xf32>
    %93 = arith.maximumf %91, %92 : vector<32x64xf32>
    %94 = arith.truncf %93 : vector<32x64xf32> to vector<32x64xbf16>
    %c0_79 = arith.constant 0 : index
    %c0_80 = arith.constant 0 : index
    %95 = vector.load %arg8[%c0_79, %c0_80] : memref<64x512xbf16, #tpu.memory_space<vmem>>, vector<64x512xbf16>
    %cst_81 = arith.constant dense<0.000000e+00> : vector<32x512xf32>
    %96 = tpu.matmul %94, %95, %cst_81 {dimension_numbers = #tpu.dot_dimension_numbers<[1], [0], [0], [1], [0, 0, 1, 1], [], []>} : vector<32x64xbf16>, vector<64x512xbf16>, vector<32x512xf32> -> vector<32x512xf32>
    %c0_82 = arith.constant 0 : index
    %c0_83 = arith.constant 0 : index
    %97 = vector.load %arg9[%c0_82, %c0_83] : memref<1x512xf32, #tpu.memory_space<vmem>>, vector<1x512xf32>
    %98 = vector.broadcast %97 : vector<1x512xf32> to vector<32x512xf32>
    %99 = arith.addf %96, %98 : vector<32x512xf32>
    %cst_84 = arith.constant 0.000000e+00 : f32
    %100 = vector.broadcast %cst_84 : f32 to vector<32x512xf32>
    %101 = arith.maximumf %99, %100 : vector<32x512xf32>
    %102 = arith.truncf %101 : vector<32x512xf32> to vector<32x512xbf16>
    %c0_85 = arith.constant 0 : index
    %c0_86 = arith.constant 0 : index
    %103 = vector.load %arg10[%c0_85, %c0_86] : memref<512x128xbf16, #tpu.memory_space<vmem>>, vector<512x128xbf16>
    %cst_87 = arith.constant dense<0.000000e+00> : vector<32x128xf32>
    %104 = tpu.matmul %102, %103, %cst_87 {dimension_numbers = #tpu.dot_dimension_numbers<[1], [0], [0], [1], [0, 0, 1, 1], [], []>} : vector<32x512xbf16>, vector<512x128xbf16>, vector<32x128xf32> -> vector<32x128xf32>
    %c0_88 = arith.constant 0 : index
    %c0_89 = arith.constant 0 : index
    %105 = vector.load %arg11[%c0_88, %c0_89] : memref<1x128xf32, #tpu.memory_space<vmem>>, vector<1x128xf32>
    %106 = vector.broadcast %105 : vector<1x128xf32> to vector<32x128xf32>
    %107 = arith.addf %104, %106 : vector<32x128xf32>
    %c0_90 = arith.constant 0 : index
    %c0_91 = arith.constant 0 : index
    %108 = vector.load %arg12[%c0_90, %c0_91] : memref<32x128xf32, #tpu.memory_space<vmem>>, vector<32x128xf32>
    tpu.vector_store %arg12[%c0_90, %c0_91], %107 {strides = array<i32>} : memref<32x128xf32, #tpu.memory_space<vmem>>, vector<32x128xf32>,
    return
  }
  func.func @transform_0(%arg0: i32) -> (i32, i32, i32) {
    %c0_i32 = arith.constant 0 : i32
    %c0_i32_0 = arith.constant 0 : i32
    %c0_i32_1 = arith.constant 0 : i32
    return %c0_i32, %arg0, %c0_i32_0 : i32, i32, i32
  }
  func.func @transform_1(%arg0: i32) -> (i32, i32) {
    %c0_i32 = arith.constant 0 : i32
    %c0_i32_0 = arith.constant 0 : i32
    %c0_i32_1 = arith.constant 0 : i32
    return %c0_i32, %c0_i32_0 : i32, i32
  }
  func.func @transform_2(%arg0: i32) -> (i32, i32) {
    %c0_i32 = arith.constant 0 : i32
    %c0_i32_0 = arith.constant 0 : i32
    %c0_i32_1 = arith.constant 0 : i32
    return %c0_i32, %c0_i32_0 : i32, i32
  }
  func.func @transform_3(%arg0: i32) -> (i32, i32, i32) {
    %c0_i32 = arith.constant 0 : i32
    %c0_i32_0 = arith.constant 0 : i32
    %c0_i32_1 = arith.constant 0 : i32
    %c0_i32_2 = arith.constant 0 : i32
    return %c0_i32, %c0_i32_0, %c0_i32_1 : i32, i32, i32
  }
  func.func @transform_4(%arg0: i32) -> (i32, i32) {
    %c0_i32 = arith.constant 0 : i32
    %c0_i32_0 = arith.constant 0 : i32
    %c0_i32_1 = arith.constant 0 : i32
    return %c0_i32, %c0_i32_0 : i32, i32
  }
  func.func @transform_5(%arg0: i32) -> (i32, i32, i32) {
    %c0_i32 = arith.constant 0 : i32
    %c0_i32_0 = arith.constant 0 : i32
    %c0_i32_1 = arith.constant 0 : i32
    %c0_i32_2 = arith.constant 0 : i32
    return %c0_i32, %c0_i32_0, %c0_i32_1 : i32, i32, i32
  }
  func.func @transform_6(%arg0: i32) -> (i32, i32) {
    %c0_i32 = arith.constant 0 : i32
    %c0_i32_0 = arith.constant 0 : i32
    %c0_i32_1 = arith.constant 0 : i32
    return %c0_i32, %c0_i32_0 : i32, i32
  }
  func.func @transform_7(%arg0: i32) -> (i32, i32) {
    %c0_i32 = arith.constant 0 : i32
    %c0_i32_0 = arith.constant 0 : i32
    %c0_i32_1 = arith.constant 0 : i32
    return %c0_i32, %c0_i32_0 : i32, i32
  }
  func.func @transform_8(%arg0: i32) -> (i32, i32) {
    %c0_i32 = arith.constant 0 : i32
    %c0_i32_0 = arith.constant 0 : i32
    %c0_i32_1 = arith.constant 0 : i32
    return %c0_i32, %c0_i32_0 : i32, i32
  }
  func.func @transform_9(%arg0: i32) -> (i32, i32) {
    %c0_i32 = arith.constant 0 : i32
    %c0_i32_0 = arith.constant 0 : i32
    %c0_i32_1 = arith.constant 0 : i32
    return %c0_i32, %c0_i32_0 : i32, i32
  }
  func.func @transform_10(%arg0: i32) -> (i32, i32) {
    %c0_i32 = arith.constant 0 : i32
    %c0_i32_0 = arith.constant 0 : i32
    %c0_i32_1 = arith.constant 0 : i32
    return %c0_i32, %c0_i32_0 : i32, i32
  }
  func.func @transform_11(%arg0: i32) -> (i32, i32) {
    %c0_i32 = arith.constant 0 : i32
    %c0_i32_0 = arith.constant 0 : i32
    return %arg0, %c0_i32 : i32, i32
  }
}

</mosaic_0001>

<llo_original>
// kernel: cnn_policy_forward.1
$region0: #{cnn_policy_forward.1}
  #allocation0 [shape = 'u32[]', space=smem, size = 0x4, offset = 0x4, fixed_abs, tag = 'smem constant byte address 0x4 - core index']
  #allocation1 [shape = 'u32[72,128]{1,0:T(1,128)}', space=vmem, size = 0x9000, scoped, tag = 'internal scratch']
  #allocation2 [shape = 'bf16[4,4,32,128]{3,2,1,0:T(8,128)(2,1)}', space=vmem, size = 0x20000, scoped, tag = 'scratch operand']
  %s0 = inlined_call_operand.vmem [shape: bf16[16,32,576], index: 0, kind: input, shape index: {}]
  %s1 = inlined_call_operand.vmem [shape: bf16[576,128], index: 1, kind: input, shape index: {}]
  %s2 = inlined_call_operand.vmem [shape: f32[1,128], index: 2, kind: input, shape index: {}]
  %s3 = inlined_call_operand.vmem [shape: bf16[4,128,64], index: 3, kind: input, shape index: {}]
  %s4 = inlined_call_operand.vmem [shape: f32[1,64], index: 4, kind: input, shape index: {}]
  %s5 = inlined_call_operand.vmem [shape: bf16[9,64,64], index: 5, kind: input, shape index: {}]
  %s6 = inlined_call_operand.vmem [shape: f32[1,64], index: 6, kind: input, shape index: {}]
  %s7 = inlined_call_operand.vmem [shape: bf16[64,512], index: 7, kind: input, shape index: {}]
  %s8 = inlined_call_operand.vmem [shape: f32[1,512], index: 8, kind: input, shape index: {}]
  %s9 = inlined_call_operand.vmem [shape: bf16[512,128], index: 9, kind: input, shape index: {}]
  %s10 = inlined_call_operand.vmem [shape: f32[1,128], index: 10, kind: input, shape index: {}]
  %s11 = inlined_call_operand.vmem [shape: f32[32,128], index: 11, kind: output, shape index: {}]
  %s12 = sld [smem:[#allocation0]]
  $region54: #{cnn_policy_forward.1} parent=0
    _
  %s14 = ssub.s32 1, %s12
  %s15 = scalar_select 0, %s14, %s12
  // Predicated region
  $region2: #{cnn_policy_forward.1} parent=0 // pred_check
    _
  $region3: #{cnn_policy_forward.1} parent=0 // pred_check_branch
    %17 = sbr.rel (0) target = $region5
  $region4: #{cnn_policy_forward.1} parent=0 // pred_region
    _
  $region5: #{cnn_policy_forward.1} parent=0 // pred_fallthru
    _
  // Predicated region
  $region6: #{cnn_policy_forward.1} parent=0 // pred_check
    _
  $region7: #{cnn_policy_forward.1} parent=0 // pred_check_branch
    %19 = sbr.rel (0) target = $region9
  $region8: #{cnn_policy_forward.1} parent=0 // pred_region
    _
  $region9: #{cnn_policy_forward.1} parent=0 // pred_fallthru
    _
  // Predicated region
  $region10: #{cnn_policy_forward.1} parent=0 // pred_check
    _
  $region11: #{cnn_policy_forward.1} parent=0 // pred_check_branch
    %21 = sbr.rel (0) target = $region13
  $region12: #{cnn_policy_forward.1} parent=0 // pred_region
    _
  $region13: #{cnn_policy_forward.1} parent=0 // pred_fallthru
    _
  // Predicated region
  $region14: #{cnn_policy_forward.1} parent=0 // pred_check
    _
  $region15: #{cnn_policy_forward.1} parent=0 // pred_check_branch
    %23 = sbr.rel (0) target = $region17
  $region16: #{cnn_policy_forward.1} parent=0 // pred_region
    _
  $region17: #{cnn_policy_forward.1} parent=0 // pred_fallthru
    _
  // Predicated region
  $region18: #{cnn_policy_forward.1} parent=0 // pred_check
    _
  $region19: #{cnn_policy_forward.1} parent=0 // pred_check_branch
    %25 = sbr.rel (0) target = $region21
  $region20: #{cnn_policy_forward.1} parent=0 // pred_region
    _
  $region21: #{cnn_policy_forward.1} parent=0 // pred_fallthru
    _
  // Predicated region
  $region22: #{cnn_policy_forward.1} parent=0 // pred_check
    _
  $region23: #{cnn_policy_forward.1} parent=0 // pred_check_branch
    %27 = sbr.rel (0) target = $region25
  $region24: #{cnn_policy_forward.1} parent=0 // pred_region
    _
  $region25: #{cnn_policy_forward.1} parent=0 // pred_fallthru
    _
  // Predicated region
  $region26: #{cnn_policy_forward.1} parent=0 // pred_check
    _
  $region27: #{cnn_policy_forward.1} parent=0 // pred_check_branch
    %29 = sbr.rel (0) target = $region29
  $region28: #{cnn_policy_forward.1} parent=0 // pred_region
    _
  $region29: #{cnn_policy_forward.1} parent=0 // pred_fallthru
    _
  // Predicated region
  $region30: #{cnn_policy_forward.1} parent=0 // pred_check
    _
  $region31: #{cnn_policy_forward.1} parent=0 // pred_check_branch
    %31 = sbr.rel (0) target = $region33
  $region32: #{cnn_policy_forward.1} parent=0 // pred_region
    _
  $region33: #{cnn_policy_forward.1} parent=0 // pred_fallthru
    _
  // Predicated region
  $region34: #{cnn_policy_forward.1} parent=0 // pred_check
    _
  $region35: #{cnn_policy_forward.1} parent=0 // pred_check_branch
    %33 = sbr.rel (0) target = $region37
  $region36: #{cnn_policy_forward.1} parent=0 // pred_region
    _
  $region37: #{cnn_policy_forward.1} parent=0 // pred_fallthru
    _
  // Predicated region
  $region38: #{cnn_policy_forward.1} parent=0 // pred_check
    _
  $region39: #{cnn_policy_forward.1} parent=0 // pred_check_branch
    %35 = sbr.rel (0) target = $region41
  $region40: #{cnn_policy_forward.1} parent=0 // pred_region
    _
  $region41: #{cnn_policy_forward.1} parent=0 // pred_fallthru
    _
  // Predicated region
  $region42: #{cnn_policy_forward.1} parent=0 // pred_check
    _
  $region43: #{cnn_policy_forward.1} parent=0 // pred_check_branch
    %37 = sbr.rel (0) target = $region45
  $region44: #{cnn_policy_forward.1} parent=0 // pred_region
    _
  $region45: #{cnn_policy_forward.1} parent=0 // pred_fallthru
    _
  %v39 = vld [vmem:[%s0] sm:$0xff]
  %v40 = vld [vmem:[%s0 + $0x8] sm:$0xff]
  %v41 = vld [vmem:[%s0 + $0x10] sm:$0xf]
  %v42 = vld [vmem:[%s0 + $0x14] sm:$0xff]
  %v43 = vld [vmem:[%s0 + $0x1c] sm:$0xff]
  %v44 = vld [vmem:[%s0 + $0x24] sm:$0xf]
  %v45 = vld [vmem:[%s0 + $0x28] sm:$0xff]
  %v46 = vld [vmem:[%s0 + $0x30] sm:$0xff]
  %v47 = vld [vmem:[%s0 + $0x38] sm:$0xf]
  %v48 = vld [vmem:[%s0 + $0x3c] sm:$0xff]
  %v49 = vld [vmem:[%s0 + $0x44] sm:$0xff]
  %v50 = vld [vmem:[%s0 + $0x4c] sm:$0xf]
  %v51 = vld [vmem:[%s0 + $0x50] sm:$0xff]
  %v52 = vld [vmem:[%s0 + $0x58] sm:$0xff]
  %v53 = vld [vmem:[%s0 + $0x60] sm:$0xf]
  %v54 = vld [vmem:[%s0 + $0x64] sm:$0xff]
  %v55 = vld [vmem:[%s0 + $0x6c] sm:$0xff]
  %v56 = vld [vmem:[%s0 + $0x74] sm:$0xf]
  %v57 = vld [vmem:[%s0 + $0x78] sm:$0xff]
  %v58 = vld [vmem:[%s0 + $0x80] sm:$0xff]
  %v59 = vld [vmem:[%s0 + $0x88] sm:$0xf]
  %v60 = vld [vmem:[%s0 + $0x8c] sm:$0xff]
  %v61 = vld [vmem:[%s0 + $0x94] sm:$0xff]
  %v62 = vld [vmem:[%s0 + $0x9c] sm:$0xf]
  %v63 = vld [vmem:[%s0 + $0xa0] sm:$0xff]
  %v64 = vld [vmem:[%s0 + $0xa8] sm:$0xff]
  %v65 = vld [vmem:[%s0 + $0xb0] sm:$0xf]
  %v66 = vld [vmem:[%s0 + $0xb4] sm:$0xff]
  %v67 = vld [vmem:[%s0 + $0xbc] sm:$0xff]
  %v68 = vld [vmem:[%s0 + $0xc4] sm:$0xf]
  %v69 = vld [vmem:[%s0 + $0xc8] sm:$0xff]
  %v70 = vld [vmem:[%s0 + $0xd0] sm:$0xff]
  %v71 = vld [vmem:[%s0 + $0xd8] sm:$0xf]
  %v72 = vld [vmem:[%s0 + $0xdc] sm:$0xff]
  %v73 = vld [vmem:[%s0 + $0xe4] sm:$0xff]
  %v74 = vld [vmem:[%s0 + $0xec] sm:$0xf]
  %v75 = vld [vmem:[%s0 + $0xf0] sm:$0xff]
  %v76 = vld [vmem:[%s0 + $0xf8] sm:$0xff]
  %v77 = vld [vmem:[%s0 + $0x100] sm:$0xf]
  %v78 = vld [vmem:[%s0 + $0x104] sm:$0xff]
  %v79 = vld [vmem:[%s0 + $0x10c] sm:$0xff]
  %v80 = vld [vmem:[%s0 + $0x114] sm:$0xf]
  %v81 = vld [vmem:[%s0 + $0x118] sm:$0xff]
  %v82 = vld [vmem:[%s0 + $0x120] sm:$0xff]
  %v83 = vld [vmem:[%s0 + $0x128] sm:$0xf]
  %v84 = vld [vmem:[%s0 + $0x12c] sm:$0xff]
  %v85 = vld [vmem:[%s0 + $0x134] sm:$0xff]
  %v86 = vld [vmem:[%s0 + $0x13c] sm:$0xf]
  %v87 = vld [vmem:[%s0 + $0x140] sm:$0xff]
  %v88 = vld [vmem:[%s0 + $0x148] sm:$0xff]
  %v89 = vld [vmem:[%s0 + $0x150] sm:$0xf]
  %v90 = vld [vmem:[%s0 + $0x154] sm:$0xff]
  %v91 = vld [vmem:[%s0 + $0x15c] sm:$0xff]
  %v92 = vld [vmem:[%s0 + $0x164] sm:$0xf]
  %v93 = vld [vmem:[%s0 + $0x168] sm:$0xff]
  %v94 = vld [vmem:[%s0 + $0x170] sm:$0xff]
  %v95 = vld [vmem:[%s0 + $0x178] sm:$0xf]
  %v96 = vld [vmem:[%s0 + $0x17c] sm:$0xff]
  %v97 = vld [vmem:[%s0 + $0x184] sm:$0xff]
  %v98 = vld [vmem:[%s0 + $0x18c] sm:$0xf]
  %v99 = vld [vmem:[%s0 + $0x190] sm:$0xff]
  %v100 = vld [vmem:[%s0 + $0x198] sm:$0xff]
  %v101 = vld [vmem:[%s0 + $0x1a0] sm:$0xf]
  %v102 = vld [vmem:[%s0 + $0x1a4] sm:$0xff]
  %v103 = vld [vmem:[%s0 + $0x1ac] sm:$0xff]
  %v104 = vld [vmem:[%s0 + $0x1b4] sm:$0xf]
  %v105 = vld [vmem:[%s0 + $0x1b8] sm:$0xff]
  %v106 = vld [vmem:[%s0 + $0x1c0] sm:$0xff]
  %v107 = vld [vmem:[%s0 + $0x1c8] sm:$0xf]
  %v108 = vld [vmem:[%s0 + $0x1cc] sm:$0xff]
  %v109 = vld [vmem:[%s0 + $0x1d4] sm:$0xff]
  %v110 = vld [vmem:[%s0 + $0x1dc] sm:$0xf]
  %v111 = vld [vmem:[%s0 + $0x1e0] sm:$0xff]
  %v112 = vld [vmem:[%s0 + $0x1e8] sm:$0xff]
  %v113 = vld [vmem:[%s0 + $0x1f0] sm:$0xf]
  %v114 = vld [vmem:[%s0 + $0x1f4] sm:$0xff]
  %v115 = vld [vmem:[%s0 + $0x1fc] sm:$0xff]
  %v116 = vld [vmem:[%s0 + $0x204] sm:$0xf]
  %v117 = vld [vmem:[%s0 + $0x208] sm:$0xff]
  %v118 = vld [vmem:[%s0 + $0x210] sm:$0xff]
  %v119 = vld [vmem:[%s0 + $0x218] sm:$0xf]
  %v120 = vld [vmem:[%s0 + $0x21c] sm:$0xff]
  %v121 = vld [vmem:[%s0 + $0x224] sm:$0xff]
  %v122 = vld [vmem:[%s0 + $0x22c] sm:$0xf]
  %v123 = vld [vmem:[%s0 + $0x230] sm:$0xff]
  %v124 = vld [vmem:[%s0 + $0x238] sm:$0xff]
  %v125 = vld [vmem:[%s0 + $0x240] sm:$0xf]
  %v126 = vld [vmem:[%s0 + $0x244] sm:$0xff]
  %v127 = vld [vmem:[%s0 + $0x24c] sm:$0xff]
  %v128 = vld [vmem:[%s0 + $0x254] sm:$0xf]
  %v129 = vld [vmem:[%s0 + $0x258] sm:$0xff]
  %v130 = vld [vmem:[%s0 + $0x260] sm:$0xff]
  %v131 = vld [vmem:[%s0 + $0x268] sm:$0xf]
  %v132 = vld [vmem:[%s0 + $0x26c] sm:$0xff]
  %v133 = vld [vmem:[%s0 + $0x274] sm:$0xff]
  %v134 = vld [vmem:[%s0 + $0x27c] sm:$0xf]
  %v135 = vld [vmem:[%s0 + $0x280] sm:$0xff]
  %v136 = vld [vmem:[%s0 + $0x288] sm:$0xff]
  %v137 = vld [vmem:[%s0 + $0x290] sm:$0xf]
  %v138 = vld [vmem:[%s0 + $0x294] sm:$0xff]
  %v139 = vld [vmem:[%s0 + $0x29c] sm:$0xff]
  %v140 = vld [vmem:[%s0 + $0x2a4] sm:$0xf]
  %v141 = vld [vmem:[%s0 + $0x2a8] sm:$0xff]
  %v142 = vld [vmem:[%s0 + $0x2b0] sm:$0xff]
  %v143 = vld [vmem:[%s0 + $0x2b8] sm:$0xf]
  %v144 = vld [vmem:[%s0 + $0x2bc] sm:$0xff]
  %v145 = vld [vmem:[%s0 + $0x2c4] sm:$0xff]
  %v146 = vld [vmem:[%s0 + $0x2cc] sm:$0xf]
  %v147 = vld [vmem:[%s0 + $0x2d0] sm:$0xff]
  %v148 = vld [vmem:[%s0 + $0x2d8] sm:$0xff]
  %v149 = vld [vmem:[%s0 + $0x2e0] sm:$0xf]
  %v150 = vld [vmem:[%s0 + $0x2e4] sm:$0xff]
  %v151 = vld [vmem:[%s0 + $0x2ec] sm:$0xff]
  %v152 = vld [vmem:[%s0 + $0x2f4] sm:$0xf]
  %v153 = vld [vmem:[%s0 + $0x2f8] sm:$0xff]
  %v154 = vld [vmem:[%s0 + $0x300] sm:$0xff]
  %v155 = vld [vmem:[%s0 + $0x308] sm:$0xf]
  %v156 = vld [vmem:[%s0 + $0x30c] sm:$0xff]
  %v157 = vld [vmem:[%s0 + $0x314] sm:$0xff]
  %v158 = vld [vmem:[%s0 + $0x31c] sm:$0xf]
  %v159 = vld [vmem:[%s0 + $0x320] sm:$0xff]
  %v160 = vld [vmem:[%s0 + $0x328] sm:$0xff]
  %v161 = vld [vmem:[%s0 + $0x330] sm:$0xf]
  %v162 = vld [vmem:[%s0 + $0x334] sm:$0xff]
  %v163 = vld [vmem:[%s0 + $0x33c] sm:$0xff]
  %v164 = vld [vmem:[%s0 + $0x344] sm:$0xf]
  %v165 = vld [vmem:[%s0 + $0x348] sm:$0xff]
  %v166 = vld [vmem:[%s0 + $0x350] sm:$0xff]
  %v167 = vld [vmem:[%s0 + $0x358] sm:$0xf]
  %v168 = vld [vmem:[%s0 + $0x35c] sm:$0xff]
  %v169 = vld [vmem:[%s0 + $0x364] sm:$0xff]
  %v170 = vld [vmem:[%s0 + $0x36c] sm:$0xf]
  %v171 = vld [vmem:[%s0 + $0x370] sm:$0xff]
  %v172 = vld [vmem:[%s0 + $0x378] sm:$0xff]
  %v173 = vld [vmem:[%s0 + $0x380] sm:$0xf]
  %v174 = vld [vmem:[%s0 + $0x384] sm:$0xff]
  %v175 = vld [vmem:[%s0 + $0x38c] sm:$0xff]
  %v176 = vld [vmem:[%s0 + $0x394] sm:$0xf]
  %v177 = vld [vmem:[%s0 + $0x398] sm:$0xff]
  %v178 = vld [vmem:[%s0 + $0x3a0] sm:$0xff]
  %v179 = vld [vmem:[%s0 + $0x3a8] sm:$0xf]
  %v180 = vld [vmem:[%s0 + $0x3ac] sm:$0xff]
  %v181 = vld [vmem:[%s0 + $0x3b4] sm:$0xff]
  %v182 = vld [vmem:[%s0 + $0x3bc] sm:$0xf]
  %v183 = vld [vmem:[%s0 + $0x3c0] sm:$0xff]
  %v184 = vld [vmem:[%s0 + $0x3c8] sm:$0xff]
  %v185 = vld [vmem:[%s0 + $0x3d0] sm:$0xf]
  %v186 = vld [vmem:[%s0 + $0x3d4] sm:$0xff]
  %v187 = vld [vmem:[%s0 + $0x3dc] sm:$0xff]
  %v188 = vld [vmem:[%s0 + $0x3e4] sm:$0xf]
  %v189 = vld [vmem:[%s0 + $0x3e8] sm:$0xff]
  %v190 = vld [vmem:[%s0 + $0x3f0] sm:$0xff]
  %v191 = vld [vmem:[%s0 + $0x3f8] sm:$0xf]
  %v192 = vld [vmem:[%s0 + $0x3fc] sm:$0xff]
  %v193 = vld [vmem:[%s0 + $0x404] sm:$0xff]
  %v194 = vld [vmem:[%s0 + $0x40c] sm:$0xf]
  %v195 = vld [vmem:[%s0 + $0x410] sm:$0xff]
  %v196 = vld [vmem:[%s0 + $0x418] sm:$0xff]
  %v197 = vld [vmem:[%s0 + $0x420] sm:$0xf]
  %v198 = vld [vmem:[%s0 + $0x424] sm:$0xff]
  %v199 = vld [vmem:[%s0 + $0x42c] sm:$0xff]
  %v200 = vld [vmem:[%s0 + $0x434] sm:$0xf]
  %v201 = vld [vmem:[%s0 + $0x438] sm:$0xff]
  %v202 = vld [vmem:[%s0 + $0x440] sm:$0xff]
  %v203 = vld [vmem:[%s0 + $0x448] sm:$0xf]
  %v204 = vld [vmem:[%s0 + $0x44c] sm:$0xff]
  %v205 = vld [vmem:[%s0 + $0x454] sm:$0xff]
  %v206 = vld [vmem:[%s0 + $0x45c] sm:$0xf]
  %v207 = vld [vmem:[%s0 + $0x460] sm:$0xff]
  %v208 = vld [vmem:[%s0 + $0x468] sm:$0xff]
  %v209 = vld [vmem:[%s0 + $0x470] sm:$0xf]
  %v210 = vld [vmem:[%s0 + $0x474] sm:$0xff]
  %v211 = vld [vmem:[%s0 + $0x47c] sm:$0xff]
  %v212 = vld [vmem:[%s0 + $0x484] sm:$0xf]
  %v213 = vld [vmem:[%s0 + $0x488] sm:$0xff]
  %v214 = vld [vmem:[%s0 + $0x490] sm:$0xff]
  %v215 = vld [vmem:[%s0 + $0x498] sm:$0xf]
  %v216 = vld [vmem:[%s0 + $0x49c] sm:$0xff]
  %v217 = vld [vmem:[%s0 + $0x4a4] sm:$0xff]
  %v218 = vld [vmem:[%s0 + $0x4ac] sm:$0xf]
  %v219 = vld [vmem:[%s0 + $0x4b0] sm:$0xff]
  %v220 = vld [vmem:[%s0 + $0x4b8] sm:$0xff]
  %v221 = vld [vmem:[%s0 + $0x4c0] sm:$0xf]
  %v222 = vld [vmem:[%s0 + $0x4c4] sm:$0xff]
  %v223 = vld [vmem:[%s0 + $0x4cc] sm:$0xff]
  %v224 = vld [vmem:[%s0 + $0x4d4] sm:$0xf]
  %v225 = vld [vmem:[%s0 + $0x4d8] sm:$0xff]
  %v226 = vld [vmem:[%s0 + $0x4e0] sm:$0xff]
  %v227 = vld [vmem:[%s0 + $0x4e8] sm:$0xf]
  %v228 = vld [vmem:[%s0 + $0x4ec] sm:$0xff]
  %v229 = vld [vmem:[%s0 + $0x4f4] sm:$0xff]
  %v230 = vld [vmem:[%s0 + $0x4fc] sm:$0xf]
  %v231 = vld [vmem:[%s1] sm:$0xf]
  %v232 = vld [vmem:[%s1 + $0x4] sm:$0xf]
  %v233 = vld [vmem:[%s1 + $0x8] sm:$0xf]
  %v234 = vld [vmem:[%s1 + $0xc] sm:$0xf]
  %v235 = vld [vmem:[%s1 + $0x10] sm:$0xf]
  %v236 = vld [vmem:[%s1 + $0x14] sm:$0xf]
  %v237 = vld [vmem:[%s1 + $0x18] sm:$0xf]
  %v238 = vld [vmem:[%s1 + $0x1c] sm:$0xf]
  %v239 = vld [vmem:[%s1 + $0x20] sm:$0xf]
  %v240 = vld [vmem:[%s1 + $0x24] sm:$0xf]
  %v241 = vld [vmem:[%s1 + $0x28] sm:$0xf]
  %v242 = vld [vmem:[%s1 + $0x2c] sm:$0xf]
  %v243 = vld [vmem:[%s1 + $0x30] sm:$0xf]
  %v244 = vld [vmem:[%s1 + $0x34] sm:$0xf]
  %v245 = vld [vmem:[%s1 + $0x38] sm:$0xf]
  %v246 = vld [vmem:[%s1 + $0x3c] sm:$0xf]
  %v247 = vld [vmem:[%s1 + $0x40] sm:$0xf]
  %v248 = vld [vmem:[%s1 + $0x44] sm:$0xf]
  %v249 = vld [vmem:[%s1 + $0x48] sm:$0xf]
  %v250 = vld [vmem:[%s1 + $0x4c] sm:$0xf]
  %v251 = vld [vmem:[%s1 + $0x50] sm:$0xf]
  %v252 = vld [vmem:[%s1 + $0x54] sm:$0xf]
  %v253 = vld [vmem:[%s1 + $0x58] sm:$0xf]
  %v254 = vld [vmem:[%s1 + $0x5c] sm:$0xf]
  %v255 = vld [vmem:[%s1 + $0x60] sm:$0xf]
  %v256 = vld [vmem:[%s1 + $0x64] sm:$0xf]
  %v257 = vld [vmem:[%s1 + $0x68] sm:$0xf]
  %v258 = vld [vmem:[%s1 + $0x6c] sm:$0xf]
  %v259 = vld [vmem:[%s1 + $0x70] sm:$0xf]
  %v260 = vld [vmem:[%s1 + $0x74] sm:$0xf]
  %v261 = vld [vmem:[%s1 + $0x78] sm:$0xf]
  %v262 = vld [vmem:[%s1 + $0x7c] sm:$0xf]
  %v263 = vld [vmem:[%s1 + $0x80] sm:$0xf]
  %v264 = vld [vmem:[%s1 + $0x84] sm:$0xf]
  %v265 = vld [vmem:[%s1 + $0x88] sm:$0xf]
  %v266 = vld [vmem:[%s1 + $0x8c] sm:$0xf]
  %v267 = vld [vmem:[%s1 + $0x90] sm:$0xf]
  %v268 = vld [vmem:[%s1 + $0x94] sm:$0xf]
  %v269 = vld [vmem:[%s1 + $0x98] sm:$0xf]
  %v270 = vld [vmem:[%s1 + $0x9c] sm:$0xf]
  %v271 = vld [vmem:[%s1 + $0xa0] sm:$0xf]
  %v272 = vld [vmem:[%s1 + $0xa4] sm:$0xf]
  %v273 = vld [vmem:[%s1 + $0xa8] sm:$0xf]
  %v274 = vld [vmem:[%s1 + $0xac] sm:$0xf]
  %v275 = vld [vmem:[%s1 + $0xb0] sm:$0xf]
  %v276 = vld [vmem:[%s1 + $0xb4] sm:$0xf]
  %v277 = vld [vmem:[%s1 + $0xb8] sm:$0xf]
  %v278 = vld [vmem:[%s1 + $0xbc] sm:$0xf]
  %v279 = vld [vmem:[%s1 + $0xc0] sm:$0xf]
  %v280 = vld [vmem:[%s1 + $0xc4] sm:$0xf]
  %v281 = vld [vmem:[%s1 + $0xc8] sm:$0xf]
  %v282 = vld [vmem:[%s1 + $0xcc] sm:$0xf]
  %v283 = vld [vmem:[%s1 + $0xd0] sm:$0xf]
  %v284 = vld [vmem:[%s1 + $0xd4] sm:$0xf]
  %v285 = vld [vmem:[%s1 + $0xd8] sm:$0xf]
  %v286 = vld [vmem:[%s1 + $0xdc] sm:$0xf]
  %v287 = vld [vmem:[%s1 + $0xe0] sm:$0xf]
  %v288 = vld [vmem:[%s1 + $0xe4] sm:$0xf]
  %v289 = vld [vmem:[%s1 + $0xe8] sm:$0xf]
  %v290 = vld [vmem:[%s1 + $0xec] sm:$0xf]
  %v291 = vld [vmem:[%s1 + $0xf0] sm:$0xf]
  %v292 = vld [vmem:[%s1 + $0xf4] sm:$0xf]
  %v293 = vld [vmem:[%s1 + $0xf8] sm:$0xf]
  %v294 = vld [vmem:[%s1 + $0xfc] sm:$0xf]
  %v295 = vld [vmem:[%s1 + $0x100] sm:$0xf]
  %v296 = vld [vmem:[%s1 + $0x104] sm:$0xf]
  %v297 = vld [vmem:[%s1 + $0x108] sm:$0xf]
  %v298 = vld [vmem:[%s1 + $0x10c] sm:$0xf]
  %v299 = vld [vmem:[%s1 + $0x110] sm:$0xf]
  %v300 = vld [vmem:[%s1 + $0x114] sm:$0xf]
  %v301 = vld [vmem:[%s1 + $0x118] sm:$0xf]
  %v302 = vld [vmem:[%s1 + $0x11c] sm:$0xf]
  %v303 = vld [vmem:[%s2] sm:$0x1]
  %v305 = vperm.slane %v303, 0
  %v499 = vunpack.c.l.b16 %v39
  %v500 = vunpack.c.h.b16 %v39
  %v501 = vunpack.c.l.b16 %v40
  %v502 = vunpack.c.h.b16 %v40
  %v503 = vunpack.c.l.b16 %v41
  %v504 = vunpack.c.l.b16 %v42
  %v505 = vunpack.c.h.b16 %v42
  %v506 = vunpack.c.l.b16 %v43
  %v507 = vunpack.c.h.b16 %v43
  %v508 = vunpack.c.l.b16 %v44
  %v509 = vunpack.c.l.b16 %v45
  %v510 = vunpack.c.h.b16 %v45
  %v511 = vunpack.c.l.b16 %v46
  %v512 = vunpack.c.h.b16 %v46
  %v513 = vunpack.c.l.b16 %v47
  %v514 = vunpack.c.l.b16 %v48
  %v515 = vunpack.c.h.b16 %v48
  %v516 = vunpack.c.l.b16 %v49
  %v517 = vunpack.c.h.b16 %v49
  %v518 = vunpack.c.l.b16 %v50
  %v519 = vunpack.c.l.b16 %v51
  %v520 = vunpack.c.h.b16 %v51
  %v521 = vunpack.c.l.b16 %v52
  %v522 = vunpack.c.h.b16 %v52
  %v523 = vunpack.c.l.b16 %v53
  %v524 = vunpack.c.l.b16 %v54
  %v525 = vunpack.c.h.b16 %v54
  %v526 = vunpack.c.l.b16 %v55
  %v527 = vunpack.c.h.b16 %v55
  %v528 = vunpack.c.l.b16 %v56
  %v529 = vunpack.c.l.b16 %v57
  %v530 = vunpack.c.h.b16 %v57
  %v531 = vunpack.c.l.b16 %v58
  %v532 = vunpack.c.h.b16 %v58
  %v533 = vunpack.c.l.b16 %v59
  %v534 = vunpack.c.l.b16 %v60
  %v535 = vunpack.c.h.b16 %v60
  %v536 = vunpack.c.l.b16 %v61
  %v537 = vunpack.c.h.b16 %v61
  %v538 = vunpack.c.l.b16 %v62
  %v539 = vunpack.c.l.b16 %v63
  %v540 = vunpack.c.h.b16 %v63
  %v541 = vunpack.c.l.b16 %v64
  %v542 = vunpack.c.h.b16 %v64
  %v543 = vunpack.c.l.b16 %v65
  %v544 = vunpack.c.l.b16 %v66
  %v545 = vunpack.c.h.b16 %v66
  %v546 = vunpack.c.l.b16 %v67
  %v547 = vunpack.c.h.b16 %v67
  %v548 = vunpack.c.l.b16 %v68
  %v549 = vunpack.c.l.b16 %v69
  %v550 = vunpack.c.h.b16 %v69
  %v551 = vunpack.c.l.b16 %v70
  %v552 = vunpack.c.h.b16 %v70
  %v553 = vunpack.c.l.b16 %v71
  %v554 = vunpack.c.l.b16 %v72
  %v555 = vunpack.c.h.b16 %v72
  %v556 = vunpack.c.l.b16 %v73
  %v557 = vunpack.c.h.b16 %v73
  %v558 = vunpack.c.l.b16 %v74
  %v559 = vunpack.c.l.b16 %v75
  %v560 = vunpack.c.h.b16 %v75
  %v561 = vunpack.c.l.b16 %v76
  %v562 = vunpack.c.h.b16 %v76
  %v563 = vunpack.c.l.b16 %v77
  %v564 = vunpack.c.l.b16 %v78
  %v565 = vunpack.c.h.b16 %v78
  %v566 = vunpack.c.l.b16 %v79
  %v567 = vunpack.c.h.b16 %v79
  %v568 = vunpack.c.l.b16 %v80
  %v569 = vunpack.c.l.b16 %v81
  %v570 = vunpack.c.h.b16 %v81
  %v571 = vunpack.c.l.b16 %v82
  %v572 = vunpack.c.h.b16 %v82
  %v573 = vunpack.c.l.b16 %v83
  %v574 = vunpack.c.l.b16 %v84
  %v575 = vunpack.c.h.b16 %v84
  %v576 = vunpack.c.l.b16 %v85
  %v577 = vunpack.c.h.b16 %v85
  %v578 = vunpack.c.l.b16 %v86
  %v579 = vunpack.c.l.b16 %v87
  %v580 = vunpack.c.h.b16 %v87
  %v581 = vunpack.c.l.b16 %v88
  %v582 = vunpack.c.h.b16 %v88
  %v583 = vunpack.c.l.b16 %v89
  %v584 = vunpack.c.l.b16 %v90
  %v585 = vunpack.c.h.b16 %v90
  %v586 = vunpack.c.l.b16 %v91
  %v587 = vunpack.c.h.b16 %v91
  %v588 = vunpack.c.l.b16 %v92
  %v589 = vunpack.c.l.b16 %v93
  %v590 = vunpack.c.h.b16 %v93
  %v591 = vunpack.c.l.b16 %v94
  %v592 = vunpack.c.h.b16 %v94
  %v593 = vunpack.c.l.b16 %v95
  %v594 = vunpack.c.l.b16 %v96
  %v595 = vunpack.c.h.b16 %v96
  %v596 = vunpack.c.l.b16 %v97
  %v597 = vunpack.c.h.b16 %v97
  %v598 = vunpack.c.l.b16 %v98
  %v599 = vunpack.c.l.b16 %v99
  %v600 = vunpack.c.h.b16 %v99
  %v601 = vunpack.c.l.b16 %v100
  %v602 = vunpack.c.h.b16 %v100
  %v603 = vunpack.c.l.b16 %v101
  %v604 = vunpack.c.l.b16 %v102
  %v605 = vunpack.c.h.b16 %v102
  %v606 = vunpack.c.l.b16 %v103
  %v607 = vunpack.c.h.b16 %v103
  %v608 = vunpack.c.l.b16 %v104
  %v609 = vunpack.c.l.b16 %v105
  %v610 = vunpack.c.h.b16 %v105
  %v611 = vunpack.c.l.b16 %v106
  %v612 = vunpack.c.h.b16 %v106
  %v613 = vunpack.c.l.b16 %v107
  %v614 = vunpack.c.l.b16 %v108
  %v615 = vunpack.c.h.b16 %v108
  %v616 = vunpack.c.l.b16 %v109
  %v617 = vunpack.c.h.b16 %v109
  %v618 = vunpack.c.l.b16 %v110
  %v619 = vunpack.c.l.b16 %v111
  %v620 = vunpack.c.h.b16 %v111
  %v621 = vunpack.c.l.b16 %v112
  %v622 = vunpack.c.h.b16 %v112
  %v623 = vunpack.c.l.b16 %v113
  %v624 = vunpack.c.l.b16 %v114
  %v625 = vunpack.c.h.b16 %v114
  %v626 = vunpack.c.l.b16 %v115
  %v627 = vunpack.c.h.b16 %v115
  %v628 = vunpack.c.l.b16 %v116
  %v629 = vunpack.c.l.b16 %v117
  %v630 = vunpack.c.h.b16 %v117
  %v631 = vunpack.c.l.b16 %v118
  %v632 = vunpack.c.h.b16 %v118
  %v633 = vunpack.c.l.b16 %v119
  %v634 = vunpack.c.l.b16 %v120
  %v635 = vunpack.c.h.b16 %v120
  %v636 = vunpack.c.l.b16 %v121
  %v637 = vunpack.c.h.b16 %v121
  %v638 = vunpack.c.l.b16 %v122
  %v639 = vunpack.c.l.b16 %v123
  %v640 = vunpack.c.h.b16 %v123
  %v641 = vunpack.c.l.b16 %v124
  %v642 = vunpack.c.h.b16 %v124
  %v643 = vunpack.c.l.b16 %v125
  %v644 = vunpack.c.l.b16 %v126
  %v645 = vunpack.c.h.b16 %v126
  %v646 = vunpack.c.l.b16 %v127
  %v647 = vunpack.c.h.b16 %v127
  %v648 = vunpack.c.l.b16 %v128
  %v649 = vunpack.c.l.b16 %v129
  %v650 = vunpack.c.h.b16 %v129
  %v651 = vunpack.c.l.b16 %v130
  %v652 = vunpack.c.h.b16 %v130
  %v653 = vunpack.c.l.b16 %v131
  %v654 = vunpack.c.l.b16 %v132
  %v655 = vunpack.c.h.b16 %v132
  %v656 = vunpack.c.l.b16 %v133
  %v657 = vunpack.c.h.b16 %v133
  %v658 = vunpack.c.l.b16 %v134
  %v659 = vunpack.c.l.b16 %v135
  %v660 = vunpack.c.h.b16 %v135
  %v661 = vunpack.c.l.b16 %v136
  %v662 = vunpack.c.h.b16 %v136
  %v663 = vunpack.c.l.b16 %v137
  %v664 = vunpack.c.l.b16 %v138
  %v665 = vunpack.c.h.b16 %v138
  %v666 = vunpack.c.l.b16 %v139
  %v667 = vunpack.c.h.b16 %v139
  %v668 = vunpack.c.l.b16 %v140
  %v669 = vunpack.c.l.b16 %v141
  %v670 = vunpack.c.h.b16 %v141
  %v671 = vunpack.c.l.b16 %v142
  %v672 = vunpack.c.h.b16 %v142
  %v673 = vunpack.c.l.b16 %v143
  %v674 = vunpack.c.l.b16 %v144
  %v675 = vunpack.c.h.b16 %v144
  %v676 = vunpack.c.l.b16 %v145
  %v677 = vunpack.c.h.b16 %v145
  %v678 = vunpack.c.l.b16 %v146
  %v679 = vunpack.c.l.b16 %v147
  %v680 = vunpack.c.h.b16 %v147
  %v681 = vunpack.c.l.b16 %v148
  %v682 = vunpack.c.h.b16 %v148
  %v683 = vunpack.c.l.b16 %v149
  %v684 = vunpack.c.l.b16 %v150
  %v685 = vunpack.c.h.b16 %v150
  %v686 = vunpack.c.l.b16 %v151
  %v687 = vunpack.c.h.b16 %v151
  %v688 = vunpack.c.l.b16 %v152
  %v689 = vunpack.c.l.b16 %v153
  %v690 = vunpack.c.h.b16 %v153
  %v691 = vunpack.c.l.b16 %v154
  %v692 = vunpack.c.h.b16 %v154
  %v693 = vunpack.c.l.b16 %v155
  %v694 = vunpack.c.l.b16 %v156
  %v695 = vunpack.c.h.b16 %v156
  %v696 = vunpack.c.l.b16 %v157
  %v697 = vunpack.c.h.b16 %v157
  %v698 = vunpack.c.l.b16 %v158
  %v699 = vunpack.c.l.b16 %v159
  %v700 = vunpack.c.h.b16 %v159
  %v701 = vunpack.c.l.b16 %v160
  %v702 = vunpack.c.h.b16 %v160
  %v703 = vunpack.c.l.b16 %v161
  %v704 = vunpack.c.l.b16 %v162
  %v705 = vunpack.c.h.b16 %v162
  %v706 = vunpack.c.l.b16 %v163
  %v707 = vunpack.c.h.b16 %v163
  %v708 = vunpack.c.l.b16 %v164
  %v709 = vunpack.c.l.b16 %v165
  %v710 = vunpack.c.h.b16 %v165
  %v711 = vunpack.c.l.b16 %v166
  %v712 = vunpack.c.h.b16 %v166
  %v713 = vunpack.c.l.b16 %v167
  %v714 = vunpack.c.l.b16 %v168
  %v715 = vunpack.c.h.b16 %v168
  %v716 = vunpack.c.l.b16 %v169
  %v717 = vunpack.c.h.b16 %v169
  %v718 = vunpack.c.l.b16 %v170
  %v719 = vunpack.c.l.b16 %v171
  %v720 = vunpack.c.h.b16 %v171
  %v721 = vunpack.c.l.b16 %v172
  %v722 = vunpack.c.h.b16 %v172
  %v723 = vunpack.c.l.b16 %v173
  %v724 = vunpack.c.l.b16 %v174
  %v725 = vunpack.c.h.b16 %v174
  %v726 = vunpack.c.l.b16 %v175
  %v727 = vunpack.c.h.b16 %v175
  %v728 = vunpack.c.l.b16 %v176
  %v729 = vunpack.c.l.b16 %v177
  %v730 = vunpack.c.h.b16 %v177
  %v731 = vunpack.c.l.b16 %v178
  %v732 = vunpack.c.h.b16 %v178
  %v733 = vunpack.c.l.b16 %v179
  %v734 = vunpack.c.l.b16 %v180
  %v735 = vunpack.c.h.b16 %v180
  %v736 = vunpack.c.l.b16 %v181
  %v737 = vunpack.c.h.b16 %v181
  %v738 = vunpack.c.l.b16 %v182
  %v739 = vunpack.c.l.b16 %v183
  %v740 = vunpack.c.h.b16 %v183
  %v741 = vunpack.c.l.b16 %v184
  %v742 = vunpack.c.h.b16 %v184
  %v743 = vunpack.c.l.b16 %v185
  %v744 = vunpack.c.l.b16 %v186
  %v745 = vunpack.c.h.b16 %v186
  %v746 = vunpack.c.l.b16 %v187
  %v747 = vunpack.c.h.b16 %v187
  %v748 = vunpack.c.l.b16 %v188
  %v749 = vunpack.c.l.b16 %v189
  %v750 = vunpack.c.h.b16 %v189
  %v751 = vunpack.c.l.b16 %v190
  %v752 = vunpack.c.h.b16 %v190
  %v753 = vunpack.c.l.b16 %v191
  %v754 = vunpack.c.l.b16 %v192
  %v755 = vunpack.c.h.b16 %v192
  %v756 = vunpack.c.l.b16 %v193
  %v757 = vunpack.c.h.b16 %v193
  %v758 = vunpack.c.l.b16 %v194
  %v759 = vunpack.c.l.b16 %v195
  %v760 = vunpack.c.h.b16 %v195
  %v761 = vunpack.c.l.b16 %v196
  %v762 = vunpack.c.h.b16 %v196
  %v763 = vunpack.c.l.b16 %v197
  %v764 = vunpack.c.l.b16 %v198
  %v765 = vunpack.c.h.b16 %v198
  %v766 = vunpack.c.l.b16 %v199
  %v767 = vunpack.c.h.b16 %v199
  %v768 = vunpack.c.l.b16 %v200
  %v769 = vunpack.c.l.b16 %v201
  %v770 = vunpack.c.h.b16 %v201
  %v771 = vunpack.c.l.b16 %v202
  %v772 = vunpack.c.h.b16 %v202
  %v773 = vunpack.c.l.b16 %v203
  %v774 = vunpack.c.l.b16 %v204
  %v775 = vunpack.c.h.b16 %v204
  %v776 = vunpack.c.l.b16 %v205
  %v777 = vunpack.c.h.b16 %v205
  %v778 = vunpack.c.l.b16 %v206
  %v779 = vunpack.c.l.b16 %v207
  %v780 = vunpack.c.h.b16 %v207
  %v781 = vunpack.c.l.b16 %v208
  %v782 = vunpack.c.h.b16 %v208
  %v783 = vunpack.c.l.b16 %v209
  %v784 = vunpack.c.l.b16 %v210
  %v785 = vunpack.c.h.b16 %v210
  %v786 = vunpack.c.l.b16 %v211
  %v787 = vunpack.c.h.b16 %v211
  %v788 = vunpack.c.l.b16 %v212
  %v789 = vunpack.c.l.b16 %v213
  %v790 = vunpack.c.h.b16 %v213
  %v791 = vunpack.c.l.b16 %v214
  %v792 = vunpack.c.h.b16 %v214
  %v793 = vunpack.c.l.b16 %v215
  %v794 = vunpack.c.l.b16 %v216
  %v795 = vunpack.c.h.b16 %v216
  %v796 = vunpack.c.l.b16 %v217
  %v797 = vunpack.c.h.b16 %v217
  %v798 = vunpack.c.l.b16 %v218
  %v799 = vunpack.c.l.b16 %v219
  %v800 = vunpack.c.h.b16 %v219
  %v801 = vunpack.c.l.b16 %v220
  %v802 = vunpack.c.h.b16 %v220
  %v803 = vunpack.c.l.b16 %v221
  %v804 = vunpack.c.l.b16 %v222
  %v805 = vunpack.c.h.b16 %v222
  %v806 = vunpack.c.l.b16 %v223
  %v807 = vunpack.c.h.b16 %v223
  %v808 = vunpack.c.l.b16 %v224
  %v809 = vunpack.c.l.b16 %v225
  %v810 = vunpack.c.h.b16 %v225
  %v811 = vunpack.c.l.b16 %v226
  %v812 = vunpack.c.h.b16 %v226
  %v813 = vunpack.c.l.b16 %v227
  %v814 = vunpack.c.l.b16 %v228
  %v815 = vunpack.c.h.b16 %v228
  %v816 = vunpack.c.l.b16 %v229
  %v817 = vunpack.c.h.b16 %v229
  %v818 = vunpack.c.l.b16 %v230
  %v819 = vpack.c.b16 %v504, %v499
  %v820 = vpack.c.b16 %v505, %v500
  %v821 = vpack.c.b16 %v506, %v501
  %v822 = vpack.c.b16 %v507, %v502
  %v823 = vpack.c.b16 %v508, %v503
  %v824 = vpack.c.b16 %v514, %v509
  %v825 = vpack.c.b16 %v515, %v510
  %v826 = vpack.c.b16 %v516, %v511
  %v827 = vpack.c.b16 %v517, %v512
  %v828 = vpack.c.b16 %v518, %v513
  %v829 = vpack.c.b16 %v524, %v519
  %v830 = vpack.c.b16 %v525, %v520
  %v831 = vpack.c.b16 %v526, %v521
  %v832 = vpack.c.b16 %v527, %v522
  %v833 = vpack.c.b16 %v528, %v523
  %v834 = vpack.c.b16 %v534, %v529
  %v835 = vpack.c.b16 %v535, %v530
  %v836 = vpack.c.b16 %v536, %v531
  %v837 = vpack.c.b16 %v537, %v532
  %v838 = vpack.c.b16 %v538, %v533
  %v839 = vpack.c.b16 %v544, %v539
  %v840 = vpack.c.b16 %v545, %v540
  %v841 = vpack.c.b16 %v546, %v541
  %v842 = vpack.c.b16 %v547, %v542
  %v843 = vpack.c.b16 %v548, %v543
  %v844 = vpack.c.b16 %v554, %v549
  %v845 = vpack.c.b16 %v555, %v550
  %v846 = vpack.c.b16 %v556, %v551
  %v847 = vpack.c.b16 %v557, %v552
  %v848 = vpack.c.b16 %v558, %v553
  %v849 = vpack.c.b16 %v564, %v559
  %v850 = vpack.c.b16 %v565, %v560
  %v851 = vpack.c.b16 %v566, %v561
  %v852 = vpack.c.b16 %v567, %v562
  %v853 = vpack.c.b16 %v568, %v563
  %v854 = vpack.c.b16 %v574, %v569
  %v855 = vpack.c.b16 %v575, %v570
  %v856 = vpack.c.b16 %v576, %v571
  %v857 = vpack.c.b16 %v577, %v572
  %v858 = vpack.c.b16 %v578, %v573
  %v859 = vpack.c.b16 %v584, %v579
  %v860 = vpack.c.b16 %v585, %v580
  %v861 = vpack.c.b16 %v586, %v581
  %v862 = vpack.c.b16 %v587, %v582
  %v863 = vpack.c.b16 %v588, %v583
  %v864 = vpack.c.b16 %v594, %v589
  %v865 = vpack.c.b16 %v595, %v590
  %v866 = vpack.c.b16 %v596, %v591
  %v867 = vpack.c.b16 %v597, %v592
  %v868 = vpack.c.b16 %v598, %v593
  %v869 = vpack.c.b16 %v604, %v599
  %v870 = vpack.c.b16 %v605, %v600
  %v871 = vpack.c.b16 %v606, %v601
  %v872 = vpack.c.b16 %v607, %v602
  %v873 = vpack.c.b16 %v608, %v603
  %v874 = vpack.c.b16 %v614, %v609
  %v875 = vpack.c.b16 %v615, %v610
  %v876 = vpack.c.b16 %v616, %v611
  %v877 = vpack.c.b16 %v617, %v612
  %v878 = vpack.c.b16 %v618, %v613
  %v879 = vpack.c.b16 %v624, %v619
  %v880 = vpack.c.b16 %v625, %v620
  %v881 = vpack.c.b16 %v626, %v621
  %v882 = vpack.c.b16 %v627, %v622
  %v883 = vpack.c.b16 %v628, %v623
  %v884 = vpack.c.b16 %v634, %v629
  %v885 = vpack.c.b16 %v635, %v630
  %v886 = vpack.c.b16 %v636, %v631
  %v887 = vpack.c.b16 %v637, %v632
  %v888 = vpack.c.b16 %v638, %v633
  %v889 = vpack.c.b16 %v644, %v639
  %v890 = vpack.c.b16 %v645, %v640
  %v891 = vpack.c.b16 %v646, %v641
  %v892 = vpack.c.b16 %v647, %v642
  %v893 = vpack.c.b16 %v648, %v643
  %v894 = vpack.c.b16 %v654, %v649
  %v895 = vpack.c.b16 %v655, %v650
  %v896 = vpack.c.b16 %v656, %v651
  %v897 = vpack.c.b16 %v657, %v652
  %v898 = vpack.c.b16 %v658, %v653
  %v899 = vpack.c.b16 %v664, %v659
  %v900 = vpack.c.b16 %v665, %v660
  %v901 = vpack.c.b16 %v666, %v661
  %v902 = vpack.c.b16 %v667, %v662
  %v903 = vpack.c.b16 %v668, %v663
  %v904 = vpack.c.b16 %v674, %v669
  %v905 = vpack.c.b16 %v675, %v670
  %v906 = vpack.c.b16 %v676, %v671
  %v907 = vpack.c.b16 %v677, %v672
  %v908 = vpack.c.b16 %v678, %v673
  %v909 = vpack.c.b16 %v684, %v679
  %v910 = vpack.c.b16 %v685, %v680
  %v911 = vpack.c.b16 %v686, %v681
  %v912 = vpack.c.b16 %v687, %v682
  %v913 = vpack.c.b16 %v688, %v683
  %v914 = vpack.c.b16 %v694, %v689
  %v915 = vpack.c.b16 %v695, %v690
  %v916 = vpack.c.b16 %v696, %v691
  %v917 = vpack.c.b16 %v697, %v692
  %v918 = vpack.c.b16 %v698, %v693
  %v919 = vpack.c.b16 %v704, %v699
  %v920 = vpack.c.b16 %v705, %v700
  %v921 = vpack.c.b16 %v706, %v701
  %v922 = vpack.c.b16 %v707, %v702
  %v923 = vpack.c.b16 %v708, %v703
  %v924 = vpack.c.b16 %v714, %v709
  %v925 = vpack.c.b16 %v715, %v710
  %v926 = vpack.c.b16 %v716, %v711
  %v927 = vpack.c.b16 %v717, %v712
  %v928 = vpack.c.b16 %v718, %v713
  %v929 = vpack.c.b16 %v724, %v719
  %v930 = vpack.c.b16 %v725, %v720
  %v931 = vpack.c.b16 %v726, %v721
  %v932 = vpack.c.b16 %v727, %v722
  %v933 = vpack.c.b16 %v728, %v723
  %v934 = vpack.c.b16 %v734, %v729
  %v935 = vpack.c.b16 %v735, %v730
  %v936 = vpack.c.b16 %v736, %v731
  %v937 = vpack.c.b16 %v737, %v732
  %v938 = vpack.c.b16 %v738, %v733
  %v939 = vpack.c.b16 %v744, %v739
  %v940 = vpack.c.b16 %v745, %v740
  %v941 = vpack.c.b16 %v746, %v741
  %v942 = vpack.c.b16 %v747, %v742
  %v943 = vpack.c.b16 %v748, %v743
  %v944 = vpack.c.b16 %v754, %v749
  %v945 = vpack.c.b16 %v755, %v750
  %v946 = vpack.c.b16 %v756, %v751
  %v947 = vpack.c.b16 %v757, %v752
  %v948 = vpack.c.b16 %v758, %v753
  %v949 = vpack.c.b16 %v764, %v759
  %v950 = vpack.c.b16 %v765, %v760
  %v951 = vpack.c.b16 %v766, %v761
  %v952 = vpack.c.b16 %v767, %v762
  %v953 = vpack.c.b16 %v768, %v763
  %v954 = vpack.c.b16 %v774, %v769
  %v955 = vpack.c.b16 %v775, %v770
  %v956 = vpack.c.b16 %v776, %v771
  %v957 = vpack.c.b16 %v777, %v772
  %v958 = vpack.c.b16 %v778, %v773
  %v959 = vpack.c.b16 %v784, %v779
  %v960 = vpack.c.b16 %v785, %v780
  %v961 = vpack.c.b16 %v786, %v781
  %v962 = vpack.c.b16 %v787, %v782
  %v963 = vpack.c.b16 %v788, %v783
  %v964 = vpack.c.b16 %v794, %v789
  %v965 = vpack.c.b16 %v795, %v790
  %v966 = vpack.c.b16 %v796, %v791
  %v967 = vpack.c.b16 %v797, %v792
  %v968 = vpack.c.b16 %v798, %v793
  %v969 = vpack.c.b16 %v804, %v799
  %v970 = vpack.c.b16 %v805, %v800
  %v971 = vpack.c.b16 %v806, %v801
  %v972 = vpack.c.b16 %v807, %v802
  %v973 = vpack.c.b16 %v808, %v803
  %v974 = vpack.c.b16 %v814, %v809
  %v975 = vpack.c.b16 %v815, %v810
  %v976 = vpack.c.b16 %v816, %v811
  %v977 = vpack.c.b16 %v817, %v812
  %v978 = vpack.c.b16 %v818, %v813
  %v1179 = vunpack.c.l.b16 %v231
  %v1180 = vunpack.c.l.b16 %v232
  %v1181 = vunpack.c.l.b16 %v233
  %v1182 = vunpack.c.l.b16 %v234
  %v1183 = vunpack.c.l.b16 %v235
  %v1184 = vunpack.c.l.b16 %v236
  %v1185 = vunpack.c.l.b16 %v237
  %v1186 = vunpack.c.l.b16 %v238
  %v1187 = vunpack.c.l.b16 %v239
  %v1188 = vunpack.c.l.b16 %v240
  %v1189 = vunpack.c.l.b16 %v241
  %v1190 = vunpack.c.l.b16 %v242
  %v1191 = vunpack.c.l.b16 %v243
  %v1192 = vunpack.c.l.b16 %v244
  %v1193 = vunpack.c.l.b16 %v245
  %v1194 = vunpack.c.l.b16 %v246
  %v1195 = vunpack.c.l.b16 %v247
  %v1196 = vunpack.c.l.b16 %v248
  %v1197 = vunpack.c.l.b16 %v249
  %v1198 = vunpack.c.l.b16 %v250
  %v1199 = vunpack.c.l.b16 %v251
  %v1200 = vunpack.c.l.b16 %v252
  %v1201 = vunpack.c.l.b16 %v253
  %v1202 = vunpack.c.l.b16 %v254
  %v1203 = vunpack.c.l.b16 %v255
  %v1204 = vunpack.c.l.b16 %v256
  %v1205 = vunpack.c.l.b16 %v257
  %v1206 = vunpack.c.l.b16 %v258
  %v1207 = vunpack.c.l.b16 %v259
  %v1208 = vunpack.c.l.b16 %v260
  %v1209 = vunpack.c.l.b16 %v261
  %v1210 = vunpack.c.l.b16 %v262
  %v1211 = vunpack.c.l.b16 %v263
  %v1212 = vunpack.c.l.b16 %v264
  %v1213 = vunpack.c.l.b16 %v265
  %v1214 = vunpack.c.l.b16 %v266
  %v1215 = vunpack.c.l.b16 %v267
  %v1216 = vunpack.c.l.b16 %v268
  %v1217 = vunpack.c.l.b16 %v269
  %v1218 = vunpack.c.l.b16 %v270
  %v1219 = vunpack.c.l.b16 %v271
  %v1220 = vunpack.c.l.b16 %v272
  %v1221 = vunpack.c.l.b16 %v273
  %v1222 = vunpack.c.l.b16 %v274
  %v1223 = vunpack.c.l.b16 %v275
  %v1224 = vunpack.c.l.b16 %v276
  %v1225 = vunpack.c.l.b16 %v277
  %v1226 = vunpack.c.l.b16 %v278
  %v1227 = vunpack.c.l.b16 %v279
  %v1228 = vunpack.c.l.b16 %v280
  %v1229 = vunpack.c.l.b16 %v281
  %v1230 = vunpack.c.l.b16 %v282
  %v1231 = vunpack.c.l.b16 %v283
  %v1232 = vunpack.c.l.b16 %v284
  %v1233 = vunpack.c.l.b16 %v285
  %v1234 = vunpack.c.l.b16 %v286
  %v1235 = vunpack.c.l.b16 %v287
  %v1236 = vunpack.c.l.b16 %v288
  %v1237 = vunpack.c.l.b16 %v289
  %v1238 = vunpack.c.l.b16 %v290
  %v1239 = vunpack.c.l.b16 %v291
  %v1240 = vunpack.c.l.b16 %v292
  %v1241 = vunpack.c.l.b16 %v293
  %v1242 = vunpack.c.l.b16 %v294
  %v1243 = vunpack.c.l.b16 %v295
  %v1244 = vunpack.c.l.b16 %v296
  %v1245 = vunpack.c.l.b16 %v297
  %v1246 = vunpack.c.l.b16 %v298
  %v1247 = vunpack.c.l.b16 %v299
  %v1248 = vunpack.c.l.b16 %v300
  %v1249 = vunpack.c.l.b16 %v301
  %v1250 = vunpack.c.l.b16 %v302
  %v1251 = vpack.c.b16 %v1180, %v1179
  %v1252 = vpack.c.b16 %v1182, %v1181
  %v1253 = vpack.c.b16 %v1184, %v1183
  %v1254 = vpack.c.b16 %v1186, %v1185
  %v1255 = vpack.c.b16 %v1188, %v1187
  %v1256 = vpack.c.b16 %v1190, %v1189
  %v1257 = vpack.c.b16 %v1192, %v1191
  %v1258 = vpack.c.b16 %v1194, %v1193
  %v1259 = vpack.c.b16 %v1196, %v1195
  %v1260 = vpack.c.b16 %v1198, %v1197
  %v1261 = vpack.c.b16 %v1200, %v1199
  %v1262 = vpack.c.b16 %v1202, %v1201
  %v1263 = vpack.c.b16 %v1204, %v1203
  %v1264 = vpack.c.b16 %v1206, %v1205
  %v1265 = vpack.c.b16 %v1208, %v1207
  %v1266 = vpack.c.b16 %v1210, %v1209
  %v1267 = vpack.c.b16 %v1212, %v1211
  %v1268 = vpack.c.b16 %v1214, %v1213
  %v1269 = vpack.c.b16 %v1216, %v1215
  %v1270 = vpack.c.b16 %v1218, %v1217
  %v1271 = vpack.c.b16 %v1220, %v1219
  %v1272 = vpack.c.b16 %v1222, %v1221
  %v1273 = vpack.c.b16 %v1224, %v1223
  %v1274 = vpack.c.b16 %v1226, %v1225
  %v1275 = vpack.c.b16 %v1228, %v1227
  %v1276 = vpack.c.b16 %v1230, %v1229
  %v1277 = vpack.c.b16 %v1232, %v1231
  %v1278 = vpack.c.b16 %v1234, %v1233
  %v1279 = vpack.c.b16 %v1236, %v1235
  %v1280 = vpack.c.b16 %v1238, %v1237
  %v1281 = vpack.c.b16 %v1240, %v1239
  %v1282 = vpack.c.b16 %v1242, %v1241
  %v1283 = vpack.c.b16 %v1244, %v1243
  %v1284 = vpack.c.b16 %v1246, %v1245
  %v1285 = vpack.c.b16 %v1248, %v1247
  %v1286 = vpack.c.b16 %v1250, %v1249
  %vm1323 = vcmask 523264
  %v1325 = vsel %vm1323, %v823, 0
  %v1328 = vsel %vm1323, %v828, 0
  %v1331 = vsel %vm1323, %v833, 0
  %v1334 = vsel %vm1323, %v838, 0
  %v1337 = vsel %vm1323, %v843, 0
  %v1340 = vsel %vm1323, %v848, 0
  %v1343 = vsel %vm1323, %v853, 0
  %v1346 = vsel %vm1323, %v858, 0
  %v1349 = vsel %vm1323, %v863, 0
  %v1352 = vsel %vm1323, %v868, 0
  %v1355 = vsel %vm1323, %v873, 0
  %v1358 = vsel %vm1323, %v878, 0
  %v1361 = vsel %vm1323, %v883, 0
  %v1364 = vsel %vm1323, %v888, 0
  %v1367 = vsel %vm1323, %v893, 0
  %v1370 = vsel %vm1323, %v898, 0
  %v1373 = vsel %vm1323, %v903, 0
  %v1376 = vsel %vm1323, %v908, 0
  %v1379 = vsel %vm1323, %v913, 0
  %v1382 = vsel %vm1323, %v918, 0
  %v1385 = vsel %vm1323, %v923, 0
  %v1388 = vsel %vm1323, %v928, 0
  %v1391 = vsel %vm1323, %v933, 0
  %v1394 = vsel %vm1323, %v938, 0
  %v1397 = vsel %vm1323, %v943, 0
  %v1400 = vsel %vm1323, %v948, 0
  %v1403 = vsel %vm1323, %v953, 0
  %v1406 = vsel %vm1323, %v958, 0
  %v1409 = vsel %vm1323, %v963, 0
  %v1412 = vsel %vm1323, %v968, 0
  %v1415 = vsel %vm1323, %v973, 0
  %v1418 = vsel %vm1323, %v978, 0
  %1420 = vmatpush.bf16.msra.mxu0 %v1258
  %1421 = vmatpush.bf16.msra.mxu0 %v1257
  %1422 = vmatpush.bf16.msra.mxu0 %v1256
  %1423 = vmatpush.bf16.msra.mxu0 %v1255
  %1424 = vmatpush.bf16.msra.mxu0 %v1254
  %1425 = vmatpush.bf16.msra.mxu0 %v1253
  %1426 = vmatpush.bf16.msra.mxu0 %v1252
  %1427 = vmatpush.bf16.msra.mxu0 %v1251
  %1428 = vmatmul.bf16.gmra.mxu0 %v819
  %v1429 = vpop.f32.mrf.mxu0
  %v1430 = vadd.f32 %v305, %v1429
  %v1431 = vpop.f32.mrf.mxu0
  %v1432 = vadd.f32 %v305, %v1431
  %1433 = vmatmul.bf16.gmra.mxu0 %v824
  %v1434 = vpop.f32.mrf.mxu0
  %v1435 = vadd.f32 %v305, %v1434
  %v1436 = vpop.f32.mrf.mxu0
  %v1437 = vadd.f32 %v305, %v1436
  %1438 = vmatmul.bf16.gmra.mxu0 %v829
  %v1439 = vpop.f32.mrf.mxu0
  %v1440 = vadd.f32 %v305, %v1439
  %v1441 = vpop.f32.mrf.mxu0
  %v1442 = vadd.f32 %v305, %v1441
  %1443 = vmatmul.bf16.gmra.mxu0 %v834
  %v1444 = vpop.f32.mrf.mxu0
  %v1445 = vadd.f32 %v305, %v1444
  %v1446 = vpop.f32.mrf.mxu0
  %v1447 = vadd.f32 %v305, %v1446
  %1448 = vmatmul.bf16.gmra.mxu0 %v839
  %v1449 = vpop.f32.mrf.mxu0
  %v1450 = vadd.f32 %v305, %v1449
  %v1451 = vpop.f32.mrf.mxu0
  %v1452 = vadd.f32 %v305, %v1451
  %1453 = vmatmul.bf16.gmra.mxu0 %v844
  %v1454 = vpop.f32.mrf.mxu0
  %v1455 = vadd.f32 %v305, %v1454
  %v1456 = vpop.f32.mrf.mxu0
  %v1457 = vadd.f32 %v305, %v1456
  %1458 = vmatmul.bf16.gmra.mxu0 %v849
  %v1459 = vpop.f32.mrf.mxu0
  %v1460 = vadd.f32 %v305, %v1459
  %v1461 = vpop.f32.mrf.mxu0
  %v1462 = vadd.f32 %v305, %v1461
  %1463 = vmatmul.bf16.gmra.mxu0 %v854
  %v1464 = vpop.f32.mrf.mxu0
  %v1465 = vadd.f32 %v305, %v1464
  %v1466 = vpop.f32.mrf.mxu0
  %v1467 = vadd.f32 %v305, %v1466
  %1468 = vmatmul.bf16.gmra.mxu0 %v859
  %v1469 = vpop.f32.mrf.mxu0
  %v1470 = vadd.f32 %v305, %v1469
  %v1471 = vpop.f32.mrf.mxu0
  %v1472 = vadd.f32 %v305, %v1471
  %1473 = vmatmul.bf16.gmra.mxu0 %v864
  %v1474 = vpop.f32.mrf.mxu0
  %v1475 = vadd.f32 %v305, %v1474
  %v1476 = vpop.f32.mrf.mxu0
  %v1477 = vadd.f32 %v305, %v1476
  %1478 = vmatmul.bf16.gmra.mxu0 %v869
  %v1479 = vpop.f32.mrf.mxu0
  %v1480 = vadd.f32 %v305, %v1479
  %v1481 = vpop.f32.mrf.mxu0
  %v1482 = vadd.f32 %v305, %v1481
  %1483 = vmatmul.bf16.gmra.mxu0 %v874
  %v1484 = vpop.f32.mrf.mxu0
  %v1485 = vadd.f32 %v305, %v1484
  %v1486 = vpop.f32.mrf.mxu0
  %v1487 = vadd.f32 %v305, %v1486
  %1488 = vmatmul.bf16.gmra.mxu0 %v879
  %v1489 = vpop.f32.mrf.mxu0
  %v1490 = vadd.f32 %v305, %v1489
  %v1491 = vpop.f32.mrf.mxu0
  %v1492 = vadd.f32 %v305, %v1491
  %1493 = vmatmul.bf16.gmra.mxu0 %v884
  %v1494 = vpop.f32.mrf.mxu0
  %v1495 = vadd.f32 %v305, %v1494
  %v1496 = vpop.f32.mrf.mxu0
  %v1497 = vadd.f32 %v305, %v1496
  %1498 = vmatmul.bf16.gmra.mxu0 %v889
  %v1499 = vpop.f32.mrf.mxu0
  %v1500 = vadd.f32 %v305, %v1499
  %v1501 = vpop.f32.mrf.mxu0
  %v1502 = vadd.f32 %v305, %v1501
  %1503 = vmatmul.bf16.gmra.mxu0 %v894
  %v1504 = vpop.f32.mrf.mxu0
  %v1505 = vadd.f32 %v305, %v1504
  %v1506 = vpop.f32.mrf.mxu0
  %v1507 = vadd.f32 %v305, %v1506
  %1508 = vmatmul.bf16.gmra.mxu0 %v899
  %v1509 = vpop.f32.mrf.mxu0
  %v1510 = vadd.f32 %v305, %v1509
  %v1511 = vpop.f32.mrf.mxu0
  %v1512 = vadd.f32 %v305, %v1511
  %1513 = vmatmul.bf16.gmra.mxu0 %v904
  %v1514 = vpop.f32.mrf.mxu0
  %v1515 = vadd.f32 %v305, %v1514
  %v1516 = vpop.f32.mrf.mxu0
  %v1517 = vadd.f32 %v305, %v1516
  %1518 = vmatmul.bf16.gmra.mxu0 %v909
  %v1519 = vpop.f32.mrf.mxu0
  %v1520 = vadd.f32 %v305, %v1519
  %v1521 = vpop.f32.mrf.mxu0
  %v1522 = vadd.f32 %v305, %v1521
  %1523 = vmatmul.bf16.gmra.mxu0 %v914
  %v1524 = vpop.f32.mrf.mxu0
  %v1525 = vadd.f32 %v305, %v1524
  %v1526 = vpop.f32.mrf.mxu0
  %v1527 = vadd.f32 %v305, %v1526
  %1528 = vmatmul.bf16.gmra.mxu0 %v919
  %v1529 = vpop.f32.mrf.mxu0
  %v1530 = vadd.f32 %v305, %v1529
  %v1531 = vpop.f32.mrf.mxu0
  %v1532 = vadd.f32 %v305, %v1531
  %1533 = vmatmul.bf16.gmra.mxu0 %v924
  %v1534 = vpop.f32.mrf.mxu0
  %v1535 = vadd.f32 %v305, %v1534
  %v1536 = vpop.f32.mrf.mxu0
  %v1537 = vadd.f32 %v305, %v1536
  %1538 = vmatmul.bf16.gmra.mxu0 %v929
  %v1539 = vpop.f32.mrf.mxu0
  %v1540 = vadd.f32 %v305, %v1539
  %v1541 = vpop.f32.mrf.mxu0
  %v1542 = vadd.f32 %v305, %v1541
  %1543 = vmatmul.bf16.gmra.mxu0 %v934
  %v1544 = vpop.f32.mrf.mxu0
  %v1545 = vadd.f32 %v305, %v1544
  %v1546 = vpop.f32.mrf.mxu0
  %v1547 = vadd.f32 %v305, %v1546
  %1548 = vmatmul.bf16.gmra.mxu0 %v939
  %v1549 = vpop.f32.mrf.mxu0
  %v1550 = vadd.f32 %v305, %v1549
  %v1551 = vpop.f32.mrf.mxu0
  %v1552 = vadd.f32 %v305, %v1551
  %1553 = vmatmul.bf16.gmra.mxu0 %v944
  %v1554 = vpop.f32.mrf.mxu0
  %v1555 = vadd.f32 %v305, %v1554
  %v1556 = vpop.f32.mrf.mxu0
  %v1557 = vadd.f32 %v305, %v1556
  %1558 = vmatmul.bf16.gmra.mxu0 %v949
  %v1559 = vpop.f32.mrf.mxu0
  %v1560 = vadd.f32 %v305, %v1559
  %v1561 = vpop.f32.mrf.mxu0
  %v1562 = vadd.f32 %v305, %v1561
  %1563 = vmatmul.bf16.gmra.mxu0 %v954
  %v1564 = vpop.f32.mrf.mxu0
  %v1565 = vadd.f32 %v305, %v1564
  %v1566 = vpop.f32.mrf.mxu0
  %v1567 = vadd.f32 %v305, %v1566
  %1568 = vmatmul.bf16.gmra.mxu0 %v959
  %v1569 = vpop.f32.mrf.mxu0
  %v1570 = vadd.f32 %v305, %v1569
  %v1571 = vpop.f32.mrf.mxu0
  %v1572 = vadd.f32 %v305, %v1571
  %1573 = vmatmul.bf16.gmra.mxu0 %v964
  %v1574 = vpop.f32.mrf.mxu0
  %v1575 = vadd.f32 %v305, %v1574
  %v1576 = vpop.f32.mrf.mxu0
  %v1577 = vadd.f32 %v305, %v1576
  %1578 = vmatmul.bf16.gmra.mxu0 %v969
  %v1579 = vpop.f32.mrf.mxu0
  %v1580 = vadd.f32 %v305, %v1579
  %v1581 = vpop.f32.mrf.mxu0
  %v1582 = vadd.f32 %v305, %v1581
  %1583 = vmatmul.bf16.gmra.mxu0 %v974
  %v1584 = vpop.f32.mrf.mxu0
  %v1585 = vadd.f32 %v305, %v1584
  %v1586 = vpop.f32.mrf.mxu0
  %v1587 = vadd.f32 %v305, %v1586
  %1588 = vdwg.mxu0
  %1589 = vmatpush.bf16.msra.mxu0 %v1266
  %1590 = vmatpush.bf16.msra.mxu0 %v1265
  %1591 = vmatpush.bf16.msra.mxu0 %v1264
  %1592 = vmatpush.bf16.msra.mxu0 %v1263
  %1593 = vmatpush.bf16.msra.mxu0 %v1262
  %1594 = vmatpush.bf16.msra.mxu0 %v1261
  %1595 = vmatpush.bf16.msra.mxu0 %v1260
  %1596 = vmatpush.bf16.msra.mxu0 %v1259
  %1597 = vmatmul.bf16.gmra.mxu0 %v820
  %v1598 = vpop.f32.mrf.mxu0
  %v1599 = vadd.f32 %v1430, %v1598
  %v1600 = vpop.f32.mrf.mxu0
  %v1601 = vadd.f32 %v1432, %v1600
  %1602 = vmatmul.bf16.gmra.mxu0 %v825
  %v1603 = vpop.f32.mrf.mxu0
  %v1604 = vadd.f32 %v1435, %v1603
  %v1605 = vpop.f32.mrf.mxu0
  %v1606 = vadd.f32 %v1437, %v1605
  %1607 = vmatmul.bf16.gmra.mxu0 %v830
  %v1608 = vpop.f32.mrf.mxu0
  %v1609 = vadd.f32 %v1440, %v1608
  %v1610 = vpop.f32.mrf.mxu0
  %v1611 = vadd.f32 %v1442, %v1610
  %1612 = vmatmul.bf16.gmra.mxu0 %v835
  %v1613 = vpop.f32.mrf.mxu0
  %v1614 = vadd.f32 %v1445, %v1613
  %v1615 = vpop.f32.mrf.mxu0
  %v1616 = vadd.f32 %v1447, %v1615
  %1617 = vmatmul.bf16.gmra.mxu0 %v840
  %v1618 = vpop.f32.mrf.mxu0
  %v1619 = vadd.f32 %v1450, %v1618
  %v1620 = vpop.f32.mrf.mxu0
  %v1621 = vadd.f32 %v1452, %v1620
  %1622 = vmatmul.bf16.gmra.mxu0 %v845
  %v1623 = vpop.f32.mrf.mxu0
  %v1624 = vadd.f32 %v1455, %v1623
  %v1625 = vpop.f32.mrf.mxu0
  %v1626 = vadd.f32 %v1457, %v1625
  %1627 = vmatmul.bf16.gmra.mxu0 %v850
  %v1628 = vpop.f32.mrf.mxu0
  %v1629 = vadd.f32 %v1460, %v1628
  %v1630 = vpop.f32.mrf.mxu0
  %v1631 = vadd.f32 %v1462, %v1630
  %1632 = vmatmul.bf16.gmra.mxu0 %v855
  %v1633 = vpop.f32.mrf.mxu0
  %v1634 = vadd.f32 %v1465, %v1633
  %v1635 = vpop.f32.mrf.mxu0
  %v1636 = vadd.f32 %v1467, %v1635
  %1637 = vmatmul.bf16.gmra.mxu0 %v860
  %v1638 = vpop.f32.mrf.mxu0
  %v1639 = vadd.f32 %v1470, %v1638
  %v1640 = vpop.f32.mrf.mxu0
  %v1641 = vadd.f32 %v1472, %v1640
  %1642 = vmatmul.bf16.gmra.mxu0 %v865
  %v1643 = vpop.f32.mrf.mxu0
  %v1644 = vadd.f32 %v1475, %v1643
  %v1645 = vpop.f32.mrf.mxu0
  %v1646 = vadd.f32 %v1477, %v1645
  %1647 = vmatmul.bf16.gmra.mxu0 %v870
  %v1648 = vpop.f32.mrf.mxu0
  %v1649 = vadd.f32 %v1480, %v1648
  %v1650 = vpop.f32.mrf.mxu0
  %v1651 = vadd.f32 %v1482, %v1650
  %1652 = vmatmul.bf16.gmra.mxu0 %v875
  %v1653 = vpop.f32.mrf.mxu0
  %v1654 = vadd.f32 %v1485, %v1653
  %v1655 = vpop.f32.mrf.mxu0
  %v1656 = vadd.f32 %v1487, %v1655
  %1657 = vmatmul.bf16.gmra.mxu0 %v880
  %v1658 = vpop.f32.mrf.mxu0
  %v1659 = vadd.f32 %v1490, %v1658
  %v1660 = vpop.f32.mrf.mxu0
  %v1661 = vadd.f32 %v1492, %v1660
  %1662 = vmatmul.bf16.gmra.mxu0 %v885
  %v1663 = vpop.f32.mrf.mxu0
  %v1664 = vadd.f32 %v1495, %v1663
  %v1665 = vpop.f32.mrf.mxu0
  %v1666 = vadd.f32 %v1497, %v1665
  %1667 = vmatmul.bf16.gmra.mxu0 %v890
  %v1668 = vpop.f32.mrf.mxu0
  %v1669 = vadd.f32 %v1500, %v1668
  %v1670 = vpop.f32.mrf.mxu0
  %v1671 = vadd.f32 %v1502, %v1670
  %1672 = vmatmul.bf16.gmra.mxu0 %v895
  %v1673 = vpop.f32.mrf.mxu0
  %v1674 = vadd.f32 %v1505, %v1673
  %v1675 = vpop.f32.mrf.mxu0
  %v1676 = vadd.f32 %v1507, %v1675
  %1677 = vmatmul.bf16.gmra.mxu0 %v900
  %v1678 = vpop.f32.mrf.mxu0
  %v1679 = vadd.f32 %v1510, %v1678
  %v1680 = vpop.f32.mrf.mxu0
  %v1681 = vadd.f32 %v1512, %v1680
  %1682 = vmatmul.bf16.gmra.mxu0 %v905
  %v1683 = vpop.f32.mrf.mxu0
  %v1684 = vadd.f32 %v1515, %v1683
  %v1685 = vpop.f32.mrf.mxu0
  %v1686 = vadd.f32 %v1517, %v1685
  %1687 = vmatmul.bf16.gmra.mxu0 %v910
  %v1688 = vpop.f32.mrf.mxu0
  %v1689 = vadd.f32 %v1520, %v1688
  %v1690 = vpop.f32.mrf.mxu0
  %v1691 = vadd.f32 %v1522, %v1690
  %1692 = vmatmul.bf16.gmra.mxu0 %v915
  %v1693 = vpop.f32.mrf.mxu0
  %v1694 = vadd.f32 %v1525, %v1693
  %v1695 = vpop.f32.mrf.mxu0
  %v1696 = vadd.f32 %v1527, %v1695
  %1697 = vmatmul.bf16.gmra.mxu0 %v920
  %v1698 = vpop.f32.mrf.mxu0
  %v1699 = vadd.f32 %v1530, %v1698
  %v1700 = vpop.f32.mrf.mxu0
  %v1701 = vadd.f32 %v1532, %v1700
  %1702 = vmatmul.bf16.gmra.mxu0 %v925
  %v1703 = vpop.f32.mrf.mxu0
  %v1704 = vadd.f32 %v1535, %v1703
  %v1705 = vpop.f32.mrf.mxu0
  %v1706 = vadd.f32 %v1537, %v1705
  %1707 = vmatmul.bf16.gmra.mxu0 %v930
  %v1708 = vpop.f32.mrf.mxu0
  %v1709 = vadd.f32 %v1540, %v1708
  %v1710 = vpop.f32.mrf.mxu0
  %v1711 = vadd.f32 %v1542, %v1710
  %1712 = vmatmul.bf16.gmra.mxu0 %v935
  %v1713 = vpop.f32.mrf.mxu0
  %v1714 = vadd.f32 %v1545, %v1713
  %v1715 = vpop.f32.mrf.mxu0
  %v1716 = vadd.f32 %v1547, %v1715
  %1717 = vmatmul.bf16.gmra.mxu0 %v940
  %v1718 = vpop.f32.mrf.mxu0
  %v1719 = vadd.f32 %v1550, %v1718
  %v1720 = vpop.f32.mrf.mxu0
  %v1721 = vadd.f32 %v1552, %v1720
  %1722 = vmatmul.bf16.gmra.mxu0 %v945
  %v1723 = vpop.f32.mrf.mxu0
  %v1724 = vadd.f32 %v1555, %v1723
  %v1725 = vpop.f32.mrf.mxu0
  %v1726 = vadd.f32 %v1557, %v1725
  %1727 = vmatmul.bf16.gmra.mxu0 %v950
  %v1728 = vpop.f32.mrf.mxu0
  %v1729 = vadd.f32 %v1560, %v1728
  %v1730 = vpop.f32.mrf.mxu0
  %v1731 = vadd.f32 %v1562, %v1730
  %1732 = vmatmul.bf16.gmra.mxu0 %v955
  %v1733 = vpop.f32.mrf.mxu0
  %v1734 = vadd.f32 %v1565, %v1733
  %v1735 = vpop.f32.mrf.mxu0
  %v1736 = vadd.f32 %v1567, %v1735
  %1737 = vmatmul.bf16.gmra.mxu0 %v960
  %v1738 = vpop.f32.mrf.mxu0
  %v1739 = vadd.f32 %v1570, %v1738
  %v1740 = vpop.f32.mrf.mxu0
  %v1741 = vadd.f32 %v1572, %v1740
  %1742 = vmatmul.bf16.gmra.mxu0 %v965
  %v1743 = vpop.f32.mrf.mxu0
  %v1744 = vadd.f32 %v1575, %v1743
  %v1745 = vpop.f32.mrf.mxu0
  %v1746 = vadd.f32 %v1577, %v1745
  %1747 = vmatmul.bf16.gmra.mxu0 %v970
  %v1748 = vpop.f32.mrf.mxu0
  %v1749 = vadd.f32 %v1580, %v1748
  %v1750 = vpop.f32.mrf.mxu0
  %v1751 = vadd.f32 %v1582, %v1750
  %1752 = vmatmul.bf16.gmra.mxu0 %v975
  %v1753 = vpop.f32.mrf.mxu0
  %v1754 = vadd.f32 %v1585, %v1753
  %v1755 = vpop.f32.mrf.mxu0
  %v1756 = vadd.f32 %v1587, %v1755
  %1757 = vdwg.mxu0
  %1758 = vmatpush.bf16.msra.mxu0 %v1274
  %1759 = vmatpush.bf16.msra.mxu0 %v1273
  %1760 = vmatpush.bf16.msra.mxu0 %v1272
  %1761 = vmatpush.bf16.msra.mxu0 %v1271
  %1762 = vmatpush.bf16.msra.mxu0 %v1270
  %1763 = vmatpush.bf16.msra.mxu0 %v1269
  %1764 = vmatpush.bf16.msra.mxu0 %v1268
  %1765 = vmatpush.bf16.msra.mxu0 %v1267
  %1766 = vmatmul.bf16.gmra.mxu0 %v821
  %v1767 = vpop.f32.mrf.mxu0
  %v1768 = vadd.f32 %v1599, %v1767
  %v1769 = vpop.f32.mrf.mxu0
  %v1770 = vadd.f32 %v1601, %v1769
  %1771 = vmatmul.bf16.gmra.mxu0 %v826
  %v1772 = vpop.f32.mrf.mxu0
  %v1773 = vadd.f32 %v1604, %v1772
  %v1774 = vpop.f32.mrf.mxu0
  %v1775 = vadd.f32 %v1606, %v1774
  %1776 = vmatmul.bf16.gmra.mxu0 %v831
  %v1777 = vpop.f32.mrf.mxu0
  %v1778 = vadd.f32 %v1609, %v1777
  %v1779 = vpop.f32.mrf.mxu0
  %v1780 = vadd.f32 %v1611, %v1779
  %1781 = vmatmul.bf16.gmra.mxu0 %v836
  %v1782 = vpop.f32.mrf.mxu0
  %v1783 = vadd.f32 %v1614, %v1782
  %v1784 = vpop.f32.mrf.mxu0
  %v1785 = vadd.f32 %v1616, %v1784
  %1786 = vmatmul.bf16.gmra.mxu0 %v841
  %v1787 = vpop.f32.mrf.mxu0
  %v1788 = vadd.f32 %v1619, %v1787
  %v1789 = vpop.f32.mrf.mxu0
  %v1790 = vadd.f32 %v1621, %v1789
  %1791 = vmatmul.bf16.gmra.mxu0 %v846
  %v1792 = vpop.f32.mrf.mxu0
  %v1793 = vadd.f32 %v1624, %v1792
  %v1794 = vpop.f32.mrf.mxu0
  %v1795 = vadd.f32 %v1626, %v1794
  %1796 = vmatmul.bf16.gmra.mxu0 %v851
  %v1797 = vpop.f32.mrf.mxu0
  %v1798 = vadd.f32 %v1629, %v1797
  %v1799 = vpop.f32.mrf.mxu0
  %v1800 = vadd.f32 %v1631, %v1799
  %1801 = vmatmul.bf16.gmra.mxu0 %v856
  %v1802 = vpop.f32.mrf.mxu0
  %v1803 = vadd.f32 %v1634, %v1802
  %v1804 = vpop.f32.mrf.mxu0
  %v1805 = vadd.f32 %v1636, %v1804
  %1806 = vmatmul.bf16.gmra.mxu0 %v861
  %v1807 = vpop.f32.mrf.mxu0
  %v1808 = vadd.f32 %v1639, %v1807
  %v1809 = vpop.f32.mrf.mxu0
  %v1810 = vadd.f32 %v1641, %v1809
  %1811 = vmatmul.bf16.gmra.mxu0 %v866
  %v1812 = vpop.f32.mrf.mxu0
  %v1813 = vadd.f32 %v1644, %v1812
  %v1814 = vpop.f32.mrf.mxu0
  %v1815 = vadd.f32 %v1646, %v1814
  %1816 = vmatmul.bf16.gmra.mxu0 %v871
  %v1817 = vpop.f32.mrf.mxu0
  %v1818 = vadd.f32 %v1649, %v1817
  %v1819 = vpop.f32.mrf.mxu0
  %v1820 = vadd.f32 %v1651, %v1819
  %1821 = vmatmul.bf16.gmra.mxu0 %v876
  %v1822 = vpop.f32.mrf.mxu0
  %v1823 = vadd.f32 %v1654, %v1822
  %v1824 = vpop.f32.mrf.mxu0
  %v1825 = vadd.f32 %v1656, %v1824
  %1826 = vmatmul.bf16.gmra.mxu0 %v881
  %v1827 = vpop.f32.mrf.mxu0
  %v1828 = vadd.f32 %v1659, %v1827
  %v1829 = vpop.f32.mrf.mxu0
  %v1830 = vadd.f32 %v1661, %v1829
  %1831 = vmatmul.bf16.gmra.mxu0 %v886
  %v1832 = vpop.f32.mrf.mxu0
  %v1833 = vadd.f32 %v1664, %v1832
  %v1834 = vpop.f32.mrf.mxu0
  %v1835 = vadd.f32 %v1666, %v1834
  %1836 = vmatmul.bf16.gmra.mxu0 %v891
  %v1837 = vpop.f32.mrf.mxu0
  %v1838 = vadd.f32 %v1669, %v1837
  %v1839 = vpop.f32.mrf.mxu0
  %v1840 = vadd.f32 %v1671, %v1839
  %1841 = vmatmul.bf16.gmra.mxu0 %v896
  %v1842 = vpop.f32.mrf.mxu0
  %v1843 = vadd.f32 %v1674, %v1842
  %v1844 = vpop.f32.mrf.mxu0
  %v1845 = vadd.f32 %v1676, %v1844
  %1846 = vmatmul.bf16.gmra.mxu0 %v901
  %v1847 = vpop.f32.mrf.mxu0
  %v1848 = vadd.f32 %v1679, %v1847
  %v1849 = vpop.f32.mrf.mxu0
  %v1850 = vadd.f32 %v1681, %v1849
  %1851 = vmatmul.bf16.gmra.mxu0 %v906
  %v1852 = vpop.f32.mrf.mxu0
  %v1853 = vadd.f32 %v1684, %v1852
  %v1854 = vpop.f32.mrf.mxu0
  %v1855 = vadd.f32 %v1686, %v1854
  %1856 = vmatmul.bf16.gmra.mxu0 %v911
  %v1857 = vpop.f32.mrf.mxu0
  %v1858 = vadd.f32 %v1689, %v1857
  %v1859 = vpop.f32.mrf.mxu0
  %v1860 = vadd.f32 %v1691, %v1859
  %1861 = vmatmul.bf16.gmra.mxu0 %v916
  %v1862 = vpop.f32.mrf.mxu0
  %v1863 = vadd.f32 %v1694, %v1862
  %v1864 = vpop.f32.mrf.mxu0
  %v1865 = vadd.f32 %v1696, %v1864
  %1866 = vmatmul.bf16.gmra.mxu0 %v921
  %v1867 = vpop.f32.mrf.mxu0
  %v1868 = vadd.f32 %v1699, %v1867
  %v1869 = vpop.f32.mrf.mxu0
  %v1870 = vadd.f32 %v1701, %v1869
  %1871 = vmatmul.bf16.gmra.mxu0 %v926
  %v1872 = vpop.f32.mrf.mxu0
  %v1873 = vadd.f32 %v1704, %v1872
  %v1874 = vpop.f32.mrf.mxu0
  %v1875 = vadd.f32 %v1706, %v1874
  %1876 = vmatmul.bf16.gmra.mxu0 %v931
  %v1877 = vpop.f32.mrf.mxu0
  %v1878 = vadd.f32 %v1709, %v1877
  %v1879 = vpop.f32.mrf.mxu0
  %v1880 = vadd.f32 %v1711, %v1879
  %1881 = vmatmul.bf16.gmra.mxu0 %v936
  %v1882 = vpop.f32.mrf.mxu0
  %v1883 = vadd.f32 %v1714, %v1882
  %v1884 = vpop.f32.mrf.mxu0
  %v1885 = vadd.f32 %v1716, %v1884
  %1886 = vmatmul.bf16.gmra.mxu0 %v941
  %v1887 = vpop.f32.mrf.mxu0
  %v1888 = vadd.f32 %v1719, %v1887
  %v1889 = vpop.f32.mrf.mxu0
  %v1890 = vadd.f32 %v1721, %v1889
  %1891 = vmatmul.bf16.gmra.mxu0 %v946
  %v1892 = vpop.f32.mrf.mxu0
  %v1893 = vadd.f32 %v1724, %v1892
  %v1894 = vpop.f32.mrf.mxu0
  %v1895 = vadd.f32 %v1726, %v1894
  %1896 = vmatmul.bf16.gmra.mxu0 %v951
  %v1897 = vpop.f32.mrf.mxu0
  %v1898 = vadd.f32 %v1729, %v1897
  %v1899 = vpop.f32.mrf.mxu0
  %v1900 = vadd.f32 %v1731, %v1899
  %1901 = vmatmul.bf16.gmra.mxu0 %v956
  %v1902 = vpop.f32.mrf.mxu0
  %v1903 = vadd.f32 %v1734, %v1902
  %v1904 = vpop.f32.mrf.mxu0
  %v1905 = vadd.f32 %v1736, %v1904
  %1906 = vmatmul.bf16.gmra.mxu0 %v961
  %v1907 = vpop.f32.mrf.mxu0
  %v1908 = vadd.f32 %v1739, %v1907
  %v1909 = vpop.f32.mrf.mxu0
  %v1910 = vadd.f32 %v1741, %v1909
  %1911 = vmatmul.bf16.gmra.mxu0 %v966
  %v1912 = vpop.f32.mrf.mxu0
  %v1913 = vadd.f32 %v1744, %v1912
  %v1914 = vpop.f32.mrf.mxu0
  %v1915 = vadd.f32 %v1746, %v1914
  %1916 = vmatmul.bf16.gmra.mxu0 %v971
  %v1917 = vpop.f32.mrf.mxu0
  %v1918 = vadd.f32 %v1749, %v1917
  %v1919 = vpop.f32.mrf.mxu0
  %v1920 = vadd.f32 %v1751, %v1919
  %1921 = vmatmul.bf16.gmra.mxu0 %v976
  %v1922 = vpop.f32.mrf.mxu0
  %v1923 = vadd.f32 %v1754, %v1922
  %v1924 = vpop.f32.mrf.mxu0
  %v1925 = vadd.f32 %v1756, %v1924
  %1926 = vdwg.mxu0
  %1927 = vmatpush.bf16.msra.mxu0 %v1282
  %1928 = vmatpush.bf16.msra.mxu0 %v1281
  %1929 = vmatpush.bf16.msra.mxu0 %v1280
  %1930 = vmatpush.bf16.msra.mxu0 %v1279
  %1931 = vmatpush.bf16.msra.mxu0 %v1278
  %1932 = vmatpush.bf16.msra.mxu0 %v1277
  %1933 = vmatpush.bf16.msra.mxu0 %v1276
  %1934 = vmatpush.bf16.msra.mxu0 %v1275
  %1935 = vmatmul.bf16.gmra.mxu0 %v822
  %v1936 = vpop.f32.mrf.mxu0
  %v1937 = vadd.f32 %v1768, %v1936
  %v1938 = vpop.f32.mrf.mxu0
  %v1939 = vadd.f32 %v1770, %v1938
  %1940 = vmatmul.bf16.gmra.mxu0 %v827
  %v1941 = vpop.f32.mrf.mxu0
  %v1942 = vadd.f32 %v1773, %v1941
  %v1943 = vpop.f32.mrf.mxu0
  %v1944 = vadd.f32 %v1775, %v1943
  %1945 = vmatmul.bf16.gmra.mxu0 %v832
  %v1946 = vpop.f32.mrf.mxu0
  %v1947 = vadd.f32 %v1778, %v1946
  %v1948 = vpop.f32.mrf.mxu0
  %v1949 = vadd.f32 %v1780, %v1948
  %1950 = vmatmul.bf16.gmra.mxu0 %v837
  %v1951 = vpop.f32.mrf.mxu0
  %v1952 = vadd.f32 %v1783, %v1951
  %v1953 = vpop.f32.mrf.mxu0
  %v1954 = vadd.f32 %v1785, %v1953
  %1955 = vmatmul.bf16.gmra.mxu0 %v842
  %v1956 = vpop.f32.mrf.mxu0
  %v1957 = vadd.f32 %v1788, %v1956
  %v1958 = vpop.f32.mrf.mxu0
  %v1959 = vadd.f32 %v1790, %v1958
  %1960 = vmatmul.bf16.gmra.mxu0 %v847
  %v1961 = vpop.f32.mrf.mxu0
  %v1962 = vadd.f32 %v1793, %v1961
  %v1963 = vpop.f32.mrf.mxu0
  %v1964 = vadd.f32 %v1795, %v1963
  %1965 = vmatmul.bf16.gmra.mxu0 %v852
  %v1966 = vpop.f32.mrf.mxu0
  %v1967 = vadd.f32 %v1798, %v1966
  %v1968 = vpop.f32.mrf.mxu0
  %v1969 = vadd.f32 %v1800, %v1968
  %1970 = vmatmul.bf16.gmra.mxu0 %v857
  %v1971 = vpop.f32.mrf.mxu0
  %v1972 = vadd.f32 %v1803, %v1971
  %v1973 = vpop.f32.mrf.mxu0
  %v1974 = vadd.f32 %v1805, %v1973
  %1975 = vmatmul.bf16.gmra.mxu0 %v862
  %v1976 = vpop.f32.mrf.mxu0
  %v1977 = vadd.f32 %v1808, %v1976
  %v1978 = vpop.f32.mrf.mxu0
  %v1979 = vadd.f32 %v1810, %v1978
  %1980 = vmatmul.bf16.gmra.mxu0 %v867
  %v1981 = vpop.f32.mrf.mxu0
  %v1982 = vadd.f32 %v1813, %v1981
  %v1983 = vpop.f32.mrf.mxu0
  %v1984 = vadd.f32 %v1815, %v1983
  %1985 = vmatmul.bf16.gmra.mxu0 %v872
  %v1986 = vpop.f32.mrf.mxu0
  %v1987 = vadd.f32 %v1818, %v1986
  %v1988 = vpop.f32.mrf.mxu0
  %v1989 = vadd.f32 %v1820, %v1988
  %1990 = vmatmul.bf16.gmra.mxu0 %v877
  %v1991 = vpop.f32.mrf.mxu0
  %v1992 = vadd.f32 %v1823, %v1991
  %v1993 = vpop.f32.mrf.mxu0
  %v1994 = vadd.f32 %v1825, %v1993
  %1995 = vmatmul.bf16.gmra.mxu0 %v882
  %v1996 = vpop.f32.mrf.mxu0
  %v1997 = vadd.f32 %v1828, %v1996
  %v1998 = vpop.f32.mrf.mxu0
  %v1999 = vadd.f32 %v1830, %v1998
  %2000 = vmatmul.bf16.gmra.mxu0 %v887
  %v2001 = vpop.f32.mrf.mxu0
  %v2002 = vadd.f32 %v1833, %v2001
  %v2003 = vpop.f32.mrf.mxu0
  %v2004 = vadd.f32 %v1835, %v2003
  %2005 = vmatmul.bf16.gmra.mxu0 %v892
  %v2006 = vpop.f32.mrf.mxu0
  %v2007 = vadd.f32 %v1838, %v2006
  %v2008 = vpop.f32.mrf.mxu0
  %v2009 = vadd.f32 %v1840, %v2008
  %2010 = vmatmul.bf16.gmra.mxu0 %v897
  %v2011 = vpop.f32.mrf.mxu0
  %v2012 = vadd.f32 %v1843, %v2011
  %v2013 = vpop.f32.mrf.mxu0
  %v2014 = vadd.f32 %v1845, %v2013
  %2015 = vmatmul.bf16.gmra.mxu0 %v902
  %v2016 = vpop.f32.mrf.mxu0
  %v2017 = vadd.f32 %v1848, %v2016
  %v2018 = vpop.f32.mrf.mxu0
  %v2019 = vadd.f32 %v1850, %v2018
  %2020 = vmatmul.bf16.gmra.mxu0 %v907
  %v2021 = vpop.f32.mrf.mxu0
  %v2022 = vadd.f32 %v1853, %v2021
  %v2023 = vpop.f32.mrf.mxu0
  %v2024 = vadd.f32 %v1855, %v2023
  %2025 = vmatmul.bf16.gmra.mxu0 %v912
  %v2026 = vpop.f32.mrf.mxu0
  %v2027 = vadd.f32 %v1858, %v2026
  %v2028 = vpop.f32.mrf.mxu0
  %v2029 = vadd.f32 %v1860, %v2028
  %2030 = vmatmul.bf16.gmra.mxu0 %v917
  %v2031 = vpop.f32.mrf.mxu0
  %v2032 = vadd.f32 %v1863, %v2031
  %v2033 = vpop.f32.mrf.mxu0
  %v2034 = vadd.f32 %v1865, %v2033
  %2035 = vmatmul.bf16.gmra.mxu0 %v922
  %v2036 = vpop.f32.mrf.mxu0
  %v2037 = vadd.f32 %v1868, %v2036
  %v2038 = vpop.f32.mrf.mxu0
  %v2039 = vadd.f32 %v1870, %v2038
  %2040 = vmatmul.bf16.gmra.mxu0 %v927
  %v2041 = vpop.f32.mrf.mxu0
  %v2042 = vadd.f32 %v1873, %v2041
  %v2043 = vpop.f32.mrf.mxu0
  %v2044 = vadd.f32 %v1875, %v2043
  %2045 = vmatmul.bf16.gmra.mxu0 %v932
  %v2046 = vpop.f32.mrf.mxu0
  %v2047 = vadd.f32 %v1878, %v2046
  %v2048 = vpop.f32.mrf.mxu0
  %v2049 = vadd.f32 %v1880, %v2048
  %2050 = vmatmul.bf16.gmra.mxu0 %v937
  %v2051 = vpop.f32.mrf.mxu0
  %v2052 = vadd.f32 %v1883, %v2051
  %v2053 = vpop.f32.mrf.mxu0
  %v2054 = vadd.f32 %v1885, %v2053
  %2055 = vmatmul.bf16.gmra.mxu0 %v942
  %v2056 = vpop.f32.mrf.mxu0
  %v2057 = vadd.f32 %v1888, %v2056
  %v2058 = vpop.f32.mrf.mxu0
  %v2059 = vadd.f32 %v1890, %v2058
  %2060 = vmatmul.bf16.gmra.mxu0 %v947
  %v2061 = vpop.f32.mrf.mxu0
  %v2062 = vadd.f32 %v1893, %v2061
  %v2063 = vpop.f32.mrf.mxu0
  %v2064 = vadd.f32 %v1895, %v2063
  %2065 = vmatmul.bf16.gmra.mxu0 %v952
  %v2066 = vpop.f32.mrf.mxu0
  %v2067 = vadd.f32 %v1898, %v2066
  %v2068 = vpop.f32.mrf.mxu0
  %v2069 = vadd.f32 %v1900, %v2068
  %2070 = vmatmul.bf16.gmra.mxu0 %v957
  %v2071 = vpop.f32.mrf.mxu0
  %v2072 = vadd.f32 %v1903, %v2071
  %v2073 = vpop.f32.mrf.mxu0
  %v2074 = vadd.f32 %v1905, %v2073
  %2075 = vmatmul.bf16.gmra.mxu0 %v962
  %v2076 = vpop.f32.mrf.mxu0
  %v2077 = vadd.f32 %v1908, %v2076
  %v2078 = vpop.f32.mrf.mxu0
  %v2079 = vadd.f32 %v1910, %v2078
  %2080 = vmatmul.bf16.gmra.mxu0 %v967
  %v2081 = vpop.f32.mrf.mxu0
  %v2082 = vadd.f32 %v1913, %v2081
  %v2083 = vpop.f32.mrf.mxu0
  %v2084 = vadd.f32 %v1915, %v2083
  %2085 = vmatmul.bf16.gmra.mxu0 %v972
  %v2086 = vpop.f32.mrf.mxu0
  %v2087 = vadd.f32 %v1918, %v2086
  %v2088 = vpop.f32.mrf.mxu0
  %v2089 = vadd.f32 %v1920, %v2088
  %2090 = vmatmul.bf16.gmra.mxu0 %v977
  %v2091 = vpop.f32.mrf.mxu0
  %v2092 = vadd.f32 %v1923, %v2091
  %v2093 = vpop.f32.mrf.mxu0
  %v2094 = vadd.f32 %v1925, %v2093
  %2095 = vdwg.mxu0
  %2096 = vmatpush.bf16.msra.mxu0 0
  %2097 = vmatpush.bf16.msra.mxu0 0
  %2098 = vmatpush.bf16.msra.mxu0 0
  %2099 = vmatpush.bf16.msra.mxu0 0
  %2100 = vmatpush.bf16.msra.mxu0 %v1286
  %2101 = vmatpush.bf16.msra.mxu0 %v1285
  %2102 = vmatpush.bf16.msra.mxu0 %v1284
  %2103 = vmatpush.bf16.msra.mxu0 %v1283
  %2104 = vmatmul.bf16.gmra.mxu0 %v1325
  %v2105 = vpop.f32.mrf.mxu0
  %v2106 = vadd.f32 %v1937, %v2105
  %v2107 = vpop.f32.mrf.mxu0
  %v2108 = vadd.f32 %v1939, %v2107
  %2109 = vmatmul.bf16.gmra.mxu0 %v1328
  %v2110 = vpop.f32.mrf.mxu0
  %v2111 = vadd.f32 %v1942, %v2110
  %v2112 = vpop.f32.mrf.mxu0
  %v2113 = vadd.f32 %v1944, %v2112
  %2114 = vmatmul.bf16.gmra.mxu0 %v1331
  %v2115 = vpop.f32.mrf.mxu0
  %v2116 = vadd.f32 %v1947, %v2115
  %v2117 = vpop.f32.mrf.mxu0
  %v2118 = vadd.f32 %v1949, %v2117
  %2119 = vmatmul.bf16.gmra.mxu0 %v1334
  %v2120 = vpop.f32.mrf.mxu0
  %v2121 = vadd.f32 %v1952, %v2120
  %v2122 = vpop.f32.mrf.mxu0
  %v2123 = vadd.f32 %v1954, %v2122
  %2124 = vmatmul.bf16.gmra.mxu0 %v1337
  %v2125 = vpop.f32.mrf.mxu0
  %v2126 = vadd.f32 %v1957, %v2125
  %v2127 = vpop.f32.mrf.mxu0
  %v2128 = vadd.f32 %v1959, %v2127
  %2129 = vmatmul.bf16.gmra.mxu0 %v1340
  %v2130 = vpop.f32.mrf.mxu0
  %v2131 = vadd.f32 %v1962, %v2130
  %v2132 = vpop.f32.mrf.mxu0
  %v2133 = vadd.f32 %v1964, %v2132
  %2134 = vmatmul.bf16.gmra.mxu0 %v1343
  %v2135 = vpop.f32.mrf.mxu0
  %v2136 = vadd.f32 %v1967, %v2135
  %v2137 = vpop.f32.mrf.mxu0
  %v2138 = vadd.f32 %v1969, %v2137
  %2139 = vmatmul.bf16.gmra.mxu0 %v1346
  %v2140 = vpop.f32.mrf.mxu0
  %v2141 = vadd.f32 %v1972, %v2140
  %v2142 = vpop.f32.mrf.mxu0
  %v2143 = vadd.f32 %v1974, %v2142
  %2144 = vmatmul.bf16.gmra.mxu0 %v1349
  %v2145 = vpop.f32.mrf.mxu0
  %v2146 = vadd.f32 %v1977, %v2145
  %v2147 = vpop.f32.mrf.mxu0
  %v2148 = vadd.f32 %v1979, %v2147
  %2149 = vmatmul.bf16.gmra.mxu0 %v1352
  %v2150 = vpop.f32.mrf.mxu0
  %v2151 = vadd.f32 %v1982, %v2150
  %v2152 = vpop.f32.mrf.mxu0
  %v2153 = vadd.f32 %v1984, %v2152
  %2154 = vmatmul.bf16.gmra.mxu0 %v1355
  %v2155 = vpop.f32.mrf.mxu0
  %v2156 = vadd.f32 %v1987, %v2155
  %v2157 = vpop.f32.mrf.mxu0
  %v2158 = vadd.f32 %v1989, %v2157
  %2159 = vmatmul.bf16.gmra.mxu0 %v1358
  %v2160 = vpop.f32.mrf.mxu0
  %v2161 = vadd.f32 %v1992, %v2160
  %v2162 = vpop.f32.mrf.mxu0
  %v2163 = vadd.f32 %v1994, %v2162
  %2164 = vmatmul.bf16.gmra.mxu0 %v1361
  %v2165 = vpop.f32.mrf.mxu0
  %v2166 = vadd.f32 %v1997, %v2165
  %v2167 = vpop.f32.mrf.mxu0
  %v2168 = vadd.f32 %v1999, %v2167
  %2169 = vmatmul.bf16.gmra.mxu0 %v1364
  %v2170 = vpop.f32.mrf.mxu0
  %v2171 = vadd.f32 %v2002, %v2170
  %v2172 = vpop.f32.mrf.mxu0
  %v2173 = vadd.f32 %v2004, %v2172
  %2174 = vmatmul.bf16.gmra.mxu0 %v1367
  %v2175 = vpop.f32.mrf.mxu0
  %v2176 = vadd.f32 %v2007, %v2175
  %v2177 = vpop.f32.mrf.mxu0
  %v2178 = vadd.f32 %v2009, %v2177
  %2179 = vmatmul.bf16.gmra.mxu0 %v1370
  %v2180 = vpop.f32.mrf.mxu0
  %v2181 = vadd.f32 %v2012, %v2180
  %v2182 = vpop.f32.mrf.mxu0
  %v2183 = vadd.f32 %v2014, %v2182
  %2184 = vmatmul.bf16.gmra.mxu0 %v1373
  %v2185 = vpop.f32.mrf.mxu0
  %v2186 = vadd.f32 %v2017, %v2185
  %v2187 = vpop.f32.mrf.mxu0
  %v2188 = vadd.f32 %v2019, %v2187
  %2189 = vmatmul.bf16.gmra.mxu0 %v1376
  %v2190 = vpop.f32.mrf.mxu0
  %v2191 = vadd.f32 %v2022, %v2190
  %v2192 = vpop.f32.mrf.mxu0
  %v2193 = vadd.f32 %v2024, %v2192
  %2194 = vmatmul.bf16.gmra.mxu0 %v1379
  %v2195 = vpop.f32.mrf.mxu0
  %v2196 = vadd.f32 %v2027, %v2195
  %v2197 = vpop.f32.mrf.mxu0
  %v2198 = vadd.f32 %v2029, %v2197
  %2199 = vmatmul.bf16.gmra.mxu0 %v1382
  %v2200 = vpop.f32.mrf.mxu0
  %v2201 = vadd.f32 %v2032, %v2200
  %v2202 = vpop.f32.mrf.mxu0
  %v2203 = vadd.f32 %v2034, %v2202
  %2204 = vmatmul.bf16.gmra.mxu0 %v1385
  %v2205 = vpop.f32.mrf.mxu0
  %v2206 = vadd.f32 %v2037, %v2205
  %v2207 = vpop.f32.mrf.mxu0
  %v2208 = vadd.f32 %v2039, %v2207
  %2209 = vmatmul.bf16.gmra.mxu0 %v1388
  %v2210 = vpop.f32.mrf.mxu0
  %v2211 = vadd.f32 %v2042, %v2210
  %v2212 = vpop.f32.mrf.mxu0
  %v2213 = vadd.f32 %v2044, %v2212
  %2214 = vmatmul.bf16.gmra.mxu0 %v1391
  %v2215 = vpop.f32.mrf.mxu0
  %v2216 = vadd.f32 %v2047, %v2215
  %v2217 = vpop.f32.mrf.mxu0
  %v2218 = vadd.f32 %v2049, %v2217
  %2219 = vmatmul.bf16.gmra.mxu0 %v1394
  %v2220 = vpop.f32.mrf.mxu0
  %v2221 = vadd.f32 %v2052, %v2220
  %v2222 = vpop.f32.mrf.mxu0
  %v2223 = vadd.f32 %v2054, %v2222
  %2224 = vmatmul.bf16.gmra.mxu0 %v1397
  %v2225 = vpop.f32.mrf.mxu0
  %v2226 = vadd.f32 %v2057, %v2225
  %v2227 = vpop.f32.mrf.mxu0
  %v2228 = vadd.f32 %v2059, %v2227
  %2229 = vmatmul.bf16.gmra.mxu0 %v1400
  %v2230 = vpop.f32.mrf.mxu0
  %v2231 = vadd.f32 %v2062, %v2230
  %v2232 = vpop.f32.mrf.mxu0
  %v2233 = vadd.f32 %v2064, %v2232
  %2234 = vmatmul.bf16.gmra.mxu0 %v1403
  %v2235 = vpop.f32.mrf.mxu0
  %v2236 = vadd.f32 %v2067, %v2235
  %v2237 = vpop.f32.mrf.mxu0
  %v2238 = vadd.f32 %v2069, %v2237
  %2239 = vmatmul.bf16.gmra.mxu0 %v1406
  %v2240 = vpop.f32.mrf.mxu0
  %v2241 = vadd.f32 %v2072, %v2240
  %v2242 = vpop.f32.mrf.mxu0
  %v2243 = vadd.f32 %v2074, %v2242
  %2244 = vmatmul.bf16.gmra.mxu0 %v1409
  %v2245 = vpop.f32.mrf.mxu0
  %v2246 = vadd.f32 %v2077, %v2245
  %v2247 = vpop.f32.mrf.mxu0
  %v2248 = vadd.f32 %v2079, %v2247
  %2249 = vmatmul.bf16.gmra.mxu0 %v1412
  %v2250 = vpop.f32.mrf.mxu0
  %v2251 = vadd.f32 %v2082, %v2250
  %v2252 = vpop.f32.mrf.mxu0
  %v2253 = vadd.f32 %v2084, %v2252
  %2254 = vmatmul.bf16.gmra.mxu0 %v1415
  %v2255 = vpop.f32.mrf.mxu0
  %v2256 = vadd.f32 %v2087, %v2255
  %v2257 = vpop.f32.mrf.mxu0
  %v2258 = vadd.f32 %v2089, %v2257
  %2259 = vmatmul.bf16.gmra.mxu0 %v1418
  %v2260 = vpop.f32.mrf.mxu0
  %v2261 = vadd.f32 %v2092, %v2260
  %v2262 = vpop.f32.mrf.mxu0
  %v2263 = vadd.f32 %v2094, %v2262
  %2264 = vdwg.mxu0
  %v2265 = vmax.f32 %v2106, 0.0
  %v2266 = vmax.f32 %v2108, 0.0
  %v2267 = vmax.f32 %v2111, 0.0
  %v2268 = vmax.f32 %v2113, 0.0
  %v2269 = vmax.f32 %v2116, 0.0
  %v2270 = vmax.f32 %v2118, 0.0
  %v2271 = vmax.f32 %v2121, 0.0
  %v2272 = vmax.f32 %v2123, 0.0
  %v2273 = vmax.f32 %v2126, 0.0
  %v2274 = vmax.f32 %v2128, 0.0
  %v2275 = vmax.f32 %v2131, 0.0
  %v2276 = vmax.f32 %v2133, 0.0
  %v2277 = vmax.f32 %v2136, 0.0
  %v2278 = vmax.f32 %v2138, 0.0
  %v2279 = vmax.f32 %v2141, 0.0
  %v2280 = vmax.f32 %v2143, 0.0
  %v2281 = vmax.f32 %v2146, 0.0
  %v2282 = vmax.f32 %v2148, 0.0
  %v2283 = vmax.f32 %v2151, 0.0
  %v2284 = vmax.f32 %v2153, 0.0
  %v2285 = vmax.f32 %v2156, 0.0
  %v2286 = vmax.f32 %v2158, 0.0
  %v2287 = vmax.f32 %v2161, 0.0
  %v2288 = vmax.f32 %v2163, 0.0
  %v2289 = vmax.f32 %v2166, 0.0
  %v2290 = vmax.f32 %v2168, 0.0
  %v2291 = vmax.f32 %v2171, 0.0
  %v2292 = vmax.f32 %v2173, 0.0
  %v2293 = vmax.f32 %v2176, 0.0
  %v2294 = vmax.f32 %v2178, 0.0
  %v2295 = vmax.f32 %v2181, 0.0
  %v2296 = vmax.f32 %v2183, 0.0
  %v2297 = vmax.f32 %v2186, 0.0
  %v2298 = vmax.f32 %v2188, 0.0
  %v2299 = vmax.f32 %v2191, 0.0
  %v2300 = vmax.f32 %v2193, 0.0
  %v2301 = vmax.f32 %v2196, 0.0
  %v2302 = vmax.f32 %v2198, 0.0
  %v2303 = vmax.f32 %v2201, 0.0
  %v2304 = vmax.f32 %v2203, 0.0
  %v2305 = vmax.f32 %v2206, 0.0
  %v2306 = vmax.f32 %v2208, 0.0
  %v2307 = vmax.f32 %v2211, 0.0
  %v2308 = vmax.f32 %v2213, 0.0
  %v2309 = vmax.f32 %v2216, 0.0
  %v2310 = vmax.f32 %v2218, 0.0
  %v2311 = vmax.f32 %v2221, 0.0
  %v2312 = vmax.f32 %v2223, 0.0
  %v2313 = vmax.f32 %v2226, 0.0
  %v2314 = vmax.f32 %v2228, 0.0
  %v2315 = vmax.f32 %v2231, 0.0
  %v2316 = vmax.f32 %v2233, 0.0
  %v2317 = vmax.f32 %v2236, 0.0
  %v2318 = vmax.f32 %v2238, 0.0
  %v2319 = vmax.f32 %v2241, 0.0
  %v2320 = vmax.f32 %v2243, 0.0
  %v2321 = vmax.f32 %v2246, 0.0
  %v2322 = vmax.f32 %v2248, 0.0
  %v2323 = vmax.f32 %v2251, 0.0
  %v2324 = vmax.f32 %v2253, 0.0
  %v2325 = vmax.f32 %v2256, 0.0
  %v2326 = vmax.f32 %v2258, 0.0
  %v2327 = vmax.f32 %v2261, 0.0
  %v2328 = vmax.f32 %v2263, 0.0
  %v2329 = vpack.c.bf16 %v2265, %v2265
  %v2330 = vpack.c.bf16 %v2266, %v2266
  %v2331 = vpack.c.bf16 %v2267, %v2267
  %v2332 = vpack.c.bf16 %v2268, %v2268
  %v2333 = vpack.c.bf16 %v2269, %v2269
  %v2334 = vpack.c.bf16 %v2270, %v2270
  %v2335 = vpack.c.bf16 %v2271, %v2271
  %v2336 = vpack.c.bf16 %v2272, %v2272
  %v2337 = vpack.c.bf16 %v2273, %v2273
  %v2338 = vpack.c.bf16 %v2274, %v2274
  %v2339 = vpack.c.bf16 %v2275, %v2275
  %v2340 = vpack.c.bf16 %v2276, %v2276
  %v2341 = vpack.c.bf16 %v2277, %v2277
  %v2342 = vpack.c.bf16 %v2278, %v2278
  %v2343 = vpack.c.bf16 %v2279, %v2279
  %v2344 = vpack.c.bf16 %v2280, %v2280
  %v2345 = vpack.c.bf16 %v2281, %v2281
  %v2346 = vpack.c.bf16 %v2282, %v2282
  %v2347 = vpack.c.bf16 %v2283, %v2283
  %v2348 = vpack.c.bf16 %v2284, %v2284
  %v2349 = vpack.c.bf16 %v2285, %v2285
  %v2350 = vpack.c.bf16 %v2286, %v2286
  %v2351 = vpack.c.bf16 %v2287, %v2287
  %v2352 = vpack.c.bf16 %v2288, %v2288
  %v2353 = vpack.c.bf16 %v2289, %v2289
  %v2354 = vpack.c.bf16 %v2290, %v2290
  %v2355 = vpack.c.bf16 %v2291, %v2291
  %v2356 = vpack.c.bf16 %v2292, %v2292
  %v2357 = vpack.c.bf16 %v2293, %v2293
  %v2358 = vpack.c.bf16 %v2294, %v2294
  %v2359 = vpack.c.bf16 %v2295, %v2295
  %v2360 = vpack.c.bf16 %v2296, %v2296
  %v2361 = vpack.c.bf16 %v2297, %v2297
  %v2362 = vpack.c.bf16 %v2298, %v2298
  %v2363 = vpack.c.bf16 %v2299, %v2299
  %v2364 = vpack.c.bf16 %v2300, %v2300
  %v2365 = vpack.c.bf16 %v2301, %v2301
  %v2366 = vpack.c.bf16 %v2302, %v2302
  %v2367 = vpack.c.bf16 %v2303, %v2303
  %v2368 = vpack.c.bf16 %v2304, %v2304
  %v2369 = vpack.c.bf16 %v2305, %v2305
  %v2370 = vpack.c.bf16 %v2306, %v2306
  %v2371 = vpack.c.bf16 %v2307, %v2307
  %v2372 = vpack.c.bf16 %v2308, %v2308
  %v2373 = vpack.c.bf16 %v2309, %v2309
  %v2374 = vpack.c.bf16 %v2310, %v2310
  %v2375 = vpack.c.bf16 %v2311, %v2311
  %v2376 = vpack.c.bf16 %v2312, %v2312
  %v2377 = vpack.c.bf16 %v2313, %v2313
  %v2378 = vpack.c.bf16 %v2314, %v2314
  %v2379 = vpack.c.bf16 %v2315, %v2315
  %v2380 = vpack.c.bf16 %v2316, %v2316
  %v2381 = vpack.c.bf16 %v2317, %v2317
  %v2382 = vpack.c.bf16 %v2318, %v2318
  %v2383 = vpack.c.bf16 %v2319, %v2319
  %v2384 = vpack.c.bf16 %v2320, %v2320
  %v2385 = vpack.c.bf16 %v2321, %v2321
  %v2386 = vpack.c.bf16 %v2322, %v2322
  %v2387 = vpack.c.bf16 %v2323, %v2323
  %v2388 = vpack.c.bf16 %v2324, %v2324
  %v2389 = vpack.c.bf16 %v2325, %v2325
  %v2390 = vpack.c.bf16 %v2326, %v2326
  %v2391 = vpack.c.bf16 %v2327, %v2327
  %v2392 = vpack.c.bf16 %v2328, %v2328
  %2393 = vst [vmem:[#allocation2] sm:$0xf] %v2329
  %2394 = vst [vmem:[#allocation2 + $0x4] sm:$0xf] %v2330
  %2395 = vst [vmem:[#allocation2 + $0x8] sm:$0xf] %v2331
  %2396 = vst [vmem:[#allocation2 + $0xc] sm:$0xf] %v2332
  %2397 = vst [vmem:[#allocation2 + $0x10] sm:$0xf] %v2333
  %2398 = vst [vmem:[#allocation2 + $0x14] sm:$0xf] %v2334
  %2399 = vst [vmem:[#allocation2 + $0x18] sm:$0xf] %v2335
  %2400 = vst [vmem:[#allocation2 + $0x1c] sm:$0xf] %v2336
  %2401 = vst [vmem:[#allocation2 + $0x20] sm:$0xf] %v2337
  %2402 = vst [vmem:[#allocation2 + $0x24] sm:$0xf] %v2338
  %2403 = vst [vmem:[#allocation2 + $0x28] sm:$0xf] %v2339
  %2404 = vst [vmem:[#allocation2 + $0x2c] sm:$0xf] %v2340
  %2405 = vst [vmem:[#allocation2 + $0x30] sm:$0xf] %v2341
  %2406 = vst [vmem:[#allocation2 + $0x34] sm:$0xf] %v2342
  %2407 = vst [vmem:[#allocation2 + $0x38] sm:$0xf] %v2343
  %2408 = vst [vmem:[#allocation2 + $0x3c] sm:$0xf] %v2344
  %2409 = vst [vmem:[#allocation2 + $0x40] sm:$0xf] %v2345
  %2410 = vst [vmem:[#allocation2 + $0x44] sm:$0xf] %v2346
  %2411 = vst [vmem:[#allocation2 + $0x48] sm:$0xf] %v2347
  %2412 = vst [vmem:[#allocation2 + $0x4c] sm:$0xf] %v2348
  %2413 = vst [vmem:[#allocation2 + $0x50] sm:$0xf] %v2349
  %2414 = vst [vmem:[#allocation2 + $0x54] sm:$0xf] %v2350
  %2415 = vst [vmem:[#allocation2 + $0x58] sm:$0xf] %v2351
  %2416 = vst [vmem:[#allocation2 + $0x5c] sm:$0xf] %v2352
  %2417 = vst [vmem:[#allocation2 + $0x60] sm:$0xf] %v2353
  %2418 = vst [vmem:[#allocation2 + $0x64] sm:$0xf] %v2354
  %2419 = vst [vmem:[#allocation2 + $0x68] sm:$0xf] %v2355
  %2420 = vst [vmem:[#allocation2 + $0x6c] sm:$0xf] %v2356
  %2421 = vst [vmem:[#allocation2 + $0x70] sm:$0xf] %v2357
  %2422 = vst [vmem:[#allocation2 + $0x74] sm:$0xf] %v2358
  %2423 = vst [vmem:[#allocation2 + $0x78] sm:$0xf] %v2359
  %2424 = vst [vmem:[#allocation2 + $0x7c] sm:$0xf] %v2360
  %2425 = vst [vmem:[#allocation2 + $0x80] sm:$0xf] %v2361
  %2426 = vst [vmem:[#allocation2 + $0x84] sm:$0xf] %v2362
  %2427 = vst [vmem:[#allocation2 + $0x88] sm:$0xf] %v2363
  %2428 = vst [vmem:[#allocation2 + $0x8c] sm:$0xf] %v2364
  %2429 = vst [vmem:[#allocation2 + $0x90] sm:$0xf] %v2365
  %2430 = vst [vmem:[#allocation2 + $0x94] sm:$0xf] %v2366
  %2431 = vst [vmem:[#allocation2 + $0x98] sm:$0xf] %v2367
  %2432 = vst [vmem:[#allocation2 + $0x9c] sm:$0xf] %v2368
  %2433 = vst [vmem:[#allocation2 + $0xa0] sm:$0xf] %v2369
  %2434 = vst [vmem:[#allocation2 + $0xa4] sm:$0xf] %v2370
  %2435 = vst [vmem:[#allocation2 + $0xa8] sm:$0xf] %v2371
  %2436 = vst [vmem:[#allocation2 + $0xac] sm:$0xf] %v2372
  %2437 = vst [vmem:[#allocation2 + $0xb0] sm:$0xf] %v2373
  %2438 = vst [vmem:[#allocation2 + $0xb4] sm:$0xf] %v2374
  %2439 = vst [vmem:[#allocation2 + $0xb8] sm:$0xf] %v2375
  %2440 = vst [vmem:[#allocation2 + $0xbc] sm:$0xf] %v2376
  %2441 = vst [vmem:[#allocation2 + $0xc0] sm:$0xf] %v2377
  %2442 = vst [vmem:[#allocation2 + $0xc4] sm:$0xf] %v2378
  %2443 = vst [vmem:[#allocation2 + $0xc8] sm:$0xf] %v2379
  %2444 = vst [vmem:[#allocation2 + $0xcc] sm:$0xf] %v2380
  %2445 = vst [vmem:[#allocation2 + $0xd0] sm:$0xf] %v2381
  %2446 = vst [vmem:[#allocation2 + $0xd4] sm:$0xf] %v2382
  %2447 = vst [vmem:[#allocation2 + $0xd8] sm:$0xf] %v2383
  %2448 = vst [vmem:[#allocation2 + $0xdc] sm:$0xf] %v2384
  %2449 = vst [vmem:[#allocation2 + $0xe0] sm:$0xf] %v2385
  %2450 = vst [vmem:[#allocation2 + $0xe4] sm:$0xf] %v2386
  %2451 = vst [vmem:[#allocation2 + $0xe8] sm:$0xf] %v2387
  %2452 = vst [vmem:[#allocation2 + $0xec] sm:$0xf] %v2388
  %2453 = vst [vmem:[#allocation2 + $0xf0] sm:$0xf] %v2389
  %2454 = vst [vmem:[#allocation2 + $0xf4] sm:$0xf] %v2390
  %2455 = vst [vmem:[#allocation2 + $0xf8] sm:$0xf] %v2391
  %2456 = vst [vmem:[#allocation2 + $0xfc] sm:$0xf] %v2392
  %v2457 = vld [vmem:[#allocation2] sm:$0xf]
  %v2458 = vld [vmem:[#allocation2 + $0x4] sm:$0xf]
  %v2459 = vld [vmem:[#allocation2 + $0x8] sm:$0xf]
  %v2460 = vld [vmem:[#allocation2 + $0xc] sm:$0xf]
  %v2461 = vld [vmem:[#allocation2 + $0x10] sm:$0xf]
  %v2462 = vld [vmem:[#allocation2 + $0x14] sm:$0xf]
  %v2463 = vld [vmem:[#allocation2 + $0x18] sm:$0xf]
  %v2464 = vld [vmem:[#allocation2 + $0x1c] sm:$0xf]
  %v2465 = vld [vmem:[#allocation2 + $0x20] sm:$0xf]
  %v2466 = vld [vmem:[#allocation2 + $0x24] sm:$0xf]
  %v2467 = vld [vmem:[#allocation2 + $0x28] sm:$0xf]
  %v2468 = vld [vmem:[#allocation2 + $0x2c] sm:$0xf]
  %v2469 = vld [vmem:[#allocation2 + $0x40] sm:$0xf]
  %v2470 = vld [vmem:[#allocation2 + $0x44] sm:$0xf]
  %v2471 = vld [vmem:[#allocation2 + $0x48] sm:$0xf]
  %v2472 = vld [vmem:[#allocation2 + $0x4c] sm:$0xf]
  %v2473 = vld [vmem:[#allocation2 + $0x50] sm:$0xf]
  %v2474 = vld [vmem:[#allocation2 + $0x54] sm:$0xf]
  %v2475 = vld [vmem:[#allocation2 + $0x58] sm:$0xf]
  %v2476 = vld [vmem:[#allocation2 + $0x5c] sm:$0xf]
  %v2477 = vld [vmem:[#allocation2 + $0x60] sm:$0xf]
  %v2478 = vld [vmem:[#allocation2 + $0x64] sm:$0xf]
  %v2479 = vld [vmem:[#allocation2 + $0x68] sm:$0xf]
  %v2480 = vld [vmem:[#allocation2 + $0x6c] sm:$0xf]
  %v2481 = vld [vmem:[#allocation2 + $0x80] sm:$0xf]
  %v2482 = vld [vmem:[#allocation2 + $0x84] sm:$0xf]
  %v2483 = vld [vmem:[#allocation2 + $0x88] sm:$0xf]
  %v2484 = vld [vmem:[#allocation2 + $0x8c] sm:$0xf]
  %v2485 = vld [vmem:[#allocation2 + $0x90] sm:$0xf]
  %v2486 = vld [vmem:[#allocation2 + $0x94] sm:$0xf]
  %v2487 = vld [vmem:[#allocation2 + $0x98] sm:$0xf]
  %v2488 = vld [vmem:[#allocation2 + $0x9c] sm:$0xf]
  %v2489 = vld [vmem:[#allocation2 + $0xa0] sm:$0xf]
  %v2490 = vld [vmem:[#allocation2 + $0xa4] sm:$0xf]
  %v2491 = vld [vmem:[#allocation2 + $0xa8] sm:$0xf]
  %v2492 = vld [vmem:[#allocation2 + $0xac] sm:$0xf]
  %v2493 = vld [vmem:[%s3] sm:$0xf]
  %v2494 = vld [vmem:[%s3 + $0x4] sm:$0xf]
  %v2495 = vld [vmem:[%s3 + $0x8] sm:$0xf]
  %v2496 = vld [vmem:[%s3 + $0xc] sm:$0xf]
  %v2497 = vld [vmem:[%s3 + $0x10] sm:$0xf]
  %v2498 = vld [vmem:[%s3 + $0x14] sm:$0xf]
  %v2499 = vld [vmem:[%s3 + $0x18] sm:$0xf]
  %v2500 = vld [vmem:[%s3 + $0x1c] sm:$0xf]
  %v2501 = vld [vmem:[%s3 + $0x20] sm:$0xf]
  %v2502 = vld [vmem:[%s3 + $0x24] sm:$0xf]
  %v2503 = vld [vmem:[%s3 + $0x28] sm:$0xf]
  %v2504 = vld [vmem:[%s3 + $0x2c] sm:$0xf]
  %v2505 = vld [vmem:[%s3 + $0x30] sm:$0xf]
  %v2506 = vld [vmem:[%s3 + $0x34] sm:$0xf]
  %v2507 = vld [vmem:[%s3 + $0x38] sm:$0xf]
  %v2508 = vld [vmem:[%s3 + $0x3c] sm:$0xf]
  %s2509 = scalar_lea.vmem [#allocation2], 16
  %v2510 = vld [vmem:[%s2509] sm:$0xf]
  %v2511 = vld [vmem:[%s2509 + $0x4] sm:$0xf]
  %v2512 = vld [vmem:[%s2509 + $0x8] sm:$0xf]
  %v2513 = vld [vmem:[%s2509 + $0xc] sm:$0xf]
  %v2514 = vld [vmem:[%s2509 + $0x10] sm:$0xf]
  %v2515 = vld [vmem:[%s2509 + $0x14] sm:$0xf]
  %v2516 = vld [vmem:[%s2509 + $0x18] sm:$0xf]
  %v2517 = vld [vmem:[%s2509 + $0x1c] sm:$0xf]
  %v2518 = vld [vmem:[%s2509 + $0x20] sm:$0xf]
  %v2519 = vld [vmem:[%s2509 + $0x24] sm:$0xf]
  %v2520 = vld [vmem:[%s2509 + $0x28] sm:$0xf]
  %v2521 = vld [vmem:[%s2509 + $0x2c] sm:$0xf]
  %v2522 = vld [vmem:[%s2509 + $0x40] sm:$0xf]
  %v2523 = vld [vmem:[%s2509 + $0x44] sm:$0xf]
  %v2524 = vld [vmem:[%s2509 + $0x48] sm:$0xf]
  %v2525 = vld [vmem:[%s2509 + $0x4c] sm:$0xf]
  %v2526 = vld [vmem:[%s2509 + $0x50] sm:$0xf]
  %v2527 = vld [vmem:[%s2509 + $0x54] sm:$0xf]
  %v2528 = vld [vmem:[%s2509 + $0x58] sm:$0xf]
  %v2529 = vld [vmem:[%s2509 + $0x5c] sm:$0xf]
  %v2530 = vld [vmem:[%s2509 + $0x60] sm:$0xf]
  %v2531 = vld [vmem:[%s2509 + $0x64] sm:$0xf]
  %v2532 = vld [vmem:[%s2509 + $0x68] sm:$0xf]
  %v2533 = vld [vmem:[%s2509 + $0x6c] sm:$0xf]
  %v2534 = vld [vmem:[%s2509 + $0x80] sm:$0xf]
  %v2535 = vld [vmem:[%s2509 + $0x84] sm:$0xf]
  %v2536 = vld [vmem:[%s2509 + $0x88] sm:$0xf]
  %v2537 = vld [vmem:[%s2509 + $0x8c] sm:$0xf]
  %v2538 = vld [vmem:[%s2509 + $0x90] sm:$0xf]
  %v2539 = vld [vmem:[%s2509 + $0x94] sm:$0xf]
  %v2540 = vld [vmem:[%s2509 + $0x98] sm:$0xf]
  %v2541 = vld [vmem:[%s2509 + $0x9c] sm:$0xf]
  %v2542 = vld [vmem:[%s2509 + $0xa0] sm:$0xf]
  %v2543 = vld [vmem:[%s2509 + $0xa4] sm:$0xf]
  %v2544 = vld [vmem:[%s2509 + $0xa8] sm:$0xf]
  %v2545 = vld [vmem:[%s2509 + $0xac] sm:$0xf]
  %s2546 = scalar_lea.vmem %s3, 64
  %v2547 = vld [vmem:[%s2546] sm:$0xf]
  %v2548 = vld [vmem:[%s2546 + $0x4] sm:$0xf]
  %v2549 = vld [vmem:[%s2546 + $0x8] sm:$0xf]
  %v2550 = vld [vmem:[%s2546 + $0xc] sm:$0xf]
  %v2551 = vld [vmem:[%s2546 + $0x10] sm:$0xf]
  %v2552 = vld [vmem:[%s2546 + $0x14] sm:$0xf]
  %v2553 = vld [vmem:[%s2546 + $0x18] sm:$0xf]
  %v2554 = vld [vmem:[%s2546 + $0x1c] sm:$0xf]
  %v2555 = vld [vmem:[%s2546 + $0x20] sm:$0xf]
  %v2556 = vld [vmem:[%s2546 + $0x24] sm:$0xf]
  %v2557 = vld [vmem:[%s2546 + $0x28] sm:$0xf]
  %v2558 = vld [vmem:[%s2546 + $0x2c] sm:$0xf]
  %v2559 = vld [vmem:[%s2546 + $0x30] sm:$0xf]
  %v2560 = vld [vmem:[%s2546 + $0x34] sm:$0xf]
  %v2561 = vld [vmem:[%s2546 + $0x38] sm:$0xf]
  %v2562 = vld [vmem:[%s2546 + $0x3c] sm:$0xf]
  %v2599 = vunpack.c.l.b16 %v2510
  %v2600 = vunpack.c.l.b16 %v2511
  %v2601 = vunpack.c.l.b16 %v2512
  %v2602 = vunpack.c.l.b16 %v2513
  %v2603 = vunpack.c.l.b16 %v2514
  %v2604 = vunpack.c.l.b16 %v2515
  %v2605 = vunpack.c.l.b16 %v2516
  %v2606 = vunpack.c.l.b16 %v2517
  %v2607 = vunpack.c.l.b16 %v2518
  %v2608 = vunpack.c.l.b16 %v2519
  %v2609 = vunpack.c.l.b16 %v2520
  %v2610 = vunpack.c.l.b16 %v2521
  %v2611 = vunpack.c.l.b16 %v2522
  %v2612 = vunpack.c.l.b16 %v2523
  %v2613 = vunpack.c.l.b16 %v2524
  %v2614 = vunpack.c.l.b16 %v2525
  %v2615 = vunpack.c.l.b16 %v2526
  %v2616 = vunpack.c.l.b16 %v2527
  %v2617 = vunpack.c.l.b16 %v2528
  %v2618 = vunpack.c.l.b16 %v2529
  %v2619 = vunpack.c.l.b16 %v2530
  %v2620 = vunpack.c.l.b16 %v2531
  %v2621 = vunpack.c.l.b16 %v2532
  %v2622 = vunpack.c.l.b16 %v2533
  %v2623 = vunpack.c.l.b16 %v2534
  %v2624 = vunpack.c.l.b16 %v2535
  %v2625 = vunpack.c.l.b16 %v2536
  %v2626 = vunpack.c.l.b16 %v2537
  %v2627 = vunpack.c.l.b16 %v2538
  %v2628 = vunpack.c.l.b16 %v2539
  %v2629 = vunpack.c.l.b16 %v2540
  %v2630 = vunpack.c.l.b16 %v2541
  %v2631 = vunpack.c.l.b16 %v2542
  %v2632 = vunpack.c.l.b16 %v2543
  %v2633 = vunpack.c.l.b16 %v2544
  %v2634 = vunpack.c.l.b16 %v2545
  %v2635 = vpack.c.b16 %v2600, %v2599
  %v2636 = vpack.c.b16 %v2602, %v2601
  %v2637 = vpack.c.b16 %v2604, %v2603
  %v2638 = vpack.c.b16 %v2606, %v2605
  %v2639 = vpack.c.b16 %v2608, %v2607
  %v2640 = vpack.c.b16 %v2610, %v2609
  %v2641 = vpack.c.b16 %v2612, %v2611
  %v2642 = vpack.c.b16 %v2614, %v2613
  %v2643 = vpack.c.b16 %v2616, %v2615
  %v2644 = vpack.c.b16 %v2618, %v2617
  %v2645 = vpack.c.b16 %v2620, %v2619
  %v2646 = vpack.c.b16 %v2622, %v2621
  %v2647 = vpack.c.b16 %v2624, %v2623
  %v2648 = vpack.c.b16 %v2626, %v2625
  %v2649 = vpack.c.b16 %v2628, %v2627
  %v2650 = vpack.c.b16 %v2630, %v2629
  %v2651 = vpack.c.b16 %v2632, %v2631
  %v2652 = vpack.c.b16 %v2634, %v2633
  %v2687 = vunpack.c.l.b16 %v2547
  %v2688 = vunpack.c.l.b16 %v2548
  %v2689 = vunpack.c.l.b16 %v2549
  %v2690 = vunpack.c.l.b16 %v2550
  %v2691 = vunpack.c.l.b16 %v2551
  %v2692 = vunpack.c.l.b16 %v2552
  %v2693 = vunpack.c.l.b16 %v2553
  %v2694 = vunpack.c.l.b16 %v2554
  %v2695 = vunpack.c.l.b16 %v2555
  %v2696 = vunpack.c.l.b16 %v2556
  %v2697 = vunpack.c.l.b16 %v2557
  %v2698 = vunpack.c.l.b16 %v2558
  %v2699 = vunpack.c.l.b16 %v2559
  %v2700 = vunpack.c.l.b16 %v2560
  %v2701 = vunpack.c.l.b16 %v2561
  %v2702 = vunpack.c.l.b16 %v2562
  %v2703 = vpack.c.b16 %v2688, %v2687
  %v2704 = vpack.c.b16 %v2690, %v2689
  %v2705 = vpack.c.b16 %v2692, %v2691
  %v2706 = vpack.c.b16 %v2694, %v2693
  %v2707 = vpack.c.b16 %v2696, %v2695
  %v2708 = vpack.c.b16 %v2698, %v2697
  %v2709 = vpack.c.b16 %v2700, %v2699
  %v2710 = vpack.c.b16 %v2702, %v2701
  %2719 = vmatpush.bf16.msra.mxu0 %v2710
  %2720 = vmatpush.bf16.msra.mxu0 %v2709
  %2721 = vmatpush.bf16.msra.mxu0 %v2708
  %2722 = vmatpush.bf16.msra.mxu0 %v2707
  %2723 = vmatpush.bf16.msra.mxu0 %v2706
  %2724 = vmatpush.bf16.msra.mxu0 %v2705
  %2725 = vmatpush.bf16.msra.mxu0 %v2704
  %2726 = vmatpush.bf16.msra.mxu0 %v2703
  %2727 = vmatmul.bf16.gmra.mxu0 %v2635
  %v2728 = vpop.f32.mrf.mxu0
  %v2729 = vadd.f32 0.0, %v2728
  %v2730 = vpop.f32.mrf.mxu0
  %v2731 = vadd.f32 0.0, %v2730
  %2732 = vmatmul.bf16.gmra.mxu0 %v2636
  %v2733 = vpop.f32.mrf.mxu0
  %v2734 = vadd.f32 0.0, %v2733
  %v2735 = vpop.f32.mrf.mxu0
  %v2736 = vadd.f32 0.0, %v2735
  %2737 = vmatmul.bf16.gmra.mxu0 %v2637
  %v2738 = vpop.f32.mrf.mxu0
  %v2739 = vadd.f32 0.0, %v2738
  %v2740 = vpop.f32.mrf.mxu0
  %v2741 = vadd.f32 0.0, %v2740
  %2742 = vmatmul.bf16.gmra.mxu0 %v2638
  %v2743 = vpop.f32.mrf.mxu0
  %v2744 = vadd.f32 0.0, %v2743
  %v2745 = vpop.f32.mrf.mxu0
  %v2746 = vadd.f32 0.0, %v2745
  %2747 = vmatmul.bf16.gmra.mxu0 %v2639
  %v2748 = vpop.f32.mrf.mxu0
  %v2749 = vadd.f32 0.0, %v2748
  %v2750 = vpop.f32.mrf.mxu0
  %v2751 = vadd.f32 0.0, %v2750
  %2752 = vmatmul.bf16.gmra.mxu0 %v2640
  %v2753 = vpop.f32.mrf.mxu0
  %v2754 = vadd.f32 0.0, %v2753
  %v2755 = vpop.f32.mrf.mxu0
  %v2756 = vadd.f32 0.0, %v2755
  %2757 = vmatmul.bf16.gmra.mxu0 %v2641
  %v2758 = vpop.f32.mrf.mxu0
  %v2759 = vadd.f32 0.0, %v2758
  %v2760 = vpop.f32.mrf.mxu0
  %v2761 = vadd.f32 0.0, %v2760
  %2762 = vmatmul.bf16.gmra.mxu0 %v2642
  %v2763 = vpop.f32.mrf.mxu0
  %v2764 = vadd.f32 0.0, %v2763
  %v2765 = vpop.f32.mrf.mxu0
  %v2766 = vadd.f32 0.0, %v2765
  %2767 = vmatmul.bf16.gmra.mxu0 %v2643
  %v2768 = vpop.f32.mrf.mxu0
  %v2769 = vadd.f32 0.0, %v2768
  %v2770 = vpop.f32.mrf.mxu0
  %v2771 = vadd.f32 0.0, %v2770
  %2772 = vmatmul.bf16.gmra.mxu0 %v2644
  %v2773 = vpop.f32.mrf.mxu0
  %v2774 = vadd.f32 0.0, %v2773
  %v2775 = vpop.f32.mrf.mxu0
  %v2776 = vadd.f32 0.0, %v2775
  %2777 = vmatmul.bf16.gmra.mxu0 %v2645
  %v2778 = vpop.f32.mrf.mxu0
  %v2779 = vadd.f32 0.0, %v2778
  %v2780 = vpop.f32.mrf.mxu0
  %v2781 = vadd.f32 0.0, %v2780
  %2782 = vmatmul.bf16.gmra.mxu0 %v2646
  %v2783 = vpop.f32.mrf.mxu0
  %v2784 = vadd.f32 0.0, %v2783
  %v2785 = vpop.f32.mrf.mxu0
  %v2786 = vadd.f32 0.0, %v2785
  %2787 = vmatmul.bf16.gmra.mxu0 %v2647
  %v2788 = vpop.f32.mrf.mxu0
  %v2789 = vadd.f32 0.0, %v2788
  %v2790 = vpop.f32.mrf.mxu0
  %v2791 = vadd.f32 0.0, %v2790
  %2792 = vmatmul.bf16.gmra.mxu0 %v2648
  %v2793 = vpop.f32.mrf.mxu0
  %v2794 = vadd.f32 0.0, %v2793
  %v2795 = vpop.f32.mrf.mxu0
  %v2796 = vadd.f32 0.0, %v2795
  %2797 = vmatmul.bf16.gmra.mxu0 %v2649
  %v2798 = vpop.f32.mrf.mxu0
  %v2799 = vadd.f32 0.0, %v2798
  %v2800 = vpop.f32.mrf.mxu0
  %v2801 = vadd.f32 0.0, %v2800
  %2802 = vmatmul.bf16.gmra.mxu0 %v2650
  %v2803 = vpop.f32.mrf.mxu0
  %v2804 = vadd.f32 0.0, %v2803
  %v2805 = vpop.f32.mrf.mxu0
  %v2806 = vadd.f32 0.0, %v2805
  %2807 = vmatmul.bf16.gmra.mxu0 %v2651
  %v2808 = vpop.f32.mrf.mxu0
  %v2809 = vadd.f32 0.0, %v2808
  %v2810 = vpop.f32.mrf.mxu0
  %v2811 = vadd.f32 0.0, %v2810
  %2812 = vmatmul.bf16.gmra.mxu0 %v2652
  %v2813 = vpop.f32.mrf.mxu0
  %v2814 = vadd.f32 0.0, %v2813
  %v2815 = vpop.f32.mrf.mxu0
  %v2816 = vadd.f32 0.0, %v2815
  %2817 = vdwg.mxu0
  %v2854 = vunpack.c.l.b16 %v2457
  %v2855 = vunpack.c.l.b16 %v2458
  %v2856 = vunpack.c.l.b16 %v2459
  %v2857 = vunpack.c.l.b16 %v2460
  %v2858 = vunpack.c.l.b16 %v2461
  %v2859 = vunpack.c.l.b16 %v2462
  %v2860 = vunpack.c.l.b16 %v2463
  %v2861 = vunpack.c.l.b16 %v2464
  %v2862 = vunpack.c.l.b16 %v2465
  %v2863 = vunpack.c.l.b16 %v2466
  %v2864 = vunpack.c.l.b16 %v2467
  %v2865 = vunpack.c.l.b16 %v2468
  %v2866 = vunpack.c.l.b16 %v2469
  %v2867 = vunpack.c.l.b16 %v2470
  %v2868 = vunpack.c.l.b16 %v2471
  %v2869 = vunpack.c.l.b16 %v2472
  %v2870 = vunpack.c.l.b16 %v2473
  %v2871 = vunpack.c.l.b16 %v2474
  %v2872 = vunpack.c.l.b16 %v2475
  %v2873 = vunpack.c.l.b16 %v2476
  %v2874 = vunpack.c.l.b16 %v2477
  %v2875 = vunpack.c.l.b16 %v2478
  %v2876 = vunpack.c.l.b16 %v2479
  %v2877 = vunpack.c.l.b16 %v2480
  %v2878 = vunpack.c.l.b16 %v2481
  %v2879 = vunpack.c.l.b16 %v2482
  %v2880 = vunpack.c.l.b16 %v2483
  %v2881 = vunpack.c.l.b16 %v2484
  %v2882 = vunpack.c.l.b16 %v2485
  %v2883 = vunpack.c.l.b16 %v2486
  %v2884 = vunpack.c.l.b16 %v2487
  %v2885 = vunpack.c.l.b16 %v2488
  %v2886 = vunpack.c.l.b16 %v2489
  %v2887 = vunpack.c.l.b16 %v2490
  %v2888 = vunpack.c.l.b16 %v2491
  %v2889 = vunpack.c.l.b16 %v2492
  %v2890 = vpack.c.b16 %v2855, %v2854
  %v2891 = vpack.c.b16 %v2857, %v2856
  %v2892 = vpack.c.b16 %v2859, %v2858
  %v2893 = vpack.c.b16 %v2861, %v2860
  %v2894 = vpack.c.b16 %v2863, %v2862
  %v2895 = vpack.c.b16 %v2865, %v2864
  %v2896 = vpack.c.b16 %v2867, %v2866
  %v2897 = vpack.c.b16 %v2869, %v2868
  %v2898 = vpack.c.b16 %v2871, %v2870
  %v2899 = vpack.c.b16 %v2873, %v2872
  %v2900 = vpack.c.b16 %v2875, %v2874
  %v2901 = vpack.c.b16 %v2877, %v2876
  %v2902 = vpack.c.b16 %v2879, %v2878
  %v2903 = vpack.c.b16 %v2881, %v2880
  %v2904 = vpack.c.b16 %v2883, %v2882
  %v2905 = vpack.c.b16 %v2885, %v2884
  %v2906 = vpack.c.b16 %v2887, %v2886
  %v2907 = vpack.c.b16 %v2889, %v2888
  %v2942 = vunpack.c.l.b16 %v2493
  %v2943 = vunpack.c.l.b16 %v2494
  %v2944 = vunpack.c.l.b16 %v2495
  %v2945 = vunpack.c.l.b16 %v2496
  %v2946 = vunpack.c.l.b16 %v2497
  %v2947 = vunpack.c.l.b16 %v2498
  %v2948 = vunpack.c.l.b16 %v2499
  %v2949 = vunpack.c.l.b16 %v2500
  %v2950 = vunpack.c.l.b16 %v2501
  %v2951 = vunpack.c.l.b16 %v2502
  %v2952 = vunpack.c.l.b16 %v2503
  %v2953 = vunpack.c.l.b16 %v2504
  %v2954 = vunpack.c.l.b16 %v2505
  %v2955 = vunpack.c.l.b16 %v2506
  %v2956 = vunpack.c.l.b16 %v2507
  %v2957 = vunpack.c.l.b16 %v2508
  %v2958 = vpack.c.b16 %v2943, %v2942
  %v2959 = vpack.c.b16 %v2945, %v2944
  %v2960 = vpack.c.b16 %v2947, %v2946
  %v2961 = vpack.c.b16 %v2949, %v2948
  %v2962 = vpack.c.b16 %v2951, %v2950
  %v2963 = vpack.c.b16 %v2953, %v2952
  %v2964 = vpack.c.b16 %v2955, %v2954
  %v2965 = vpack.c.b16 %v2957, %v2956
  %2974 = vmatpush.bf16.msra.mxu0 %v2965
  %2975 = vmatpush.bf16.msra.mxu0 %v2964
  %2976 = vmatpush.bf16.msra.mxu0 %v2963
  %2977 = vmatpush.bf16.msra.mxu0 %v2962
  %2978 = vmatpush.bf16.msra.mxu0 %v2961
  %2979 = vmatpush.bf16.msra.mxu0 %v2960
  %2980 = vmatpush.bf16.msra.mxu0 %v2959
  %2981 = vmatpush.bf16.msra.mxu0 %v2958
  %2982 = vmatmul.bf16.gmra.mxu0 %v2890
  %v2983 = vpop.f32.mrf.mxu0
  %v2984 = vadd.f32 %v2729, %v2983
  %v2985 = vpop.f32.mrf.mxu0
  %v2986 = vadd.f32 %v2731, %v2985
  %2987 = vmatmul.bf16.gmra.mxu0 %v2891
  %v2988 = vpop.f32.mrf.mxu0
  %v2989 = vadd.f32 %v2734, %v2988
  %v2990 = vpop.f32.mrf.mxu0
  %v2991 = vadd.f32 %v2736, %v2990
  %2992 = vmatmul.bf16.gmra.mxu0 %v2892
  %v2993 = vpop.f32.mrf.mxu0
  %v2994 = vadd.f32 %v2739, %v2993
  %v2995 = vpop.f32.mrf.mxu0
  %v2996 = vadd.f32 %v2741, %v2995
  %2997 = vmatmul.bf16.gmra.mxu0 %v2893
  %v2998 = vpop.f32.mrf.mxu0
  %v2999 = vadd.f32 %v2744, %v2998
  %v3000 = vpop.f32.mrf.mxu0
  %v3001 = vadd.f32 %v2746, %v3000
  %3002 = vmatmul.bf16.gmra.mxu0 %v2894
  %v3003 = vpop.f32.mrf.mxu0
  %v3004 = vadd.f32 %v2749, %v3003
  %v3005 = vpop.f32.mrf.mxu0
  %v3006 = vadd.f32 %v2751, %v3005
  %3007 = vmatmul.bf16.gmra.mxu0 %v2895
  %v3008 = vpop.f32.mrf.mxu0
  %v3009 = vadd.f32 %v2754, %v3008
  %v3010 = vpop.f32.mrf.mxu0
  %v3011 = vadd.f32 %v2756, %v3010
  %3012 = vmatmul.bf16.gmra.mxu0 %v2896
  %v3013 = vpop.f32.mrf.mxu0
  %v3014 = vadd.f32 %v2759, %v3013
  %v3015 = vpop.f32.mrf.mxu0
  %v3016 = vadd.f32 %v2761, %v3015
  %3017 = vmatmul.bf16.gmra.mxu0 %v2897
  %v3018 = vpop.f32.mrf.mxu0
  %v3019 = vadd.f32 %v2764, %v3018
  %v3020 = vpop.f32.mrf.mxu0
  %v3021 = vadd.f32 %v2766, %v3020
  %3022 = vmatmul.bf16.gmra.mxu0 %v2898
  %v3023 = vpop.f32.mrf.mxu0
  %v3024 = vadd.f32 %v2769, %v3023
  %v3025 = vpop.f32.mrf.mxu0
  %v3026 = vadd.f32 %v2771, %v3025
  %3027 = vmatmul.bf16.gmra.mxu0 %v2899
  %v3028 = vpop.f32.mrf.mxu0
  %v3029 = vadd.f32 %v2774, %v3028
  %v3030 = vpop.f32.mrf.mxu0
  %v3031 = vadd.f32 %v2776, %v3030
  %3032 = vmatmul.bf16.gmra.mxu0 %v2900
  %v3033 = vpop.f32.mrf.mxu0
  %v3034 = vadd.f32 %v2779, %v3033
  %v3035 = vpop.f32.mrf.mxu0
  %v3036 = vadd.f32 %v2781, %v3035
  %3037 = vmatmul.bf16.gmra.mxu0 %v2901
  %v3038 = vpop.f32.mrf.mxu0
  %v3039 = vadd.f32 %v2784, %v3038
  %v3040 = vpop.f32.mrf.mxu0
  %v3041 = vadd.f32 %v2786, %v3040
  %3042 = vmatmul.bf16.gmra.mxu0 %v2902
  %v3043 = vpop.f32.mrf.mxu0
  %v3044 = vadd.f32 %v2789, %v3043
  %v3045 = vpop.f32.mrf.mxu0
  %v3046 = vadd.f32 %v2791, %v3045
  %3047 = vmatmul.bf16.gmra.mxu0 %v2903
  %v3048 = vpop.f32.mrf.mxu0
  %v3049 = vadd.f32 %v2794, %v3048
  %v3050 = vpop.f32.mrf.mxu0
  %v3051 = vadd.f32 %v2796, %v3050
  %3052 = vmatmul.bf16.gmra.mxu0 %v2904
  %v3053 = vpop.f32.mrf.mxu0
  %v3054 = vadd.f32 %v2799, %v3053
  %v3055 = vpop.f32.mrf.mxu0
  %v3056 = vadd.f32 %v2801, %v3055
  %3057 = vmatmul.bf16.gmra.mxu0 %v2905
  %v3058 = vpop.f32.mrf.mxu0
  %v3059 = vadd.f32 %v2804, %v3058
  %v3060 = vpop.f32.mrf.mxu0
  %v3061 = vadd.f32 %v2806, %v3060
  %3062 = vmatmul.bf16.gmra.mxu0 %v2906
  %v3063 = vpop.f32.mrf.mxu0
  %v3064 = vadd.f32 %v2809, %v3063
  %v3065 = vpop.f32.mrf.mxu0
  %v3066 = vadd.f32 %v2811, %v3065
  %3067 = vmatmul.bf16.gmra.mxu0 %v2907
  %v3068 = vpop.f32.mrf.mxu0
  %v3069 = vadd.f32 %v2814, %v3068
  %v3070 = vpop.f32.mrf.mxu0
  %v3071 = vadd.f32 %v2816, %v3070
  %3072 = vdwg.mxu0
  %s3073 = scalar_lea.vmem [#allocation2], 64
  %v3074 = vld [vmem:[%s3073] sm:$0xf]
  %v3075 = vld [vmem:[%s3073 + $0x4] sm:$0xf]
  %v3076 = vld [vmem:[%s3073 + $0x8] sm:$0xf]
  %v3077 = vld [vmem:[%s3073 + $0xc] sm:$0xf]
  %v3078 = vld [vmem:[%s3073 + $0x10] sm:$0xf]
  %v3079 = vld [vmem:[%s3073 + $0x14] sm:$0xf]
  %v3080 = vld [vmem:[%s3073 + $0x18] sm:$0xf]
  %v3081 = vld [vmem:[%s3073 + $0x1c] sm:$0xf]
  %v3082 = vld [vmem:[%s3073 + $0x20] sm:$0xf]
  %v3083 = vld [vmem:[%s3073 + $0x24] sm:$0xf]
  %v3084 = vld [vmem:[%s3073 + $0x28] sm:$0xf]
  %v3085 = vld [vmem:[%s3073 + $0x2c] sm:$0xf]
  %v3086 = vld [vmem:[%s3073 + $0x40] sm:$0xf]
  %v3087 = vld [vmem:[%s3073 + $0x44] sm:$0xf]
  %v3088 = vld [vmem:[%s3073 + $0x48] sm:$0xf]
  %v3089 = vld [vmem:[%s3073 + $0x4c] sm:$0xf]
  %v3090 = vld [vmem:[%s3073 + $0x50] sm:$0xf]
  %v3091 = vld [vmem:[%s3073 + $0x54] sm:$0xf]
  %v3092 = vld [vmem:[%s3073 + $0x58] sm:$0xf]
  %v3093 = vld [vmem:[%s3073 + $0x5c] sm:$0xf]
  %v3094 = vld [vmem:[%s3073 + $0x60] sm:$0xf]
  %v3095 = vld [vmem:[%s3073 + $0x64] sm:$0xf]
  %v3096 = vld [vmem:[%s3073 + $0x68] sm:$0xf]
  %v3097 = vld [vmem:[%s3073 + $0x6c] sm:$0xf]
  %v3098 = vld [vmem:[%s3073 + $0x80] sm:$0xf]
  %v3099 = vld [vmem:[%s3073 + $0x84] sm:$0xf]
  %v3100 = vld [vmem:[%s3073 + $0x88] sm:$0xf]
  %v3101 = vld [vmem:[%s3073 + $0x8c] sm:$0xf]
  %v3102 = vld [vmem:[%s3073 + $0x90] sm:$0xf]
  %v3103 = vld [vmem:[%s3073 + $0x94] sm:$0xf]
  %v3104 = vld [vmem:[%s3073 + $0x98] sm:$0xf]
  %v3105 = vld [vmem:[%s3073 + $0x9c] sm:$0xf]
  %v3106 = vld [vmem:[%s3073 + $0xa0] sm:$0xf]
  %v3107 = vld [vmem:[%s3073 + $0xa4] sm:$0xf]
  %v3108 = vld [vmem:[%s3073 + $0xa8] sm:$0xf]
  %v3109 = vld [vmem:[%s3073 + $0xac] sm:$0xf]
  %s3110 = scalar_lea.vmem %s3, 128
  %v3111 = vld [vmem:[%s3110] sm:$0xf]
  %v3112 = vld [vmem:[%s3110 + $0x4] sm:$0xf]
  %v3113 = vld [vmem:[%s3110 + $0x8] sm:$0xf]
  %v3114 = vld [vmem:[%s3110 + $0xc] sm:$0xf]
  %v3115 = vld [vmem:[%s3110 + $0x10] sm:$0xf]
  %v3116 = vld [vmem:[%s3110 + $0x14] sm:$0xf]
  %v3117 = vld [vmem:[%s3110 + $0x18] sm:$0xf]
  %v3118 = vld [vmem:[%s3110 + $0x1c] sm:$0xf]
  %v3119 = vld [vmem:[%s3110 + $0x20] sm:$0xf]
  %v3120 = vld [vmem:[%s3110 + $0x24] sm:$0xf]
  %v3121 = vld [vmem:[%s3110 + $0x28] sm:$0xf]
  %v3122 = vld [vmem:[%s3110 + $0x2c] sm:$0xf]
  %v3123 = vld [vmem:[%s3110 + $0x30] sm:$0xf]
  %v3124 = vld [vmem:[%s3110 + $0x34] sm:$0xf]
  %v3125 = vld [vmem:[%s3110 + $0x38] sm:$0xf]
  %v3126 = vld [vmem:[%s3110 + $0x3c] sm:$0xf]
  %v3163 = vunpack.c.l.b16 %v3074
  %v3164 = vunpack.c.l.b16 %v3075
  %v3165 = vunpack.c.l.b16 %v3076
  %v3166 = vunpack.c.l.b16 %v3077
  %v3167 = vunpack.c.l.b16 %v3078
  %v3168 = vunpack.c.l.b16 %v3079
  %v3169 = vunpack.c.l.b16 %v3080
  %v3170 = vunpack.c.l.b16 %v3081
  %v3171 = vunpack.c.l.b16 %v3082
  %v3172 = vunpack.c.l.b16 %v3083
  %v3173 = vunpack.c.l.b16 %v3084
  %v3174 = vunpack.c.l.b16 %v3085
  %v3175 = vunpack.c.l.b16 %v3086
  %v3176 = vunpack.c.l.b16 %v3087
  %v3177 = vunpack.c.l.b16 %v3088
  %v3178 = vunpack.c.l.b16 %v3089
  %v3179 = vunpack.c.l.b16 %v3090
  %v3180 = vunpack.c.l.b16 %v3091
  %v3181 = vunpack.c.l.b16 %v3092
  %v3182 = vunpack.c.l.b16 %v3093
  %v3183 = vunpack.c.l.b16 %v3094
  %v3184 = vunpack.c.l.b16 %v3095
  %v3185 = vunpack.c.l.b16 %v3096
  %v3186 = vunpack.c.l.b16 %v3097
  %v3187 = vunpack.c.l.b16 %v3098
  %v3188 = vunpack.c.l.b16 %v3099
  %v3189 = vunpack.c.l.b16 %v3100
  %v3190 = vunpack.c.l.b16 %v3101
  %v3191 = vunpack.c.l.b16 %v3102
  %v3192 = vunpack.c.l.b16 %v3103
  %v3193 = vunpack.c.l.b16 %v3104
  %v3194 = vunpack.c.l.b16 %v3105
  %v3195 = vunpack.c.l.b16 %v3106
  %v3196 = vunpack.c.l.b16 %v3107
  %v3197 = vunpack.c.l.b16 %v3108
  %v3198 = vunpack.c.l.b16 %v3109
  %v3199 = vpack.c.b16 %v3164, %v3163
  %v3200 = vpack.c.b16 %v3166, %v3165
  %v3201 = vpack.c.b16 %v3168, %v3167
  %v3202 = vpack.c.b16 %v3170, %v3169
  %v3203 = vpack.c.b16 %v3172, %v3171
  %v3204 = vpack.c.b16 %v3174, %v3173
  %v3205 = vpack.c.b16 %v3176, %v3175
  %v3206 = vpack.c.b16 %v3178, %v3177
  %v3207 = vpack.c.b16 %v3180, %v3179
  %v3208 = vpack.c.b16 %v3182, %v3181
  %v3209 = vpack.c.b16 %v3184, %v3183
  %v3210 = vpack.c.b16 %v3186, %v3185
  %v3211 = vpack.c.b16 %v3188, %v3187
  %v3212 = vpack.c.b16 %v3190, %v3189
  %v3213 = vpack.c.b16 %v3192, %v3191
  %v3214 = vpack.c.b16 %v3194, %v3193
  %v3215 = vpack.c.b16 %v3196, %v3195
  %v3216 = vpack.c.b16 %v3198, %v3197
  %v3251 = vunpack.c.l.b16 %v3111
  %v3252 = vunpack.c.l.b16 %v3112
  %v3253 = vunpack.c.l.b16 %v3113
  %v3254 = vunpack.c.l.b16 %v3114
  %v3255 = vunpack.c.l.b16 %v3115
  %v3256 = vunpack.c.l.b16 %v3116
  %v3257 = vunpack.c.l.b16 %v3117
  %v3258 = vunpack.c.l.b16 %v3118
  %v3259 = vunpack.c.l.b16 %v3119
  %v3260 = vunpack.c.l.b16 %v3120
  %v3261 = vunpack.c.l.b16 %v3121
  %v3262 = vunpack.c.l.b16 %v3122
  %v3263 = vunpack.c.l.b16 %v3123
  %v3264 = vunpack.c.l.b16 %v3124
  %v3265 = vunpack.c.l.b16 %v3125
  %v3266 = vunpack.c.l.b16 %v3126
  %v3267 = vpack.c.b16 %v3252, %v3251
  %v3268 = vpack.c.b16 %v3254, %v3253
  %v3269 = vpack.c.b16 %v3256, %v3255
  %v3270 = vpack.c.b16 %v3258, %v3257
  %v3271 = vpack.c.b16 %v3260, %v3259
  %v3272 = vpack.c.b16 %v3262, %v3261
  %v3273 = vpack.c.b16 %v3264, %v3263
  %v3274 = vpack.c.b16 %v3266, %v3265
  %3283 = vmatpush.bf16.msra.mxu0 %v3274
  %3284 = vmatpush.bf16.msra.mxu0 %v3273
  %3285 = vmatpush.bf16.msra.mxu0 %v3272
  %3286 = vmatpush.bf16.msra.mxu0 %v3271
  %3287 = vmatpush.bf16.msra.mxu0 %v3270
  %3288 = vmatpush.bf16.msra.mxu0 %v3269
  %3289 = vmatpush.bf16.msra.mxu0 %v3268
  %3290 = vmatpush.bf16.msra.mxu0 %v3267
  %3291 = vmatmul.bf16.gmra.mxu0 %v3199
  %v3292 = vpop.f32.mrf.mxu0
  %v3293 = vadd.f32 0.0, %v3292
  %v3294 = vpop.f32.mrf.mxu0
  %v3295 = vadd.f32 0.0, %v3294
  %3296 = vmatmul.bf16.gmra.mxu0 %v3200
  %v3297 = vpop.f32.mrf.mxu0
  %v3298 = vadd.f32 0.0, %v3297
  %v3299 = vpop.f32.mrf.mxu0
  %v3300 = vadd.f32 0.0, %v3299
  %3301 = vmatmul.bf16.gmra.mxu0 %v3201
  %v3302 = vpop.f32.mrf.mxu0
  %v3303 = vadd.f32 0.0, %v3302
  %v3304 = vpop.f32.mrf.mxu0
  %v3305 = vadd.f32 0.0, %v3304
  %3306 = vmatmul.bf16.gmra.mxu0 %v3202
  %v3307 = vpop.f32.mrf.mxu0
  %v3308 = vadd.f32 0.0, %v3307
  %v3309 = vpop.f32.mrf.mxu0
  %v3310 = vadd.f32 0.0, %v3309
  %3311 = vmatmul.bf16.gmra.mxu0 %v3203
  %v3312 = vpop.f32.mrf.mxu0
  %v3313 = vadd.f32 0.0, %v3312
  %v3314 = vpop.f32.mrf.mxu0
  %v3315 = vadd.f32 0.0, %v3314
  %3316 = vmatmul.bf16.gmra.mxu0 %v3204
  %v3317 = vpop.f32.mrf.mxu0
  %v3318 = vadd.f32 0.0, %v3317
  %v3319 = vpop.f32.mrf.mxu0
  %v3320 = vadd.f32 0.0, %v3319
  %3321 = vmatmul.bf16.gmra.mxu0 %v3205
  %v3322 = vpop.f32.mrf.mxu0
  %v3323 = vadd.f32 0.0, %v3322
  %v3324 = vpop.f32.mrf.mxu0
  %v3325 = vadd.f32 0.0, %v3324
  %3326 = vmatmul.bf16.gmra.mxu0 %v3206
  %v3327 = vpop.f32.mrf.mxu0
  %v3328 = vadd.f32 0.0, %v3327
  %v3329 = vpop.f32.mrf.mxu0
  %v3330 = vadd.f32 0.0, %v3329
  %3331 = vmatmul.bf16.gmra.mxu0 %v3207
  %v3332 = vpop.f32.mrf.mxu0
  %v3333 = vadd.f32 0.0, %v3332
  %v3334 = vpop.f32.mrf.mxu0
  %v3335 = vadd.f32 0.0, %v3334
  %3336 = vmatmul.bf16.gmra.mxu0 %v3208
  %v3337 = vpop.f32.mrf.mxu0
  %v3338 = vadd.f32 0.0, %v3337
  %v3339 = vpop.f32.mrf.mxu0
  %v3340 = vadd.f32 0.0, %v3339
  %3341 = vmatmul.bf16.gmra.mxu0 %v3209
  %v3342 = vpop.f32.mrf.mxu0
  %v3343 = vadd.f32 0.0, %v3342
  %v3344 = vpop.f32.mrf.mxu0
  %v3345 = vadd.f32 0.0, %v3344
  %3346 = vmatmul.bf16.gmra.mxu0 %v3210
  %v3347 = vpop.f32.mrf.mxu0
  %v3348 = vadd.f32 0.0, %v3347
  %v3349 = vpop.f32.mrf.mxu0
  %v3350 = vadd.f32 0.0, %v3349
  %3351 = vmatmul.bf16.gmra.mxu0 %v3211
  %v3352 = vpop.f32.mrf.mxu0
  %v3353 = vadd.f32 0.0, %v3352
  %v3354 = vpop.f32.mrf.mxu0
  %v3355 = vadd.f32 0.0, %v3354
  %3356 = vmatmul.bf16.gmra.mxu0 %v3212
  %v3357 = vpop.f32.mrf.mxu0
  %v3358 = vadd.f32 0.0, %v3357
  %v3359 = vpop.f32.mrf.mxu0
  %v3360 = vadd.f32 0.0, %v3359
  %3361 = vmatmul.bf16.gmra.mxu0 %v3213
  %v3362 = vpop.f32.mrf.mxu0
  %v3363 = vadd.f32 0.0, %v3362
  %v3364 = vpop.f32.mrf.mxu0
  %v3365 = vadd.f32 0.0, %v3364
  %3366 = vmatmul.bf16.gmra.mxu0 %v3214
  %v3367 = vpop.f32.mrf.mxu0
  %v3368 = vadd.f32 0.0, %v3367
  %v3369 = vpop.f32.mrf.mxu0
  %v3370 = vadd.f32 0.0, %v3369
  %3371 = vmatmul.bf16.gmra.mxu0 %v3215
  %v3372 = vpop.f32.mrf.mxu0
  %v3373 = vadd.f32 0.0, %v3372
  %v3374 = vpop.f32.mrf.mxu0
  %v3375 = vadd.f32 0.0, %v3374
  %3376 = vmatmul.bf16.gmra.mxu0 %v3216
  %v3377 = vpop.f32.mrf.mxu0
  %v3378 = vadd.f32 0.0, %v3377
  %v3379 = vpop.f32.mrf.mxu0
  %v3380 = vadd.f32 0.0, %v3379
  %3381 = vdwg.mxu0
  %v3382 = vadd.f32 %v2984, %v3293
  %v3383 = vadd.f32 %v2986, %v3295
  %v3384 = vadd.f32 %v2989, %v3298
  %v3385 = vadd.f32 %v2991, %v3300
  %v3386 = vadd.f32 %v2994, %v3303
  %v3387 = vadd.f32 %v2996, %v3305
  %v3388 = vadd.f32 %v2999, %v3308
  %v3389 = vadd.f32 %v3001, %v3310
  %v3390 = vadd.f32 %v3004, %v3313
  %v3391 = vadd.f32 %v3006, %v3315
  %v3392 = vadd.f32 %v3009, %v3318
  %v3393 = vadd.f32 %v3011, %v3320
  %v3394 = vadd.f32 %v3014, %v3323
  %v3395 = vadd.f32 %v3016, %v3325
  %v3396 = vadd.f32 %v3019, %v3328
  %v3397 = vadd.f32 %v3021, %v3330
  %v3398 = vadd.f32 %v3024, %v3333
  %v3399 = vadd.f32 %v3026, %v3335
  %v3400 = vadd.f32 %v3029, %v3338
  %v3401 = vadd.f32 %v3031, %v3340
  %v3402 = vadd.f32 %v3034, %v3343
  %v3403 = vadd.f32 %v3036, %v3345
  %v3404 = vadd.f32 %v3039, %v3348
  %v3405 = vadd.f32 %v3041, %v3350
  %v3406 = vadd.f32 %v3044, %v3353
  %v3407 = vadd.f32 %v3046, %v3355
  %v3408 = vadd.f32 %v3049, %v3358
  %v3409 = vadd.f32 %v3051, %v3360
  %v3410 = vadd.f32 %v3054, %v3363
  %v3411 = vadd.f32 %v3056, %v3365
  %v3412 = vadd.f32 %v3059, %v3368
  %v3413 = vadd.f32 %v3061, %v3370
  %v3414 = vadd.f32 %v3064, %v3373
  %v3415 = vadd.f32 %v3066, %v3375
  %v3416 = vadd.f32 %v3069, %v3378
  %v3417 = vadd.f32 %v3071, %v3380
  %s3418 = scalar_lea.vmem [#allocation2], 80
  %v3419 = vld [vmem:[%s3418] sm:$0xf]
  %v3420 = vld [vmem:[%s3418 + $0x4] sm:$0xf]
  %v3421 = vld [vmem:[%s3418 + $0x8] sm:$0xf]
  %v3422 = vld [vmem:[%s3418 + $0xc] sm:$0xf]
  %v3423 = vld [vmem:[%s3418 + $0x10] sm:$0xf]
  %v3424 = vld [vmem:[%s3418 + $0x14] sm:$0xf]
  %v3425 = vld [vmem:[%s3418 + $0x18] sm:$0xf]
  %v3426 = vld [vmem:[%s3418 + $0x1c] sm:$0xf]
  %v3427 = vld [vmem:[%s3418 + $0x20] sm:$0xf]
  %v3428 = vld [vmem:[%s3418 + $0x24] sm:$0xf]
  %v3429 = vld [vmem:[%s3418 + $0x28] sm:$0xf]
  %v3430 = vld [vmem:[%s3418 + $0x2c] sm:$0xf]
  %v3431 = vld [vmem:[%s3418 + $0x40] sm:$0xf]
  %v3432 = vld [vmem:[%s3418 + $0x44] sm:$0xf]
  %v3433 = vld [vmem:[%s3418 + $0x48] sm:$0xf]
  %v3434 = vld [vmem:[%s3418 + $0x4c] sm:$0xf]
  %v3435 = vld [vmem:[%s3418 + $0x50] sm:$0xf]
  %v3436 = vld [vmem:[%s3418 + $0x54] sm:$0xf]
  %v3437 = vld [vmem:[%s3418 + $0x58] sm:$0xf]
  %v3438 = vld [vmem:[%s3418 + $0x5c] sm:$0xf]
  %v3439 = vld [vmem:[%s3418 + $0x60] sm:$0xf]
  %v3440 = vld [vmem:[%s3418 + $0x64] sm:$0xf]
  %v3441 = vld [vmem:[%s3418 + $0x68] sm:$0xf]
  %v3442 = vld [vmem:[%s3418 + $0x6c] sm:$0xf]
  %v3443 = vld [vmem:[%s3418 + $0x80] sm:$0xf]
  %v3444 = vld [vmem:[%s3418 + $0x84] sm:$0xf]
  %v3445 = vld [vmem:[%s3418 + $0x88] sm:$0xf]
  %v3446 = vld [vmem:[%s3418 + $0x8c] sm:$0xf]
  %v3447 = vld [vmem:[%s3418 + $0x90] sm:$0xf]
  %v3448 = vld [vmem:[%s3418 + $0x94] sm:$0xf]
  %v3449 = vld [vmem:[%s3418 + $0x98] sm:$0xf]
  %v3450 = vld [vmem:[%s3418 + $0x9c] sm:$0xf]
  %v3451 = vld [vmem:[%s3418 + $0xa0] sm:$0xf]
  %v3452 = vld [vmem:[%s3418 + $0xa4] sm:$0xf]
  %v3453 = vld [vmem:[%s3418 + $0xa8] sm:$0xf]
  %v3454 = vld [vmem:[%s3418 + $0xac] sm:$0xf]
  %s3455 = scalar_lea.vmem %s3, 192
  %v3456 = vld [vmem:[%s3455] sm:$0xf]
  %v3457 = vld [vmem:[%s3455 + $0x4] sm:$0xf]
  %v3458 = vld [vmem:[%s3455 + $0x8] sm:$0xf]
  %v3459 = vld [vmem:[%s3455 + $0xc] sm:$0xf]
  %v3460 = vld [vmem:[%s3455 + $0x10] sm:$0xf]
  %v3461 = vld [vmem:[%s3455 + $0x14] sm:$0xf]
  %v3462 = vld [vmem:[%s3455 + $0x18] sm:$0xf]
  %v3463 = vld [vmem:[%s3455 + $0x1c] sm:$0xf]
  %v3464 = vld [vmem:[%s3455 + $0x20] sm:$0xf]
  %v3465 = vld [vmem:[%s3455 + $0x24] sm:$0xf]
  %v3466 = vld [vmem:[%s3455 + $0x28] sm:$0xf]
  %v3467 = vld [vmem:[%s3455 + $0x2c] sm:$0xf]
  %v3468 = vld [vmem:[%s3455 + $0x30] sm:$0xf]
  %v3469 = vld [vmem:[%s3455 + $0x34] sm:$0xf]
  %v3470 = vld [vmem:[%s3455 + $0x38] sm:$0xf]
  %v3471 = vld [vmem:[%s3455 + $0x3c] sm:$0xf]
  %v3508 = vunpack.c.l.b16 %v3419
  %v3509 = vunpack.c.l.b16 %v3420
  %v3510 = vunpack.c.l.b16 %v3421
  %v3511 = vunpack.c.l.b16 %v3422
  %v3512 = vunpack.c.l.b16 %v3423
  %v3513 = vunpack.c.l.b16 %v3424
  %v3514 = vunpack.c.l.b16 %v3425
  %v3515 = vunpack.c.l.b16 %v3426
  %v3516 = vunpack.c.l.b16 %v3427
  %v3517 = vunpack.c.l.b16 %v3428
  %v3518 = vunpack.c.l.b16 %v3429
  %v3519 = vunpack.c.l.b16 %v3430
  %v3520 = vunpack.c.l.b16 %v3431
  %v3521 = vunpack.c.l.b16 %v3432
  %v3522 = vunpack.c.l.b16 %v3433
  %v3523 = vunpack.c.l.b16 %v3434
  %v3524 = vunpack.c.l.b16 %v3435
  %v3525 = vunpack.c.l.b16 %v3436
  %v3526 = vunpack.c.l.b16 %v3437
  %v3527 = vunpack.c.l.b16 %v3438
  %v3528 = vunpack.c.l.b16 %v3439
  %v3529 = vunpack.c.l.b16 %v3440
  %v3530 = vunpack.c.l.b16 %v3441
  %v3531 = vunpack.c.l.b16 %v3442
  %v3532 = vunpack.c.l.b16 %v3443
  %v3533 = vunpack.c.l.b16 %v3444
  %v3534 = vunpack.c.l.b16 %v3445
  %v3535 = vunpack.c.l.b16 %v3446
  %v3536 = vunpack.c.l.b16 %v3447
  %v3537 = vunpack.c.l.b16 %v3448
  %v3538 = vunpack.c.l.b16 %v3449
  %v3539 = vunpack.c.l.b16 %v3450
  %v3540 = vunpack.c.l.b16 %v3451
  %v3541 = vunpack.c.l.b16 %v3452
  %v3542 = vunpack.c.l.b16 %v3453
  %v3543 = vunpack.c.l.b16 %v3454
  %v3544 = vpack.c.b16 %v3509, %v3508
  %v3545 = vpack.c.b16 %v3511, %v3510
  %v3546 = vpack.c.b16 %v3513, %v3512
  %v3547 = vpack.c.b16 %v3515, %v3514
  %v3548 = vpack.c.b16 %v3517, %v3516
  %v3549 = vpack.c.b16 %v3519, %v3518
  %v3550 = vpack.c.b16 %v3521, %v3520
  %v3551 = vpack.c.b16 %v3523, %v3522
  %v3552 = vpack.c.b16 %v3525, %v3524
  %v3553 = vpack.c.b16 %v3527, %v3526
  %v3554 = vpack.c.b16 %v3529, %v3528
  %v3555 = vpack.c.b16 %v3531, %v3530
  %v3556 = vpack.c.b16 %v3533, %v3532
  %v3557 = vpack.c.b16 %v3535, %v3534
  %v3558 = vpack.c.b16 %v3537, %v3536
  %v3559 = vpack.c.b16 %v3539, %v3538
  %v3560 = vpack.c.b16 %v3541, %v3540
  %v3561 = vpack.c.b16 %v3543, %v3542
  %v3596 = vunpack.c.l.b16 %v3456
  %v3597 = vunpack.c.l.b16 %v3457
  %v3598 = vunpack.c.l.b16 %v3458
  %v3599 = vunpack.c.l.b16 %v3459
  %v3600 = vunpack.c.l.b16 %v3460
  %v3601 = vunpack.c.l.b16 %v3461
  %v3602 = vunpack.c.l.b16 %v3462
  %v3603 = vunpack.c.l.b16 %v3463
  %v3604 = vunpack.c.l.b16 %v3464
  %v3605 = vunpack.c.l.b16 %v3465
  %v3606 = vunpack.c.l.b16 %v3466
  %v3607 = vunpack.c.l.b16 %v3467
  %v3608 = vunpack.c.l.b16 %v3468
  %v3609 = vunpack.c.l.b16 %v3469
  %v3610 = vunpack.c.l.b16 %v3470
  %v3611 = vunpack.c.l.b16 %v3471
  %v3612 = vpack.c.b16 %v3597, %v3596
  %v3613 = vpack.c.b16 %v3599, %v3598
  %v3614 = vpack.c.b16 %v3601, %v3600
  %v3615 = vpack.c.b16 %v3603, %v3602
  %v3616 = vpack.c.b16 %v3605, %v3604
  %v3617 = vpack.c.b16 %v3607, %v3606
  %v3618 = vpack.c.b16 %v3609, %v3608
  %v3619 = vpack.c.b16 %v3611, %v3610
  %3628 = vmatpush.bf16.msra.mxu0 %v3619
  %3629 = vmatpush.bf16.msra.mxu0 %v3618
  %3630 = vmatpush.bf16.msra.mxu0 %v3617
  %3631 = vmatpush.bf16.msra.mxu0 %v3616
  %3632 = vmatpush.bf16.msra.mxu0 %v3615
  %3633 = vmatpush.bf16.msra.mxu0 %v3614
  %3634 = vmatpush.bf16.msra.mxu0 %v3613
  %3635 = vmatpush.bf16.msra.mxu0 %v3612
  %3636 = vmatmul.bf16.gmra.mxu0 %v3544
  %v3637 = vpop.f32.mrf.mxu0
  %v3638 = vadd.f32 0.0, %v3637
  %v3639 = vpop.f32.mrf.mxu0
  %v3640 = vadd.f32 0.0, %v3639
  %3641 = vmatmul.bf16.gmra.mxu0 %v3545
  %v3642 = vpop.f32.mrf.mxu0
  %v3643 = vadd.f32 0.0, %v3642
  %v3644 = vpop.f32.mrf.mxu0
  %v3645 = vadd.f32 0.0, %v3644
  %3646 = vmatmul.bf16.gmra.mxu0 %v3546
  %v3647 = vpop.f32.mrf.mxu0
  %v3648 = vadd.f32 0.0, %v3647
  %v3649 = vpop.f32.mrf.mxu0
  %v3650 = vadd.f32 0.0, %v3649
  %3651 = vmatmul.bf16.gmra.mxu0 %v3547
  %v3652 = vpop.f32.mrf.mxu0
  %v3653 = vadd.f32 0.0, %v3652
  %v3654 = vpop.f32.mrf.mxu0
  %v3655 = vadd.f32 0.0, %v3654
  %3656 = vmatmul.bf16.gmra.mxu0 %v3548
  %v3657 = vpop.f32.mrf.mxu0
  %v3658 = vadd.f32 0.0, %v3657
  %v3659 = vpop.f32.mrf.mxu0
  %v3660 = vadd.f32 0.0, %v3659
  %3661 = vmatmul.bf16.gmra.mxu0 %v3549
  %v3662 = vpop.f32.mrf.mxu0
  %v3663 = vadd.f32 0.0, %v3662
  %v3664 = vpop.f32.mrf.mxu0
  %v3665 = vadd.f32 0.0, %v3664
  %3666 = vmatmul.bf16.gmra.mxu0 %v3550
  %v3667 = vpop.f32.mrf.mxu0
  %v3668 = vadd.f32 0.0, %v3667
  %v3669 = vpop.f32.mrf.mxu0
  %v3670 = vadd.f32 0.0, %v3669
  %3671 = vmatmul.bf16.gmra.mxu0 %v3551
  %v3672 = vpop.f32.mrf.mxu0
  %v3673 = vadd.f32 0.0, %v3672
  %v3674 = vpop.f32.mrf.mxu0
  %v3675 = vadd.f32 0.0, %v3674
  %3676 = vmatmul.bf16.gmra.mxu0 %v3552
  %v3677 = vpop.f32.mrf.mxu0
  %v3678 = vadd.f32 0.0, %v3677
  %v3679 = vpop.f32.mrf.mxu0
  %v3680 = vadd.f32 0.0, %v3679
  %3681 = vmatmul.bf16.gmra.mxu0 %v3553
  %v3682 = vpop.f32.mrf.mxu0
  %v3683 = vadd.f32 0.0, %v3682
  %v3684 = vpop.f32.mrf.mxu0
  %v3685 = vadd.f32 0.0, %v3684
  %3686 = vmatmul.bf16.gmra.mxu0 %v3554
  %v3687 = vpop.f32.mrf.mxu0
  %v3688 = vadd.f32 0.0, %v3687
  %v3689 = vpop.f32.mrf.mxu0
  %v3690 = vadd.f32 0.0, %v3689
  %3691 = vmatmul.bf16.gmra.mxu0 %v3555
  %v3692 = vpop.f32.mrf.mxu0
  %v3693 = vadd.f32 0.0, %v3692
  %v3694 = vpop.f32.mrf.mxu0
  %v3695 = vadd.f32 0.0, %v3694
  %3696 = vmatmul.bf16.gmra.mxu0 %v3556
  %v3697 = vpop.f32.mrf.mxu0
  %v3698 = vadd.f32 0.0, %v3697
  %v3699 = vpop.f32.mrf.mxu0
  %v3700 = vadd.f32 0.0, %v3699
  %3701 = vmatmul.bf16.gmra.mxu0 %v3557
  %v3702 = vpop.f32.mrf.mxu0
  %v3703 = vadd.f32 0.0, %v3702
  %v3704 = vpop.f32.mrf.mxu0
  %v3705 = vadd.f32 0.0, %v3704
  %3706 = vmatmul.bf16.gmra.mxu0 %v3558
  %v3707 = vpop.f32.mrf.mxu0
  %v3708 = vadd.f32 0.0, %v3707
  %v3709 = vpop.f32.mrf.mxu0
  %v3710 = vadd.f32 0.0, %v3709
  %3711 = vmatmul.bf16.gmra.mxu0 %v3559
  %v3712 = vpop.f32.mrf.mxu0
  %v3713 = vadd.f32 0.0, %v3712
  %v3714 = vpop.f32.mrf.mxu0
  %v3715 = vadd.f32 0.0, %v3714
  %3716 = vmatmul.bf16.gmra.mxu0 %v3560
  %v3717 = vpop.f32.mrf.mxu0
  %v3718 = vadd.f32 0.0, %v3717
  %v3719 = vpop.f32.mrf.mxu0
  %v3720 = vadd.f32 0.0, %v3719
  %3721 = vmatmul.bf16.gmra.mxu0 %v3561
  %v3722 = vpop.f32.mrf.mxu0
  %v3723 = vadd.f32 0.0, %v3722
  %v3724 = vpop.f32.mrf.mxu0
  %v3725 = vadd.f32 0.0, %v3724
  %3726 = vdwg.mxu0
  %v3727 = vadd.f32 %v3382, %v3638
  %v3728 = vadd.f32 %v3383, %v3640
  %v3729 = vadd.f32 %v3384, %v3643
  %v3730 = vadd.f32 %v3385, %v3645
  %v3731 = vadd.f32 %v3386, %v3648
  %v3732 = vadd.f32 %v3387, %v3650
  %v3733 = vadd.f32 %v3388, %v3653
  %v3734 = vadd.f32 %v3389, %v3655
  %v3735 = vadd.f32 %v3390, %v3658
  %v3736 = vadd.f32 %v3391, %v3660
  %v3737 = vadd.f32 %v3392, %v3663
  %v3738 = vadd.f32 %v3393, %v3665
  %v3739 = vadd.f32 %v3394, %v3668
  %v3740 = vadd.f32 %v3395, %v3670
  %v3741 = vadd.f32 %v3396, %v3673
  %v3742 = vadd.f32 %v3397, %v3675
  %v3743 = vadd.f32 %v3398, %v3678
  %v3744 = vadd.f32 %v3399, %v3680
  %v3745 = vadd.f32 %v3400, %v3683
  %v3746 = vadd.f32 %v3401, %v3685
  %v3747 = vadd.f32 %v3402, %v3688
  %v3748 = vadd.f32 %v3403, %v3690
  %v3749 = vadd.f32 %v3404, %v3693
  %v3750 = vadd.f32 %v3405, %v3695
  %v3751 = vadd.f32 %v3406, %v3698
  %v3752 = vadd.f32 %v3407, %v3700
  %v3753 = vadd.f32 %v3408, %v3703
  %v3754 = vadd.f32 %v3409, %v3705
  %v3755 = vadd.f32 %v3410, %v3708
  %v3756 = vadd.f32 %v3411, %v3710
  %v3757 = vadd.f32 %v3412, %v3713
  %v3758 = vadd.f32 %v3413, %v3715
  %v3759 = vadd.f32 %v3414, %v3718
  %v3760 = vadd.f32 %v3415, %v3720
  %v3761 = vadd.f32 %v3416, %v3723
  %v3762 = vadd.f32 %v3417, %v3725
  %v3763 = vld [vmem:[%s4] sm:$0x1]
  %v3765 = vperm.slane %v3763, 0
  %v3767 = vadd.f32 %v3727, %v3765
  %v3768 = vadd.f32 %v3728, %v3765
  %v3769 = vadd.f32 %v3729, %v3765
  %v3770 = vadd.f32 %v3730, %v3765
  %v3771 = vadd.f32 %v3731, %v3765
  %v3772 = vadd.f32 %v3732, %v3765
  %v3773 = vadd.f32 %v3733, %v3765
  %v3774 = vadd.f32 %v3734, %v3765
  %v3775 = vadd.f32 %v3735, %v3765
  %v3776 = vadd.f32 %v3736, %v3765
  %v3777 = vadd.f32 %v3737, %v3765
  %v3778 = vadd.f32 %v3738, %v3765
  %v3779 = vadd.f32 %v3739, %v3765
  %v3780 = vadd.f32 %v3740, %v3765
  %v3781 = vadd.f32 %v3741, %v3765
  %v3782 = vadd.f32 %v3742, %v3765
  %v3783 = vadd.f32 %v3743, %v3765
  %v3784 = vadd.f32 %v3744, %v3765
  %v3785 = vadd.f32 %v3745, %v3765
  %v3786 = vadd.f32 %v3746, %v3765
  %v3787 = vadd.f32 %v3747, %v3765
  %v3788 = vadd.f32 %v3748, %v3765
  %v3789 = vadd.f32 %v3749, %v3765
  %v3790 = vadd.f32 %v3750, %v3765
  %v3791 = vadd.f32 %v3751, %v3765
  %v3792 = vadd.f32 %v3752, %v3765
  %v3793 = vadd.f32 %v3753, %v3765
  %v3794 = vadd.f32 %v3754, %v3765
  %v3795 = vadd.f32 %v3755, %v3765
  %v3796 = vadd.f32 %v3756, %v3765
  %v3797 = vadd.f32 %v3757, %v3765
  %v3798 = vadd.f32 %v3758, %v3765
  %v3799 = vadd.f32 %v3759, %v3765
  %v3800 = vadd.f32 %v3760, %v3765
  %v3801 = vadd.f32 %v3761, %v3765
  %v3802 = vadd.f32 %v3762, %v3765
  %v3803 = vmax.f32 %v3767, 0.0
  %v3804 = vmax.f32 %v3768, 0.0
  %v3805 = vmax.f32 %v3769, 0.0
  %v3806 = vmax.f32 %v3770, 0.0
  %v3807 = vmax.f32 %v3771, 0.0
  %v3808 = vmax.f32 %v3772, 0.0
  %v3809 = vmax.f32 %v3773, 0.0
  %v3810 = vmax.f32 %v3774, 0.0
  %v3811 = vmax.f32 %v3775, 0.0
  %v3812 = vmax.f32 %v3776, 0.0
  %v3813 = vmax.f32 %v3777, 0.0
  %v3814 = vmax.f32 %v3778, 0.0
  %v3815 = vmax.f32 %v3779, 0.0
  %v3816 = vmax.f32 %v3780, 0.0
  %v3817 = vmax.f32 %v3781, 0.0
  %v3818 = vmax.f32 %v3782, 0.0
  %v3819 = vmax.f32 %v3783, 0.0
  %v3820 = vmax.f32 %v3784, 0.0
  %v3821 = vmax.f32 %v3785, 0.0
  %v3822 = vmax.f32 %v3786, 0.0
  %v3823 = vmax.f32 %v3787, 0.0
  %v3824 = vmax.f32 %v3788, 0.0
  %v3825 = vmax.f32 %v3789, 0.0
  %v3826 = vmax.f32 %v3790, 0.0
  %v3827 = vmax.f32 %v3791, 0.0
  %v3828 = vmax.f32 %v3792, 0.0
  %v3829 = vmax.f32 %v3793, 0.0
  %v3830 = vmax.f32 %v3794, 0.0
  %v3831 = vmax.f32 %v3795, 0.0
  %v3832 = vmax.f32 %v3796, 0.0
  %v3833 = vmax.f32 %v3797, 0.0
  %v3834 = vmax.f32 %v3798, 0.0
  %v3835 = vmax.f32 %v3799, 0.0
  %v3836 = vmax.f32 %v3800, 0.0
  %v3837 = vmax.f32 %v3801, 0.0
  %v3838 = vmax.f32 %v3802, 0.0
  %v3839 = vpack.c.bf16 %v3803, %v3803
  %v3840 = vpack.c.bf16 %v3804, %v3804
  %v3841 = vpack.c.bf16 %v3805, %v3805
  %v3842 = vpack.c.bf16 %v3806, %v3806
  %v3843 = vpack.c.bf16 %v3807, %v3807
  %v3844 = vpack.c.bf16 %v3808, %v3808
  %v3845 = vpack.c.bf16 %v3809, %v3809
  %v3846 = vpack.c.bf16 %v3810, %v3810
  %v3847 = vpack.c.bf16 %v3811, %v3811
  %v3848 = vpack.c.bf16 %v3812, %v3812
  %v3849 = vpack.c.bf16 %v3813, %v3813
  %v3850 = vpack.c.bf16 %v3814, %v3814
  %v3851 = vpack.c.bf16 %v3815, %v3815
  %v3852 = vpack.c.bf16 %v3816, %v3816
  %v3853 = vpack.c.bf16 %v3817, %v3817
  %v3854 = vpack.c.bf16 %v3818, %v3818
  %v3855 = vpack.c.bf16 %v3819, %v3819
  %v3856 = vpack.c.bf16 %v3820, %v3820
  %v3857 = vpack.c.bf16 %v3821, %v3821
  %v3858 = vpack.c.bf16 %v3822, %v3822
  %v3859 = vpack.c.bf16 %v3823, %v3823
  %v3860 = vpack.c.bf16 %v3824, %v3824
  %v3861 = vpack.c.bf16 %v3825, %v3825
  %v3862 = vpack.c.bf16 %v3826, %v3826
  %v3863 = vpack.c.bf16 %v3827, %v3827
  %v3864 = vpack.c.bf16 %v3828, %v3828
  %v3865 = vpack.c.bf16 %v3829, %v3829
  %v3866 = vpack.c.bf16 %v3830, %v3830
  %v3867 = vpack.c.bf16 %v3831, %v3831
  %v3868 = vpack.c.bf16 %v3832, %v3832
  %v3869 = vpack.c.bf16 %v3833, %v3833
  %v3870 = vpack.c.bf16 %v3834, %v3834
  %v3871 = vpack.c.bf16 %v3835, %v3835
  %v3872 = vpack.c.bf16 %v3836, %v3836
  %v3873 = vpack.c.bf16 %v3837, %v3837
  %v3874 = vpack.c.bf16 %v3838, %v3838
  %v3875 = vld [vmem:[%s5] sm:$0xf]
  %v3876 = vld [vmem:[%s5 + $0x4] sm:$0xf]
  %v3877 = vld [vmem:[%s5 + $0x8] sm:$0xf]
  %v3878 = vld [vmem:[%s5 + $0xc] sm:$0xf]
  %v3879 = vld [vmem:[%s5 + $0x10] sm:$0xf]
  %v3880 = vld [vmem:[%s5 + $0x14] sm:$0xf]
  %v3881 = vld [vmem:[%s5 + $0x18] sm:$0xf]
  %v3882 = vld [vmem:[%s5 + $0x1c] sm:$0xf]
  %s3883 = scalar_lea.vmem %s5, 32
  %v3884 = vld [vmem:[%s3883] sm:$0xf]
  %v3885 = vld [vmem:[%s3883 + $0x4] sm:$0xf]
  %v3886 = vld [vmem:[%s3883 + $0x8] sm:$0xf]
  %v3887 = vld [vmem:[%s3883 + $0xc] sm:$0xf]
  %v3888 = vld [vmem:[%s3883 + $0x10] sm:$0xf]
  %v3889 = vld [vmem:[%s3883 + $0x14] sm:$0xf]
  %v3890 = vld [vmem:[%s3883 + $0x18] sm:$0xf]
  %v3891 = vld [vmem:[%s3883 + $0x1c] sm:$0xf]
  %v3896 = vunpack.c.l.b16 %v3843
  %v3897 = vunpack.c.l.b16 %v3844
  %v3898 = vunpack.c.l.b16 %v3845
  %v3899 = vunpack.c.l.b16 %v3846
  %v3900 = vpack.c.b16 %v3897, %v3896
  %v3901 = vpack.c.b16 %v3899, %v3898
  %v3910 = vunpack.c.l.b16 %v3884
  %v3911 = vunpack.c.l.b16 %v3885
  %v3912 = vunpack.c.l.b16 %v3886
  %v3913 = vunpack.c.l.b16 %v3887
  %v3914 = vunpack.c.l.b16 %v3888
  %v3915 = vunpack.c.l.b16 %v3889
  %v3916 = vunpack.c.l.b16 %v3890
  %v3917 = vunpack.c.l.b16 %v3891
  %v3918 = vpack.c.b16 %v3911, %v3910
  %v3919 = vpack.c.b16 %v3913, %v3912
  %v3920 = vpack.c.b16 %v3915, %v3914
  %v3921 = vpack.c.b16 %v3917, %v3916
  %v3927 = vsel %vm1323, %v3900, 0
  %v3930 = vsel %vm1323, %v3901, 0
  %3932 = vmatpush.bf16.msra.mxu0 0
  %3933 = vmatpush.bf16.msra.mxu0 0
  %3934 = vmatpush.bf16.msra.mxu0 0
  %3935 = vmatpush.bf16.msra.mxu0 0
  %3936 = vmatpush.bf16.msra.mxu0 %v3921
  %3937 = vmatpush.bf16.msra.mxu0 %v3920
  %3938 = vmatpush.bf16.msra.mxu0 %v3919
  %3939 = vmatpush.bf16.msra.mxu0 %v3918
  %3940 = vmatmul.bf16.gmra.mxu0 %v3927
  %v3941 = vpop.f32.mrf.mxu0
  %v3942 = vadd.f32 0.0, %v3941
  %v3943 = vpop.f32.mrf.mxu0
  %v3944 = vadd.f32 0.0, %v3943
  %3945 = vmatmul.bf16.gmra.mxu0 %v3930
  %v3946 = vpop.f32.mrf.mxu0
  %v3947 = vadd.f32 0.0, %v3946
  %v3948 = vpop.f32.mrf.mxu0
  %v3949 = vadd.f32 0.0, %v3948
  %3950 = vdwg.mxu0
  %v3955 = vunpack.c.l.b16 %v3839
  %v3956 = vunpack.c.l.b16 %v3840
  %v3957 = vunpack.c.l.b16 %v3841
  %v3958 = vunpack.c.l.b16 %v3842
  %v3959 = vpack.c.b16 %v3956, %v3955
  %v3960 = vpack.c.b16 %v3958, %v3957
  %v3969 = vunpack.c.l.b16 %v3875
  %v3970 = vunpack.c.l.b16 %v3876
  %v3971 = vunpack.c.l.b16 %v3877
  %v3972 = vunpack.c.l.b16 %v3878
  %v3973 = vunpack.c.l.b16 %v3879
  %v3974 = vunpack.c.l.b16 %v3880
  %v3975 = vunpack.c.l.b16 %v3881
  %v3976 = vunpack.c.l.b16 %v3882
  %v3977 = vpack.c.b16 %v3970, %v3969
  %v3978 = vpack.c.b16 %v3972, %v3971
  %v3979 = vpack.c.b16 %v3974, %v3973
  %v3980 = vpack.c.b16 %v3976, %v3975
  %v3986 = vsel %vm1323, %v3959, 0
  %v3989 = vsel %vm1323, %v3960, 0
  %3991 = vmatpush.bf16.msra.mxu0 0
  %3992 = vmatpush.bf16.msra.mxu0 0
  %3993 = vmatpush.bf16.msra.mxu0 0
  %3994 = vmatpush.bf16.msra.mxu0 0
  %3995 = vmatpush.bf16.msra.mxu0 %v3980
  %3996 = vmatpush.bf16.msra.mxu0 %v3979
  %3997 = vmatpush.bf16.msra.mxu0 %v3978
  %3998 = vmatpush.bf16.msra.mxu0 %v3977
  %3999 = vmatmul.bf16.gmra.mxu0 %v3986
  %v4000 = vpop.f32.mrf.mxu0
  %v4001 = vadd.f32 %v3942, %v4000
  %v4002 = vpop.f32.mrf.mxu0
  %v4003 = vadd.f32 %v3944, %v4002
  %4004 = vmatmul.bf16.gmra.mxu0 %v3989
  %v4005 = vpop.f32.mrf.mxu0
  %v4006 = vadd.f32 %v3947, %v4005
  %v4007 = vpop.f32.mrf.mxu0
  %v4008 = vadd.f32 %v3949, %v4007
  %4009 = vdwg.mxu0
  %s4010 = scalar_lea.vmem %s5, 64
  %v4011 = vld [vmem:[%s4010] sm:$0xf]
  %v4012 = vld [vmem:[%s4010 + $0x4] sm:$0xf]
  %v4013 = vld [vmem:[%s4010 + $0x8] sm:$0xf]
  %v4014 = vld [vmem:[%s4010 + $0xc] sm:$0xf]
  %v4015 = vld [vmem:[%s4010 + $0x10] sm:$0xf]
  %v4016 = vld [vmem:[%s4010 + $0x14] sm:$0xf]
  %v4017 = vld [vmem:[%s4010 + $0x18] sm:$0xf]
  %v4018 = vld [vmem:[%s4010 + $0x1c] sm:$0xf]
  %v4023 = vunpack.c.l.b16 %v3847
  %v4024 = vunpack.c.l.b16 %v3848
  %v4025 = vunpack.c.l.b16 %v3849
  %v4026 = vunpack.c.l.b16 %v3850
  %v4027 = vpack.c.b16 %v4024, %v4023
  %v4028 = vpack.c.b16 %v4026, %v4025
  %v4037 = vunpack.c.l.b16 %v4011
  %v4038 = vunpack.c.l.b16 %v4012
  %v4039 = vunpack.c.l.b16 %v4013
  %v4040 = vunpack.c.l.b16 %v4014
  %v4041 = vunpack.c.l.b16 %v4015
  %v4042 = vunpack.c.l.b16 %v4016
  %v4043 = vunpack.c.l.b16 %v4017
  %v4044 = vunpack.c.l.b16 %v4018
  %v4045 = vpack.c.b16 %v4038, %v4037
  %v4046 = vpack.c.b16 %v4040, %v4039
  %v4047 = vpack.c.b16 %v4042, %v4041
  %v4048 = vpack.c.b16 %v4044, %v4043
  %v4054 = vsel %vm1323, %v4027, 0
  %v4057 = vsel %vm1323, %v4028, 0
  %4059 = vmatpush.bf16.msra.mxu0 0
  %4060 = vmatpush.bf16.msra.mxu0 0
  %4061 = vmatpush.bf16.msra.mxu0 0
  %4062 = vmatpush.bf16.msra.mxu0 0
  %4063 = vmatpush.bf16.msra.mxu0 %v4048
  %4064 = vmatpush.bf16.msra.mxu0 %v4047
  %4065 = vmatpush.bf16.msra.mxu0 %v4046
  %4066 = vmatpush.bf16.msra.mxu0 %v4045
  %4067 = vmatmul.bf16.gmra.mxu0 %v4054
  %v4068 = vpop.f32.mrf.mxu0
  %v4069 = vadd.f32 0.0, %v4068
  %v4070 = vpop.f32.mrf.mxu0
  %v4071 = vadd.f32 0.0, %v4070
  %4072 = vmatmul.bf16.gmra.mxu0 %v4057
  %v4073 = vpop.f32.mrf.mxu0
  %v4074 = vadd.f32 0.0, %v4073
  %v4075 = vpop.f32.mrf.mxu0
  %v4076 = vadd.f32 0.0, %v4075
  %4077 = vdwg.mxu0
  %v4078 = vadd.f32 %v4001, %v4069
  %v4079 = vadd.f32 %v4003, %v4071
  %v4080 = vadd.f32 %v4006, %v4074
  %v4081 = vadd.f32 %v4008, %v4076
  %s4082 = scalar_lea.vmem %s5, 96
  %v4083 = vld [vmem:[%s4082] sm:$0xf]
  %v4084 = vld [vmem:[%s4082 + $0x4] sm:$0xf]
  %v4085 = vld [vmem:[%s4082 + $0x8] sm:$0xf]
  %v4086 = vld [vmem:[%s4082 + $0xc] sm:$0xf]
  %v4087 = vld [vmem:[%s4082 + $0x10] sm:$0xf]
  %v4088 = vld [vmem:[%s4082 + $0x14] sm:$0xf]
  %v4089 = vld [vmem:[%s4082 + $0x18] sm:$0xf]
  %v4090 = vld [vmem:[%s4082 + $0x1c] sm:$0xf]
  %v4095 = vunpack.c.l.b16 %v3851
  %v4096 = vunpack.c.l.b16 %v3852
  %v4097 = vunpack.c.l.b16 %v3853
  %v4098 = vunpack.c.l.b16 %v3854
  %v4099 = vpack.c.b16 %v4096, %v4095
  %v4100 = vpack.c.b16 %v4098, %v4097
  %v4109 = vunpack.c.l.b16 %v4083
  %v4110 = vunpack.c.l.b16 %v4084
  %v4111 = vunpack.c.l.b16 %v4085
  %v4112 = vunpack.c.l.b16 %v4086
  %v4113 = vunpack.c.l.b16 %v4087
  %v4114 = vunpack.c.l.b16 %v4088
  %v4115 = vunpack.c.l.b16 %v4089
  %v4116 = vunpack.c.l.b16 %v4090
  %v4117 = vpack.c.b16 %v4110, %v4109
  %v4118 = vpack.c.b16 %v4112, %v4111
  %v4119 = vpack.c.b16 %v4114, %v4113
  %v4120 = vpack.c.b16 %v4116, %v4115
  %v4126 = vsel %vm1323, %v4099, 0
  %v4129 = vsel %vm1323, %v4100, 0
  %4131 = vmatpush.bf16.msra.mxu0 0
  %4132 = vmatpush.bf16.msra.mxu0 0
  %4133 = vmatpush.bf16.msra.mxu0 0
  %4134 = vmatpush.bf16.msra.mxu0 0
  %4135 = vmatpush.bf16.msra.mxu0 %v4120
  %4136 = vmatpush.bf16.msra.mxu0 %v4119
  %4137 = vmatpush.bf16.msra.mxu0 %v4118
  %4138 = vmatpush.bf16.msra.mxu0 %v4117
  %4139 = vmatmul.bf16.gmra.mxu0 %v4126
  %v4140 = vpop.f32.mrf.mxu0
  %v4141 = vadd.f32 0.0, %v4140
  %v4142 = vpop.f32.mrf.mxu0
  %v4143 = vadd.f32 0.0, %v4142
  %4144 = vmatmul.bf16.gmra.mxu0 %v4129
  %v4145 = vpop.f32.mrf.mxu0
  %v4146 = vadd.f32 0.0, %v4145
  %v4147 = vpop.f32.mrf.mxu0
  %v4148 = vadd.f32 0.0, %v4147
  %4149 = vdwg.mxu0
  %v4150 = vadd.f32 %v4078, %v4141
  %v4151 = vadd.f32 %v4079, %v4143
  %v4152 = vadd.f32 %v4080, %v4146
  %v4153 = vadd.f32 %v4081, %v4148
  %s4154 = scalar_lea.vmem %s5, 128
  %v4155 = vld [vmem:[%s4154] sm:$0xf]
  %v4156 = vld [vmem:[%s4154 + $0x4] sm:$0xf]
  %v4157 = vld [vmem:[%s4154 + $0x8] sm:$0xf]
  %v4158 = vld [vmem:[%s4154 + $0xc] sm:$0xf]
  %v4159 = vld [vmem:[%s4154 + $0x10] sm:$0xf]
  %v4160 = vld [vmem:[%s4154 + $0x14] sm:$0xf]
  %v4161 = vld [vmem:[%s4154 + $0x18] sm:$0xf]
  %v4162 = vld [vmem:[%s4154 + $0x1c] sm:$0xf]
  %v4167 = vunpack.c.l.b16 %v3855
  %v4168 = vunpack.c.l.b16 %v3856
  %v4169 = vunpack.c.l.b16 %v3857
  %v4170 = vunpack.c.l.b16 %v3858
  %v4171 = vpack.c.b16 %v4168, %v4167
  %v4172 = vpack.c.b16 %v4170, %v4169
  %v4181 = vunpack.c.l.b16 %v4155
  %v4182 = vunpack.c.l.b16 %v4156
  %v4183 = vunpack.c.l.b16 %v4157
  %v4184 = vunpack.c.l.b16 %v4158
  %v4185 = vunpack.c.l.b16 %v4159
  %v4186 = vunpack.c.l.b16 %v4160
  %v4187 = vunpack.c.l.b16 %v4161
  %v4188 = vunpack.c.l.b16 %v4162
  %v4189 = vpack.c.b16 %v4182, %v4181
  %v4190 = vpack.c.b16 %v4184, %v4183
  %v4191 = vpack.c.b16 %v4186, %v4185
  %v4192 = vpack.c.b16 %v4188, %v4187
  %v4198 = vsel %vm1323, %v4171, 0
  %v4201 = vsel %vm1323, %v4172, 0
  %4203 = vmatpush.bf16.msra.mxu0 0
  %4204 = vmatpush.bf16.msra.mxu0 0
  %4205 = vmatpush.bf16.msra.mxu0 0
  %4206 = vmatpush.bf16.msra.mxu0 0
  %4207 = vmatpush.bf16.msra.mxu0 %v4192
  %4208 = vmatpush.bf16.msra.mxu0 %v4191
  %4209 = vmatpush.bf16.msra.mxu0 %v4190
  %4210 = vmatpush.bf16.msra.mxu0 %v4189
  %4211 = vmatmul.bf16.gmra.mxu0 %v4198
  %v4212 = vpop.f32.mrf.mxu0
  %v4213 = vadd.f32 0.0, %v4212
  %v4214 = vpop.f32.mrf.mxu0
  %v4215 = vadd.f32 0.0, %v4214
  %4216 = vmatmul.bf16.gmra.mxu0 %v4201
  %v4217 = vpop.f32.mrf.mxu0
  %v4218 = vadd.f32 0.0, %v4217
  %v4219 = vpop.f32.mrf.mxu0
  %v4220 = vadd.f32 0.0, %v4219
  %4221 = vdwg.mxu0
  %v4222 = vadd.f32 %v4150, %v4213
  %v4223 = vadd.f32 %v4151, %v4215
  %v4224 = vadd.f32 %v4152, %v4218
  %v4225 = vadd.f32 %v4153, %v4220
  %s4226 = scalar_lea.vmem %s5, 160
  %v4227 = vld [vmem:[%s4226] sm:$0xf]
  %v4228 = vld [vmem:[%s4226 + $0x4] sm:$0xf]
  %v4229 = vld [vmem:[%s4226 + $0x8] sm:$0xf]
  %v4230 = vld [vmem:[%s4226 + $0xc] sm:$0xf]
  %v4231 = vld [vmem:[%s4226 + $0x10] sm:$0xf]
  %v4232 = vld [vmem:[%s4226 + $0x14] sm:$0xf]
  %v4233 = vld [vmem:[%s4226 + $0x18] sm:$0xf]
  %v4234 = vld [vmem:[%s4226 + $0x1c] sm:$0xf]
  %v4239 = vunpack.c.l.b16 %v3859
  %v4240 = vunpack.c.l.b16 %v3860
  %v4241 = vunpack.c.l.b16 %v3861
  %v4242 = vunpack.c.l.b16 %v3862
  %v4243 = vpack.c.b16 %v4240, %v4239
  %v4244 = vpack.c.b16 %v4242, %v4241
  %v4253 = vunpack.c.l.b16 %v4227
  %v4254 = vunpack.c.l.b16 %v4228
  %v4255 = vunpack.c.l.b16 %v4229
  %v4256 = vunpack.c.l.b16 %v4230
  %v4257 = vunpack.c.l.b16 %v4231
  %v4258 = vunpack.c.l.b16 %v4232
  %v4259 = vunpack.c.l.b16 %v4233
  %v4260 = vunpack.c.l.b16 %v4234
  %v4261 = vpack.c.b16 %v4254, %v4253
  %v4262 = vpack.c.b16 %v4256, %v4255
  %v4263 = vpack.c.b16 %v4258, %v4257
  %v4264 = vpack.c.b16 %v4260, %v4259
  %v4270 = vsel %vm1323, %v4243, 0
  %v4273 = vsel %vm1323, %v4244, 0
  %4275 = vmatpush.bf16.msra.mxu0 0
  %4276 = vmatpush.bf16.msra.mxu0 0
  %4277 = vmatpush.bf16.msra.mxu0 0
  %4278 = vmatpush.bf16.msra.mxu0 0
  %4279 = vmatpush.bf16.msra.mxu0 %v4264
  %4280 = vmatpush.bf16.msra.mxu0 %v4263
  %4281 = vmatpush.bf16.msra.mxu0 %v4262
  %4282 = vmatpush.bf16.msra.mxu0 %v4261
  %4283 = vmatmul.bf16.gmra.mxu0 %v4270
  %v4284 = vpop.f32.mrf.mxu0
  %v4285 = vadd.f32 0.0, %v4284
  %v4286 = vpop.f32.mrf.mxu0
  %v4287 = vadd.f32 0.0, %v4286
  %4288 = vmatmul.bf16.gmra.mxu0 %v4273
  %v4289 = vpop.f32.mrf.mxu0
  %v4290 = vadd.f32 0.0, %v4289
  %v4291 = vpop.f32.mrf.mxu0
  %v4292 = vadd.f32 0.0, %v4291
  %4293 = vdwg.mxu0
  %v4294 = vadd.f32 %v4222, %v4285
  %v4295 = vadd.f32 %v4223, %v4287
  %v4296 = vadd.f32 %v4224, %v4290
  %v4297 = vadd.f32 %v4225, %v4292
  %s4298 = scalar_lea.vmem %s5, 192
  %v4299 = vld [vmem:[%s4298] sm:$0xf]
  %v4300 = vld [vmem:[%s4298 + $0x4] sm:$0xf]
  %v4301 = vld [vmem:[%s4298 + $0x8] sm:$0xf]
  %v4302 = vld [vmem:[%s4298 + $0xc] sm:$0xf]
  %v4303 = vld [vmem:[%s4298 + $0x10] sm:$0xf]
  %v4304 = vld [vmem:[%s4298 + $0x14] sm:$0xf]
  %v4305 = vld [vmem:[%s4298 + $0x18] sm:$0xf]
  %v4306 = vld [vmem:[%s4298 + $0x1c] sm:$0xf]
  %v4311 = vunpack.c.l.b16 %v3863
  %v4312 = vunpack.c.l.b16 %v3864
  %v4313 = vunpack.c.l.b16 %v3865
  %v4314 = vunpack.c.l.b16 %v3866
  %v4315 = vpack.c.b16 %v4312, %v4311
  %v4316 = vpack.c.b16 %v4314, %v4313
  %v4325 = vunpack.c.l.b16 %v4299
  %v4326 = vunpack.c.l.b16 %v4300
  %v4327 = vunpack.c.l.b16 %v4301
  %v4328 = vunpack.c.l.b16 %v4302
  %v4329 = vunpack.c.l.b16 %v4303
  %v4330 = vunpack.c.l.b16 %v4304
  %v4331 = vunpack.c.l.b16 %v4305
  %v4332 = vunpack.c.l.b16 %v4306
  %v4333 = vpack.c.b16 %v4326, %v4325
  %v4334 = vpack.c.b16 %v4328, %v4327
  %v4335 = vpack.c.b16 %v4330, %v4329
  %v4336 = vpack.c.b16 %v4332, %v4331
  %v4342 = vsel %vm1323, %v4315, 0
  %v4345 = vsel %vm1323, %v4316, 0
  %4347 = vmatpush.bf16.msra.mxu0 0
  %4348 = vmatpush.bf16.msra.mxu0 0
  %4349 = vmatpush.bf16.msra.mxu0 0
  %4350 = vmatpush.bf16.msra.mxu0 0
  %4351 = vmatpush.bf16.msra.mxu0 %v4336
  %4352 = vmatpush.bf16.msra.mxu0 %v4335
  %4353 = vmatpush.bf16.msra.mxu0 %v4334
  %4354 = vmatpush.bf16.msra.mxu0 %v4333
  %4355 = vmatmul.bf16.gmra.mxu0 %v4342
  %v4356 = vpop.f32.mrf.mxu0
  %v4357 = vadd.f32 0.0, %v4356
  %v4358 = vpop.f32.mrf.mxu0
  %v4359 = vadd.f32 0.0, %v4358
  %4360 = vmatmul.bf16.gmra.mxu0 %v4345
  %v4361 = vpop.f32.mrf.mxu0
  %v4362 = vadd.f32 0.0, %v4361
  %v4363 = vpop.f32.mrf.mxu0
  %v4364 = vadd.f32 0.0, %v4363
  %4365 = vdwg.mxu0
  %v4366 = vadd.f32 %v4294, %v4357
  %v4367 = vadd.f32 %v4295, %v4359
  %v4368 = vadd.f32 %v4296, %v4362
  %v4369 = vadd.f32 %v4297, %v4364
  %s4370 = scalar_lea.vmem %s5, 224
  %v4371 = vld [vmem:[%s4370] sm:$0xf]
  %v4372 = vld [vmem:[%s4370 + $0x4] sm:$0xf]
  %v4373 = vld [vmem:[%s4370 + $0x8] sm:$0xf]
  %v4374 = vld [vmem:[%s4370 + $0xc] sm:$0xf]
  %v4375 = vld [vmem:[%s4370 + $0x10] sm:$0xf]
  %v4376 = vld [vmem:[%s4370 + $0x14] sm:$0xf]
  %v4377 = vld [vmem:[%s4370 + $0x18] sm:$0xf]
  %v4378 = vld [vmem:[%s4370 + $0x1c] sm:$0xf]
  %v4383 = vunpack.c.l.b16 %v3867
  %v4384 = vunpack.c.l.b16 %v3868
  %v4385 = vunpack.c.l.b16 %v3869
  %v4386 = vunpack.c.l.b16 %v3870
  %v4387 = vpack.c.b16 %v4384, %v4383
  %v4388 = vpack.c.b16 %v4386, %v4385
  %v4397 = vunpack.c.l.b16 %v4371
  %v4398 = vunpack.c.l.b16 %v4372
  %v4399 = vunpack.c.l.b16 %v4373
  %v4400 = vunpack.c.l.b16 %v4374
  %v4401 = vunpack.c.l.b16 %v4375
  %v4402 = vunpack.c.l.b16 %v4376
  %v4403 = vunpack.c.l.b16 %v4377
  %v4404 = vunpack.c.l.b16 %v4378
  %v4405 = vpack.c.b16 %v4398, %v4397
  %v4406 = vpack.c.b16 %v4400, %v4399
  %v4407 = vpack.c.b16 %v4402, %v4401
  %v4408 = vpack.c.b16 %v4404, %v4403
  %v4414 = vsel %vm1323, %v4387, 0
  %v4417 = vsel %vm1323, %v4388, 0
  %4419 = vmatpush.bf16.msra.mxu0 0
  %4420 = vmatpush.bf16.msra.mxu0 0
  %4421 = vmatpush.bf16.msra.mxu0 0
  %4422 = vmatpush.bf16.msra.mxu0 0
  %4423 = vmatpush.bf16.msra.mxu0 %v4408
  %4424 = vmatpush.bf16.msra.mxu0 %v4407
  %4425 = vmatpush.bf16.msra.mxu0 %v4406
  %4426 = vmatpush.bf16.msra.mxu0 %v4405
  %4427 = vmatmul.bf16.gmra.mxu0 %v4414
  %v4428 = vpop.f32.mrf.mxu0
  %v4429 = vadd.f32 0.0, %v4428
  %v4430 = vpop.f32.mrf.mxu0
  %v4431 = vadd.f32 0.0, %v4430
  %4432 = vmatmul.bf16.gmra.mxu0 %v4417
  %v4433 = vpop.f32.mrf.mxu0
  %v4434 = vadd.f32 0.0, %v4433
  %v4435 = vpop.f32.mrf.mxu0
  %v4436 = vadd.f32 0.0, %v4435
  %4437 = vdwg.mxu0
  %v4438 = vadd.f32 %v4366, %v4429
  %v4439 = vadd.f32 %v4367, %v4431
  %v4440 = vadd.f32 %v4368, %v4434
  %v4441 = vadd.f32 %v4369, %v4436
  %s4442 = scalar_lea.vmem %s5, 256
  %v4443 = vld [vmem:[%s4442] sm:$0xf]
  %v4444 = vld [vmem:[%s4442 + $0x4] sm:$0xf]
  %v4445 = vld [vmem:[%s4442 + $0x8] sm:$0xf]
  %v4446 = vld [vmem:[%s4442 + $0xc] sm:$0xf]
  %v4447 = vld [vmem:[%s4442 + $0x10] sm:$0xf]
  %v4448 = vld [vmem:[%s4442 + $0x14] sm:$0xf]
  %v4449 = vld [vmem:[%s4442 + $0x18] sm:$0xf]
  %v4450 = vld [vmem:[%s4442 + $0x1c] sm:$0xf]
  %v4455 = vunpack.c.l.b16 %v3871
  %v4456 = vunpack.c.l.b16 %v3872
  %v4457 = vunpack.c.l.b16 %v3873
  %v4458 = vunpack.c.l.b16 %v3874
  %v4459 = vpack.c.b16 %v4456, %v4455
  %v4460 = vpack.c.b16 %v4458, %v4457
  %v4469 = vunpack.c.l.b16 %v4443
  %v4470 = vunpack.c.l.b16 %v4444
  %v4471 = vunpack.c.l.b16 %v4445
  %v4472 = vunpack.c.l.b16 %v4446
  %v4473 = vunpack.c.l.b16 %v4447
  %v4474 = vunpack.c.l.b16 %v4448
  %v4475 = vunpack.c.l.b16 %v4449
  %v4476 = vunpack.c.l.b16 %v4450
  %v4477 = vpack.c.b16 %v4470, %v4469
  %v4478 = vpack.c.b16 %v4472, %v4471
  %v4479 = vpack.c.b16 %v4474, %v4473
  %v4480 = vpack.c.b16 %v4476, %v4475
  %v4486 = vsel %vm1323, %v4459, 0
  %v4489 = vsel %vm1323, %v4460, 0
  %4491 = vmatpush.bf16.msra.mxu0 0
  %4492 = vmatpush.bf16.msra.mxu0 0
  %4493 = vmatpush.bf16.msra.mxu0 0
  %4494 = vmatpush.bf16.msra.mxu0 0
  %4495 = vmatpush.bf16.msra.mxu0 %v4480
  %4496 = vmatpush.bf16.msra.mxu0 %v4479
  %4497 = vmatpush.bf16.msra.mxu0 %v4478
  %4498 = vmatpush.bf16.msra.mxu0 %v4477
  %4499 = vmatmul.bf16.gmra.mxu0 %v4486
  %v4500 = vpop.f32.mrf.mxu0
  %v4501 = vadd.f32 0.0, %v4500
  %v4502 = vpop.f32.mrf.mxu0
  %v4503 = vadd.f32 0.0, %v4502
  %4504 = vmatmul.bf16.gmra.mxu0 %v4489
  %v4505 = vpop.f32.mrf.mxu0
  %v4506 = vadd.f32 0.0, %v4505
  %v4507 = vpop.f32.mrf.mxu0
  %v4508 = vadd.f32 0.0, %v4507
  %4509 = vdwg.mxu0
  %v4510 = vadd.f32 %v4438, %v4501
  %v4511 = vadd.f32 %v4439, %v4503
  %v4512 = vadd.f32 %v4440, %v4506
  %v4513 = vadd.f32 %v4441, %v4508
  %v4514 = vld [vmem:[%s6] sm:$0x1]
  %v4516 = vperm.slane %v4514, 0
  %v4518 = vadd.f32 %v4510, %v4516
  %v4519 = vadd.f32 %v4511, %v4516
  %v4520 = vadd.f32 %v4512, %v4516
  %v4521 = vadd.f32 %v4513, %v4516
  %v4522 = vmax.f32 %v4518, 0.0
  %v4523 = vmax.f32 %v4519, 0.0
  %v4524 = vmax.f32 %v4520, 0.0
  %v4525 = vmax.f32 %v4521, 0.0
  %v4526 = vpack.c.bf16 %v4523, %v4522
  %v4527 = vpack.c.bf16 %v4525, %v4524
  %v4528 = vld [vmem:[%s7] sm:$0xff]
  %v4529 = vld [vmem:[%s7 + $0x8] sm:$0xff]
  %v4530 = vld [vmem:[%s7 + $0x10] sm:$0xff]
  %v4531 = vld [vmem:[%s7 + $0x18] sm:$0xff]
  %v4532 = vld [vmem:[%s7 + $0x20] sm:$0xff]
  %v4533 = vld [vmem:[%s7 + $0x28] sm:$0xff]
  %v4534 = vld [vmem:[%s7 + $0x30] sm:$0xff]
  %v4535 = vld [vmem:[%s7 + $0x38] sm:$0xff]
  %v4536 = vld [vmem:[%s7 + $0x40] sm:$0xff]
  %v4537 = vld [vmem:[%s7 + $0x48] sm:$0xff]
  %v4538 = vld [vmem:[%s7 + $0x50] sm:$0xff]
  %v4539 = vld [vmem:[%s7 + $0x58] sm:$0xff]
  %v4540 = vld [vmem:[%s7 + $0x60] sm:$0xff]
  %v4541 = vld [vmem:[%s7 + $0x68] sm:$0xff]
  %v4542 = vld [vmem:[%s7 + $0x70] sm:$0xff]
  %v4543 = vld [vmem:[%s7 + $0x78] sm:$0xff]
  %v4544 = vld [vmem:[%s8] sm:$0xf]
  %v4546 = vperm.slane %v4544, 0
  %v4547 = vperm.slane %v4544, 1
  %v4548 = vperm.slane %v4544, 2
  %v4549 = vperm.slane %v4544, 3
  %v4570 = vunpack.c.l.b16 %v4528
  %v4571 = vunpack.c.h.b16 %v4528
  %v4572 = vunpack.c.l.b16 %v4529
  %v4573 = vunpack.c.h.b16 %v4529
  %v4574 = vunpack.c.l.b16 %v4530
  %v4575 = vunpack.c.h.b16 %v4530
  %v4576 = vunpack.c.l.b16 %v4531
  %v4577 = vunpack.c.h.b16 %v4531
  %v4578 = vunpack.c.l.b16 %v4532
  %v4579 = vunpack.c.h.b16 %v4532
  %v4580 = vunpack.c.l.b16 %v4533
  %v4581 = vunpack.c.h.b16 %v4533
  %v4582 = vunpack.c.l.b16 %v4534
  %v4583 = vunpack.c.h.b16 %v4534
  %v4584 = vunpack.c.l.b16 %v4535
  %v4585 = vunpack.c.h.b16 %v4535
  %v4586 = vunpack.c.l.b16 %v4536
  %v4587 = vunpack.c.h.b16 %v4536
  %v4588 = vunpack.c.l.b16 %v4537
  %v4589 = vunpack.c.h.b16 %v4537
  %v4590 = vunpack.c.l.b16 %v4538
  %v4591 = vunpack.c.h.b16 %v4538
  %v4592 = vunpack.c.l.b16 %v4539
  %v4593 = vunpack.c.h.b16 %v4539
  %v4594 = vunpack.c.l.b16 %v4540
  %v4595 = vunpack.c.h.b16 %v4540
  %v4596 = vunpack.c.l.b16 %v4541
  %v4597 = vunpack.c.h.b16 %v4541
  %v4598 = vunpack.c.l.b16 %v4542
  %v4599 = vunpack.c.h.b16 %v4542
  %v4600 = vunpack.c.l.b16 %v4543
  %v4601 = vunpack.c.h.b16 %v4543
  %v4602 = vpack.c.b16 %v4574, %v4570
  %v4603 = vpack.c.b16 %v4575, %v4571
  %v4604 = vpack.c.b16 %v4576, %v4572
  %v4605 = vpack.c.b16 %v4577, %v4573
  %v4606 = vpack.c.b16 %v4582, %v4578
  %v4607 = vpack.c.b16 %v4583, %v4579
  %v4608 = vpack.c.b16 %v4584, %v4580
  %v4609 = vpack.c.b16 %v4585, %v4581
  %v4610 = vpack.c.b16 %v4590, %v4586
  %v4611 = vpack.c.b16 %v4591, %v4587
  %v4612 = vpack.c.b16 %v4592, %v4588
  %v4613 = vpack.c.b16 %v4593, %v4589
  %v4614 = vpack.c.b16 %v4598, %v4594
  %v4615 = vpack.c.b16 %v4599, %v4595
  %v4616 = vpack.c.b16 %v4600, %v4596
  %v4617 = vpack.c.b16 %v4601, %v4597
  %v4635 = vsel %vm1323, %v4526, 0
  %v4638 = vsel %vm1323, %v4527, 0
  %4640 = vmatpush.bf16.msra.mxu0 0
  %4641 = vmatpush.bf16.msra.mxu0 0
  %4642 = vmatpush.bf16.msra.mxu0 0
  %4643 = vmatpush.bf16.msra.mxu0 0
  %4644 = vmatpush.bf16.msra.mxu0 %v4614
  %4645 = vmatpush.bf16.msra.mxu0 %v4610
  %4646 = vmatpush.bf16.msra.mxu0 %v4606
  %4647 = vmatpush.bf16.msra.mxu0 %v4602
  %4648 = vmatmul.bf16.gmra.mxu0 %v4635
  %v4649 = vpop.f32.mrf.mxu0
  %v4650 = vadd.f32 %v4546, %v4649
  %v4651 = vpop.f32.mrf.mxu0
  %v4652 = vadd.f32 %v4546, %v4651
  %4653 = vmatmul.bf16.gmra.mxu0 %v4638
  %v4654 = vpop.f32.mrf.mxu0
  %v4655 = vadd.f32 %v4546, %v4654
  %v4656 = vpop.f32.mrf.mxu0
  %v4657 = vadd.f32 %v4546, %v4656
  %4658 = vdwg.mxu0
  %4659 = vmatpush.bf16.msra.mxu0 0
  %4660 = vmatpush.bf16.msra.mxu0 0
  %4661 = vmatpush.bf16.msra.mxu0 0
  %4662 = vmatpush.bf16.msra.mxu0 0
  %4663 = vmatpush.bf16.msra.mxu0 %v4615
  %4664 = vmatpush.bf16.msra.mxu0 %v4611
  %4665 = vmatpush.bf16.msra.mxu0 %v4607
  %4666 = vmatpush.bf16.msra.mxu0 %v4603
  %4667 = vmatmul.bf16.gmra.mxu0 %v4635
  %v4668 = vpop.f32.mrf.mxu0
  %v4669 = vadd.f32 %v4547, %v4668
  %v4670 = vpop.f32.mrf.mxu0
  %v4671 = vadd.f32 %v4547, %v4670
  %4672 = vmatmul.bf16.gmra.mxu0 %v4638
  %v4673 = vpop.f32.mrf.mxu0
  %v4674 = vadd.f32 %v4547, %v4673
  %v4675 = vpop.f32.mrf.mxu0
  %v4676 = vadd.f32 %v4547, %v4675
  %4677 = vdwg.mxu0
  %4678 = vmatpush.bf16.msra.mxu0 0
  %4679 = vmatpush.bf16.msra.mxu0 0
  %4680 = vmatpush.bf16.msra.mxu0 0
  %4681 = vmatpush.bf16.msra.mxu0 0
  %4682 = vmatpush.bf16.msra.mxu0 %v4616
  %4683 = vmatpush.bf16.msra.mxu0 %v4612
  %4684 = vmatpush.bf16.msra.mxu0 %v4608
  %4685 = vmatpush.bf16.msra.mxu0 %v4604
  %4686 = vmatmul.bf16.gmra.mxu0 %v4635
  %v4687 = vpop.f32.mrf.mxu0
  %v4688 = vadd.f32 %v4548, %v4687
  %v4689 = vpop.f32.mrf.mxu0
  %v4690 = vadd.f32 %v4548, %v4689
  %4691 = vmatmul.bf16.gmra.mxu0 %v4638
  %v4692 = vpop.f32.mrf.mxu0
  %v4693 = vadd.f32 %v4548, %v4692
  %v4694 = vpop.f32.mrf.mxu0
  %v4695 = vadd.f32 %v4548, %v4694
  %4696 = vdwg.mxu0
  %4697 = vmatpush.bf16.msra.mxu0 0
  %4698 = vmatpush.bf16.msra.mxu0 0
  %4699 = vmatpush.bf16.msra.mxu0 0
  %4700 = vmatpush.bf16.msra.mxu0 0
  %4701 = vmatpush.bf16.msra.mxu0 %v4617
  %4702 = vmatpush.bf16.msra.mxu0 %v4613
  %4703 = vmatpush.bf16.msra.mxu0 %v4609
  %4704 = vmatpush.bf16.msra.mxu0 %v4605
  %4705 = vmatmul.bf16.gmra.mxu0 %v4635
  %v4706 = vpop.f32.mrf.mxu0
  %v4707 = vadd.f32 %v4549, %v4706
  %v4708 = vpop.f32.mrf.mxu0
  %v4709 = vadd.f32 %v4549, %v4708
  %4710 = vmatmul.bf16.gmra.mxu0 %v4638
  %v4711 = vpop.f32.mrf.mxu0
  %v4712 = vadd.f32 %v4549, %v4711
  %v4713 = vpop.f32.mrf.mxu0
  %v4714 = vadd.f32 %v4549, %v4713
  %4715 = vdwg.mxu0
  %v4716 = vmax.f32 %v4650, 0.0
  %v4717 = vmax.f32 %v4669, 0.0
  %v4718 = vmax.f32 %v4688, 0.0
  %v4719 = vmax.f32 %v4707, 0.0
  %v4720 = vmax.f32 %v4652, 0.0
  %v4721 = vmax.f32 %v4671, 0.0
  %v4722 = vmax.f32 %v4690, 0.0
  %v4723 = vmax.f32 %v4709, 0.0
  %v4724 = vmax.f32 %v4655, 0.0
  %v4725 = vmax.f32 %v4674, 0.0
  %v4726 = vmax.f32 %v4693, 0.0
  %v4727 = vmax.f32 %v4712, 0.0
  %v4728 = vmax.f32 %v4657, 0.0
  %v4729 = vmax.f32 %v4676, 0.0
  %v4730 = vmax.f32 %v4695, 0.0
  %v4731 = vmax.f32 %v4714, 0.0
  %v4732 = vpack.c.bf16 %v4720, %v4716
  %v4733 = vpack.c.bf16 %v4721, %v4717
  %v4734 = vpack.c.bf16 %v4722, %v4718
  %v4735 = vpack.c.bf16 %v4723, %v4719
  %v4736 = vpack.c.bf16 %v4728, %v4724
  %v4737 = vpack.c.bf16 %v4729, %v4725
  %v4738 = vpack.c.bf16 %v4730, %v4726
  %v4739 = vpack.c.bf16 %v4731, %v4727
  %v4740 = vld [vmem:[%s9] sm:$0xf]
  %v4741 = vld [vmem:[%s9 + $0x4] sm:$0xf]
  %v4742 = vld [vmem:[%s9 + $0x8] sm:$0xf]
  %v4743 = vld [vmem:[%s9 + $0xc] sm:$0xf]
  %v4744 = vld [vmem:[%s9 + $0x10] sm:$0xf]
  %v4745 = vld [vmem:[%s9 + $0x14] sm:$0xf]
  %v4746 = vld [vmem:[%s9 + $0x18] sm:$0xf]
  %v4747 = vld [vmem:[%s9 + $0x1c] sm:$0xf]
  %v4748 = vld [vmem:[%s9 + $0x20] sm:$0xf]
  %v4749 = vld [vmem:[%s9 + $0x24] sm:$0xf]
  %v4750 = vld [vmem:[%s9 + $0x28] sm:$0xf]
  %v4751 = vld [vmem:[%s9 + $0x2c] sm:$0xf]
  %v4752 = vld [vmem:[%s9 + $0x30] sm:$0xf]
  %v4753 = vld [vmem:[%s9 + $0x34] sm:$0xf]
  %v4754 = vld [vmem:[%s9 + $0x38] sm:$0xf]
  %v4755 = vld [vmem:[%s9 + $0x3c] sm:$0xf]
  %v4756 = vld [vmem:[%s9 + $0x40] sm:$0xf]
  %v4757 = vld [vmem:[%s9 + $0x44] sm:$0xf]
  %v4758 = vld [vmem:[%s9 + $0x48] sm:$0xf]
  %v4759 = vld [vmem:[%s9 + $0x4c] sm:$0xf]
  %v4760 = vld [vmem:[%s9 + $0x50] sm:$0xf]
  %v4761 = vld [vmem:[%s9 + $0x54] sm:$0xf]
  %v4762 = vld [vmem:[%s9 + $0x58] sm:$0xf]
  %v4763 = vld [vmem:[%s9 + $0x5c] sm:$0xf]
  %v4764 = vld [vmem:[%s9 + $0x60] sm:$0xf]
  %v4765 = vld [vmem:[%s9 + $0x64] sm:$0xf]
  %v4766 = vld [vmem:[%s9 + $0x68] sm:$0xf]
  %v4767 = vld [vmem:[%s9 + $0x6c] sm:$0xf]
  %v4768 = vld [vmem:[%s9 + $0x70] sm:$0xf]
  %v4769 = vld [vmem:[%s9 + $0x74] sm:$0xf]
  %v4770 = vld [vmem:[%s9 + $0x78] sm:$0xf]
  %v4771 = vld [vmem:[%s9 + $0x7c] sm:$0xf]
  %v4772 = vld [vmem:[%s9 + $0x80] sm:$0xf]
  %v4773 = vld [vmem:[%s9 + $0x84] sm:$0xf]
  %v4774 = vld [vmem:[%s9 + $0x88] sm:$0xf]
  %v4775 = vld [vmem:[%s9 + $0x8c] sm:$0xf]
  %v4776 = vld [vmem:[%s9 + $0x90] sm:$0xf]
  %v4777 = vld [vmem:[%s9 + $0x94] sm:$0xf]
  %v4778 = vld [vmem:[%s9 + $0x98] sm:$0xf]
  %v4779 = vld [vmem:[%s9 + $0x9c] sm:$0xf]
  %v4780 = vld [vmem:[%s9 + $0xa0] sm:$0xf]
  %v4781 = vld [vmem:[%s9 + $0xa4] sm:$0xf]
  %v4782 = vld [vmem:[%s9 + $0xa8] sm:$0xf]
  %v4783 = vld [vmem:[%s9 + $0xac] sm:$0xf]
  %v4784 = vld [vmem:[%s9 + $0xb0] sm:$0xf]
  %v4785 = vld [vmem:[%s9 + $0xb4] sm:$0xf]
  %v4786 = vld [vmem:[%s9 + $0xb8] sm:$0xf]
  %v4787 = vld [vmem:[%s9 + $0xbc] sm:$0xf]
  %v4788 = vld [vmem:[%s9 + $0xc0] sm:$0xf]
  %v4789 = vld [vmem:[%s9 + $0xc4] sm:$0xf]
  %v4790 = vld [vmem:[%s9 + $0xc8] sm:$0xf]
  %v4791 = vld [vmem:[%s9 + $0xcc] sm:$0xf]
  %v4792 = vld [vmem:[%s9 + $0xd0] sm:$0xf]
  %v4793 = vld [vmem:[%s9 + $0xd4] sm:$0xf]
  %v4794 = vld [vmem:[%s9 + $0xd8] sm:$0xf]
  %v4795 = vld [vmem:[%s9 + $0xdc] sm:$0xf]
  %v4796 = vld [vmem:[%s9 + $0xe0] sm:$0xf]
  %v4797 = vld [vmem:[%s9 + $0xe4] sm:$0xf]
  %v4798 = vld [vmem:[%s9 + $0xe8] sm:$0xf]
  %v4799 = vld [vmem:[%s9 + $0xec] sm:$0xf]
  %v4800 = vld [vmem:[%s9 + $0xf0] sm:$0xf]
  %v4801 = vld [vmem:[%s9 + $0xf4] sm:$0xf]
  %v4802 = vld [vmem:[%s9 + $0xf8] sm:$0xf]
  %v4803 = vld [vmem:[%s9 + $0xfc] sm:$0xf]
  %v4804 = vld [vmem:[%s10] sm:$0x1]
  %v4806 = vperm.slane %v4804, 0
  %v4872 = vunpack.c.l.b16 %v4740
  %v4873 = vunpack.c.l.b16 %v4741
  %v4874 = vunpack.c.l.b16 %v4742
  %v4875 = vunpack.c.l.b16 %v4743
  %v4876 = vunpack.c.l.b16 %v4744
  %v4877 = vunpack.c.l.b16 %v4745
  %v4878 = vunpack.c.l.b16 %v4746
  %v4879 = vunpack.c.l.b16 %v4747
  %v4880 = vunpack.c.l.b16 %v4748
  %v4881 = vunpack.c.l.b16 %v4749
  %v4882 = vunpack.c.l.b16 %v4750
  %v4883 = vunpack.c.l.b16 %v4751
  %v4884 = vunpack.c.l.b16 %v4752
  %v4885 = vunpack.c.l.b16 %v4753
  %v4886 = vunpack.c.l.b16 %v4754
  %v4887 = vunpack.c.l.b16 %v4755
  %v4888 = vunpack.c.l.b16 %v4756
  %v4889 = vunpack.c.l.b16 %v4757
  %v4890 = vunpack.c.l.b16 %v4758
  %v4891 = vunpack.c.l.b16 %v4759
  %v4892 = vunpack.c.l.b16 %v4760
  %v4893 = vunpack.c.l.b16 %v4761
  %v4894 = vunpack.c.l.b16 %v4762
  %v4895 = vunpack.c.l.b16 %v4763
  %v4896 = vunpack.c.l.b16 %v4764
  %v4897 = vunpack.c.l.b16 %v4765
  %v4898 = vunpack.c.l.b16 %v4766
  %v4899 = vunpack.c.l.b16 %v4767
  %v4900 = vunpack.c.l.b16 %v4768
  %v4901 = vunpack.c.l.b16 %v4769
  %v4902 = vunpack.c.l.b16 %v4770
  %v4903 = vunpack.c.l.b16 %v4771
  %v4904 = vunpack.c.l.b16 %v4772
  %v4905 = vunpack.c.l.b16 %v4773
  %v4906 = vunpack.c.l.b16 %v4774
  %v4907 = vunpack.c.l.b16 %v4775
  %v4908 = vunpack.c.l.b16 %v4776
  %v4909 = vunpack.c.l.b16 %v4777
  %v4910 = vunpack.c.l.b16 %v4778
  %v4911 = vunpack.c.l.b16 %v4779
  %v4912 = vunpack.c.l.b16 %v4780
  %v4913 = vunpack.c.l.b16 %v4781
  %v4914 = vunpack.c.l.b16 %v4782
  %v4915 = vunpack.c.l.b16 %v4783
  %v4916 = vunpack.c.l.b16 %v4784
  %v4917 = vunpack.c.l.b16 %v4785
  %v4918 = vunpack.c.l.b16 %v4786
  %v4919 = vunpack.c.l.b16 %v4787
  %v4920 = vunpack.c.l.b16 %v4788
  %v4921 = vunpack.c.l.b16 %v4789
  %v4922 = vunpack.c.l.b16 %v4790
  %v4923 = vunpack.c.l.b16 %v4791
  %v4924 = vunpack.c.l.b16 %v4792
  %v4925 = vunpack.c.l.b16 %v4793
  %v4926 = vunpack.c.l.b16 %v4794
  %v4927 = vunpack.c.l.b16 %v4795
  %v4928 = vunpack.c.l.b16 %v4796
  %v4929 = vunpack.c.l.b16 %v4797
  %v4930 = vunpack.c.l.b16 %v4798
  %v4931 = vunpack.c.l.b16 %v4799
  %v4932 = vunpack.c.l.b16 %v4800
  %v4933 = vunpack.c.l.b16 %v4801
  %v4934 = vunpack.c.l.b16 %v4802
  %v4935 = vunpack.c.l.b16 %v4803
  %v4936 = vpack.c.b16 %v4873, %v4872
  %v4937 = vpack.c.b16 %v4875, %v4874
  %v4938 = vpack.c.b16 %v4877, %v4876
  %v4939 = vpack.c.b16 %v4879, %v4878
  %v4940 = vpack.c.b16 %v4881, %v4880
  %v4941 = vpack.c.b16 %v4883, %v4882
  %v4942 = vpack.c.b16 %v4885, %v4884
  %v4943 = vpack.c.b16 %v4887, %v4886
  %v4944 = vpack.c.b16 %v4889, %v4888
  %v4945 = vpack.c.b16 %v4891, %v4890
  %v4946 = vpack.c.b16 %v4893, %v4892
  %v4947 = vpack.c.b16 %v4895, %v4894
  %v4948 = vpack.c.b16 %v4897, %v4896
  %v4949 = vpack.c.b16 %v4899, %v4898
  %v4950 = vpack.c.b16 %v4901, %v4900
  %v4951 = vpack.c.b16 %v4903, %v4902
  %v4952 = vpack.c.b16 %v4905, %v4904
  %v4953 = vpack.c.b16 %v4907, %v4906
  %v4954 = vpack.c.b16 %v4909, %v4908
  %v4955 = vpack.c.b16 %v4911, %v4910
  %v4956 = vpack.c.b16 %v4913, %v4912
  %v4957 = vpack.c.b16 %v4915, %v4914
  %v4958 = vpack.c.b16 %v4917, %v4916
  %v4959 = vpack.c.b16 %v4919, %v4918
  %v4960 = vpack.c.b16 %v4921, %v4920
  %v4961 = vpack.c.b16 %v4923, %v4922
  %v4962 = vpack.c.b16 %v4925, %v4924
  %v4963 = vpack.c.b16 %v4927, %v4926
  %v4964 = vpack.c.b16 %v4929, %v4928
  %v4965 = vpack.c.b16 %v4931, %v4930
  %v4966 = vpack.c.b16 %v4933, %v4932
  %v4967 = vpack.c.b16 %v4935, %v4934
  %5000 = vmatpush.bf16.msra.mxu0 %v4943
  %5001 = vmatpush.bf16.msra.mxu0 %v4942
  %5002 = vmatpush.bf16.msra.mxu0 %v4941
  %5003 = vmatpush.bf16.msra.mxu0 %v4940
  %5004 = vmatpush.bf16.msra.mxu0 %v4939
  %5005 = vmatpush.bf16.msra.mxu0 %v4938
  %5006 = vmatpush.bf16.msra.mxu0 %v4937
  %5007 = vmatpush.bf16.msra.mxu0 %v4936
  %5008 = vmatmul.bf16.gmra.mxu0 %v4732
  %v5009 = vpop.f32.mrf.mxu0
  %v5010 = vadd.f32 %v4806, %v5009
  %v5011 = vpop.f32.mrf.mxu0
  %v5012 = vadd.f32 %v4806, %v5011
  %5013 = vmatmul.bf16.gmra.mxu0 %v4736
  %v5014 = vpop.f32.mrf.mxu0
  %v5015 = vadd.f32 %v4806, %v5014
  %v5016 = vpop.f32.mrf.mxu0
  %v5017 = vadd.f32 %v4806, %v5016
  %5018 = vdwg.mxu0
  %5019 = vmatpush.bf16.msra.mxu0 %v4951
  %5020 = vmatpush.bf16.msra.mxu0 %v4950
  %5021 = vmatpush.bf16.msra.mxu0 %v4949
  %5022 = vmatpush.bf16.msra.mxu0 %v4948
  %5023 = vmatpush.bf16.msra.mxu0 %v4947
  %5024 = vmatpush.bf16.msra.mxu0 %v4946
  %5025 = vmatpush.bf16.msra.mxu0 %v4945
  %5026 = vmatpush.bf16.msra.mxu0 %v4944
  %5027 = vmatmul.bf16.gmra.mxu0 %v4733
  %v5028 = vpop.f32.mrf.mxu0
  %v5029 = vadd.f32 %v5010, %v5028
  %v5030 = vpop.f32.mrf.mxu0
  %v5031 = vadd.f32 %v5012, %v5030
  %5032 = vmatmul.bf16.gmra.mxu0 %v4737
  %v5033 = vpop.f32.mrf.mxu0
  %v5034 = vadd.f32 %v5015, %v5033
  %v5035 = vpop.f32.mrf.mxu0
  %v5036 = vadd.f32 %v5017, %v5035
  %5037 = vdwg.mxu0
  %5038 = vmatpush.bf16.msra.mxu0 %v4959
  %5039 = vmatpush.bf16.msra.mxu0 %v4958
  %5040 = vmatpush.bf16.msra.mxu0 %v4957
  %5041 = vmatpush.bf16.msra.mxu0 %v4956
  %5042 = vmatpush.bf16.msra.mxu0 %v4955
  %5043 = vmatpush.bf16.msra.mxu0 %v4954
  %5044 = vmatpush.bf16.msra.mxu0 %v4953
  %5045 = vmatpush.bf16.msra.mxu0 %v4952
  %5046 = vmatmul.bf16.gmra.mxu0 %v4734
  %v5047 = vpop.f32.mrf.mxu0
  %v5048 = vadd.f32 %v5029, %v5047
  %v5049 = vpop.f32.mrf.mxu0
  %v5050 = vadd.f32 %v5031, %v5049
  %5051 = vmatmul.bf16.gmra.mxu0 %v4738
  %v5052 = vpop.f32.mrf.mxu0
  %v5053 = vadd.f32 %v5034, %v5052
  %v5054 = vpop.f32.mrf.mxu0
  %v5055 = vadd.f32 %v5036, %v5054
  %5056 = vdwg.mxu0
  %5057 = vmatpush.bf16.msra.mxu0 %v4967
  %5058 = vmatpush.bf16.msra.mxu0 %v4966
  %5059 = vmatpush.bf16.msra.mxu0 %v4965
  %5060 = vmatpush.bf16.msra.mxu0 %v4964
  %5061 = vmatpush.bf16.msra.mxu0 %v4963
  %5062 = vmatpush.bf16.msra.mxu0 %v4962
  %5063 = vmatpush.bf16.msra.mxu0 %v4961
  %5064 = vmatpush.bf16.msra.mxu0 %v4960
  %5065 = vmatmul.bf16.gmra.mxu0 %v4735
  %v5066 = vpop.f32.mrf.mxu0
  %v5067 = vadd.f32 %v5048, %v5066
  %v5068 = vpop.f32.mrf.mxu0
  %v5069 = vadd.f32 %v5050, %v5068
  %5070 = vmatmul.bf16.gmra.mxu0 %v4739
  %v5071 = vpop.f32.mrf.mxu0
  %v5072 = vadd.f32 %v5053, %v5071
  %v5073 = vpop.f32.mrf.mxu0
  %v5074 = vadd.f32 %v5055, %v5073
  %5075 = vdwg.mxu0
  %5076 = vst [vmem:[%s11] sm:$0xff] %v5067
  %5077 = vst [vmem:[%s11 + $0x8] sm:$0xff] %v5069
  %5078 = vst [vmem:[%s11 + $0x10] sm:$0xff] %v5072
  %5079 = vst [vmem:[%s11 + $0x18] sm:$0xff] %v5074
  // Predicated region
  $region46: #{cnn_policy_forward.1} parent=0 // pred_check
    _
  $region47: #{cnn_policy_forward.1} parent=0 // pred_check_branch
    %5081 = sbr.rel (0) target = $region49
  $region48: #{cnn_policy_forward.1} parent=0 // pred_region
    _
  $region49: #{cnn_policy_forward.1} parent=0 // pred_fallthru
    _
  // Predicated region
  $region50: #{cnn_policy_forward.1} parent=0 // pred_check
    _
  $region51: #{cnn_policy_forward.1} parent=0 // pred_check_branch
    %5083 = sbr.rel (0) target = $region53
  $region52: #{cnn_policy_forward.1} parent=0 // pred_region
    _
  $region53: #{cnn_policy_forward.1} parent=0 // pred_fallthru
    _

</llo_original>
